<compile_context>
chip_gen: v7x
topology: tpu7x:2x2x1
jax: 0.10.0
libtpu: 0.0.40
codegen_flags: <defaults>
</compile_context>

<pallas_src>
import functools

import jax
import jax.numpy as jnp
from jax.experimental import pallas as pl
from jax.experimental.pallas import tpu as pltpu


# Whole-array-in-VMEM block spec (small shapes; no grid tiling needed).
_VMEM = pl.BlockSpec(memory_space=pltpu.MemorySpace.VMEM)


# ----------------------------- kernels -------------------------------------


def _embed_kernel(tok_ref, emb_ref, out_ref):
    """Embedding lookup as one-hot matmul.

    tok_ref: (T*B, 1) int32 token ids (time-major, row = t*B + b)
    emb_ref: (V, H)   embedding table
    out_ref: (T*B, H) embedded sequence, already in the layout the LSTM wants.
    """
    n = tok_ref.shape[0]
    v = emb_ref.shape[0]
    iota = jax.lax.broadcasted_iota(jnp.int32, (n, v), 1)
    onehot = (tok_ref[...] == iota).astype(jnp.float32)
    out_ref[...] = jnp.dot(onehot, emb_ref[...], preferred_element_type=jnp.float32)


def _lstm_cell_step(xg_tile, h, c, whh, hidden):
    """One LSTM cell update given the precomputed input-projection tile."""
    gates = xg_tile + jnp.dot(h, whh, preferred_element_type=jnp.float32)  # (B, 4H)
    # One sigmoid over the full (B, 4H) tile (single dense EUP pass), then slice.
    sig = jax.nn.sigmoid(gates)
    i_g = sig[:, 0 * hidden:1 * hidden]
    f_g = sig[:, 1 * hidden:2 * hidden]
    o_g = sig[:, 3 * hidden:4 * hidden]
    g_g = jnp.tanh(gates[:, 2 * hidden:3 * hidden])
    c_new = f_g * c + i_g * g_g
    h_new = o_g * jnp.tanh(c_new)
    return h_new, c_new


def _bilstm_layer_kernel(x_ref, wih_ref, whh_ref, b_ref, out_ref, xg_ref,
                         *, seq_len, batch, n_dir):
    """One LSTM layer, both directions fused, full sequence output.

    x_ref:   (T*B, Din)        time-major flattened input
    wih_ref: (Din, n_dir*4H)   input->gate weights, directions concatenated
    whh_ref: (n_dir, H, 4H)    hidden->gate weights
    b_ref:   (1, n_dir*4H)     combined bias (b_ih + b_hh), both directions
    out_ref: (T*B, n_dir*H)    per-timestep hidden states (fwd | rev lanes)
    xg_ref:  (T*B, n_dir*4H)   VMEM scratch for the hoisted input projection
    """
    T, B = seq_len, batch
    H = whh_ref.shape[1]
    G = 4 * H

    # Hoisted input projection: ONE MXU call for all T steps and all directions
    # (N = n_dir*4H fills the MXU width); bias added once, not per step.
    xg_ref[...] = (
        jnp.dot(x_ref[...], wih_ref[...], preferred_element_type=jnp.float32)
        + b_ref[...]
    )

    for d in range(n_dir):
        whh = whh_ref[d]                       # (H, 4H) loaded once per direction
        h = jnp.zeros((B, H), jnp.float32)
        c = jnp.zeros((B, H), jnp.float32)
        for t in range(T):                     # full unroll: T is small & static
            idx = (T - 1 - t) if d == 1 else t
            xg_tile = xg_ref[idx * B:(idx + 1) * B, d * G:(d + 1) * G]
            h, c = _lstm_cell_step(xg_tile, h, c, whh, H)
            out_ref[idx * B:(idx + 1) * B, d * H:(d + 1) * H] = h


def _bilstm_head_kernel(x_ref, wih_ref, whh_ref, b_ref, last_ref,
                        w1_ref, b1_ref, w2_ref, b2_ref, out_ref, xg_ref,
                        *, seq_len, batch, n_dir):
    """Last LSTM layer fused with h_n selection and the predictor MLP.

    last_ref: (B, 1) int32 = (trajs_len - 1) mod T  (time index to pick)
    out_ref:  (B, H) projected features
    Other refs as in _bilstm_layer_kernel plus predictor weights
    w1:(n_dir*H,H) b1:(1,H) w2:(H,H) b2:(1,H).
    """
    T, B = seq_len, batch
    H = whh_ref.shape[1]
    G = 4 * H

    xg_ref[...] = (
        jnp.dot(x_ref[...], wih_ref[...], preferred_element_type=jnp.float32)
        + b_ref[...]
    )

    last_t = last_ref[...]                     # (B, 1) int32

    hn_parts = []
    for d in range(n_dir):
        whh = whh_ref[d]
        h = jnp.zeros((B, H), jnp.float32)
        c = jnp.zeros((B, H), jnp.float32)
        hn = jnp.zeros((B, H), jnp.float32)
        for t in range(T):
            idx = (T - 1 - t) if d == 1 else t
            xg_tile = xg_ref[idx * B:(idx + 1) * B, d * G:(d + 1) * G]
            h, c = _lstm_cell_step(xg_tile, h, c, whh, H)
            # hn = outputs[b, trajs_len[b]-1]; masked select instead of a gather.
            hn = jnp.where(last_t == idx, h, hn)
        hn_parts.append(hn)
    hn_cat = hn_parts[0] if n_dir == 1 else jnp.concatenate(hn_parts, axis=-1)

    # Predictor: Linear -> ReLU -> Linear, fused in (FLOPs << launch overhead).
    z = jnp.dot(hn_cat, w1_ref[...], preferred_element_type=jnp.float32) + b1_ref[...]
    z = jnp.maximum(z, 0.0)
    out_ref[...] = jnp.dot(z, w2_ref[...], preferred_element_type=jnp.float32) + b2_ref[...]


# --------------------------- parameter setup --------------------------------


def init_params(key, vocab_size, hidden_size, bidirectional, n_layers):
    n_dir = 2 if bidirectional else 1
    H = hidden_size

    def nrm(k, shape, scale=0.1):
        return (scale * jax.random.normal(k, shape)).astype(jnp.float32)

    keys = iter(jax.random.split(key, 5 + 3 * n_layers))

    params = {
        "embedding": nrm(next(keys), (vocab_size, H), 1.0),
        "lstm": [],
        "w1": nrm(next(keys), (n_dir * H, H)),
        "b1": nrm(next(keys), (1, H)),
        "w2": nrm(next(keys), (H, H)),
        "b2": nrm(next(keys), (1, H)),
    }
    for layer in range(n_layers):
        in_size = H if layer == 0 else n_dir * H
        params["lstm"].append({
            # Pre-transposed vs. PyTorch and concatenated across directions.
            "w_ih": nrm(next(keys), (in_size, n_dir * 4 * H)),
            "w_hh": nrm(next(keys), (n_dir, H, 4 * H)),
            "b": nrm(next(keys), (1, n_dir * 4 * H)),   # b_ih + b_hh folded
        })
    return params


# ------------------------------ forward ------------------------------------


def lstm_simclr_forward(params, trajs, trajs_len, *, hidden_size, bidirectional, n_layers):
    B0, T = trajs.shape
    H = hidden_size
    n_dir = 2 if bidirectional else 1

    # Pad batch to a full sublane (multiple of 8): with tiny B most of every
    # vreg / VPU op / store would otherwise be masked waste.
    B = ((B0 + 7) // 8) * 8
    if B != B0:
        trajs = jnp.pad(trajs, ((0, B - B0), (0, 0)))
        trajs_len = jnp.pad(trajs_len, (0, B - B0), constant_values=1)

    # Tiny int reshuffles in XLA; the big (T,B,D) activations never get
    # transposed / concatenated / gathered outside the kernels.
    tok = jnp.transpose(trajs.astype(jnp.int32), (1, 0)).reshape(T * B, 1)
    # (len-1) mod T mimics PyTorch's negative-index wrap for len == 0.
    last_col = ((trajs_len.astype(jnp.int32) - 1) % T).reshape(B, 1)

    # Embedding lookup; emits the time-major flat layout the LSTM kernels use.
    x = pl.pallas_call(
        _embed_kernel,
        out_shape=jax.ShapeDtypeStruct((T * B, H), jnp.float32),
        in_specs=[_VMEM, _VMEM],
        out_specs=_VMEM,
    )(tok, params["embedding"])

    # All but the last LSTM layer: one fused bidirectional kernel per layer.
    for layer in range(n_layers - 1):
        p = params["lstm"][layer]
        x = pl.pallas_call(
            functools.partial(_bilstm_layer_kernel, seq_len=T, batch=B, n_dir=n_dir),
            out_shape=jax.ShapeDtypeStruct((T * B, n_dir * H), jnp.float32),
            in_specs=[_VMEM] * 4,
            out_specs=_VMEM,
            scratch_shapes=[pltpu.VMEM((T * B, n_dir * 4 * H), jnp.float32)],
        )(x, p["w_ih"], p["w_hh"], p["b"])

    # Last layer fused with h_n selection + predictor MLP.
    p = params["lstm"][n_layers - 1]
    features = pl.pallas_call(
        functools.partial(_bilstm_head_kernel, seq_len=T, batch=B, n_dir=n_dir),
        out_shape=jax.ShapeDtypeStruct((B, H), jnp.float32),
        in_specs=[_VMEM] * 9,
        out_specs=_VMEM,
        scratch_shapes=[pltpu.VMEM((T * B, n_dir * 4 * H), jnp.float32)],
    )(x, p["w_ih"], p["w_hh"], p["b"], last_col,
      params["w1"], params["b1"], params["w2"], params["b2"])

    return features[:B0]


# -------------------------------- main --------------------------------------

if __name__ == "__main__":
    VOCAB = 32
    HIDDEN = 32
    BIDIRECTIONAL = True
    N_LAYERS = 2
    B, T = 2, 8

    key = jax.random.PRNGKey(0)
    k_param, k_tok = jax.random.split(key)

    params = init_params(k_param, VOCAB, HIDDEN, BIDIRECTIONAL, N_LAYERS)
    trajs = jax.random.randint(k_tok, (B, T), 0, VOCAB, dtype=jnp.int32)
    trajs_len = jnp.array([T, 5], dtype=jnp.int32)

    fwd = jax.jit(
        functools.partial(
            lstm_simclr_forward,
            hidden_size=HIDDEN,
            bidirectional=BIDIRECTIONAL,
            n_layers=N_LAYERS,
        )
    )
    out = fwd(params, trajs, trajs_len)
    jax.block_until_ready(out)
    assert out.shape == (B, HIDDEN), out.shape
    print("KERNEL_OK")
</pallas_src>

<mosaic_0001>
module attributes {stable_mosaic.version = 11 : i64} {
  func.func @_embed_kernel(%arg0: memref<64x1xi32, #tpu.memory_space<vmem>>, %arg1: memref<32x32xf32, #tpu.memory_space<vmem>>, %arg2: memref<64x32xf32, #tpu.memory_space<vmem>>) attributes {dimension_semantics = [], scalar_prefetch = 0 : i64, scratch_operands = 0 : i64, tpu.core_type = #tpu.core_type<tc>} {
    %0 = tpu.iota {dimensions = array<i32: 1>} : vector<64x32xi32>
    %c0 = arith.constant 0 : index
    %c0_0 = arith.constant 0 : index
    %1 = vector.load %arg0[%c0, %c0_0] : memref<64x1xi32, #tpu.memory_space<vmem>>, vector<64x1xi32>
    %2 = vector.broadcast %1 : vector<64x1xi32> to vector<64x32xi32>
    %3 = arith.cmpi eq, %2, %0 : vector<64x32xi32>
    %4 = arith.extui %3 : vector<64x32xi1> to vector<64x32xi32>
    %5 = arith.sitofp %4 : vector<64x32xi32> to vector<64x32xf32>
    %c0_1 = arith.constant 0 : index
    %c0_2 = arith.constant 0 : index
    %6 = vector.load %arg1[%c0_1, %c0_2] : memref<32x32xf32, #tpu.memory_space<vmem>>, vector<32x32xf32>
    %cst = arith.constant dense<0.000000e+00> : vector<64x32xf32>
    %7 = tpu.matmul %5, %6, %cst {dimension_numbers = #tpu.dot_dimension_numbers<[1], [0], [0], [1], [0, 0, 1, 1], [], []>} : vector<64x32xf32>, vector<32x32xf32>, vector<64x32xf32> -> vector<64x32xf32>
    %c0_3 = arith.constant 0 : index
    %c0_4 = arith.constant 0 : index
    %8 = vector.load %arg2[%c0_3, %c0_4] : memref<64x32xf32, #tpu.memory_space<vmem>>, vector<64x32xf32>
    tpu.vector_store %arg2[%c0_3, %c0_4], %7 {strides = array<i32>} : memref<64x32xf32, #tpu.memory_space<vmem>>, vector<64x32xf32>,
    return
  }
}

module attributes {stable_mosaic.version = 11 : i64} {
  func.func @_bilstm_layer_kernel(%arg0: memref<64x32xf32, #tpu.memory_space<vmem>>, %arg1: memref<32x256xf32, #tpu.memory_space<vmem>>, %arg2: memref<2x32x128xf32, #tpu.memory_space<vmem>>, %arg3: memref<1x256xf32, #tpu.memory_space<vmem>>, %arg4: memref<64x64xf32, #tpu.memory_space<vmem>>, %arg5: memref<64x256xf32, #tpu.memory_space<vmem>>) attributes {dimension_semantics = [], scalar_prefetch = 0 : i64, scratch_operands = 1 : i64, tpu.core_type = #tpu.core_type<tc>} {
    %c0 = arith.constant 0 : index
    %c0_0 = arith.constant 0 : index
    %0 = vector.load %arg0[%c0, %c0_0] : memref<64x32xf32, #tpu.memory_space<vmem>>, vector<64x32xf32>
    %c0_1 = arith.constant 0 : index
    %c0_2 = arith.constant 0 : index
    %1 = vector.load %arg1[%c0_1, %c0_2] : memref<32x256xf32, #tpu.memory_space<vmem>>, vector<32x256xf32>
    %cst = arith.constant dense<0.000000e+00> : vector<64x256xf32>
    %2 = tpu.matmul %0, %1, %cst {dimension_numbers = #tpu.dot_dimension_numbers<[1], [0], [0], [1], [0, 0, 1, 1], [], []>} : vector<64x32xf32>, vector<32x256xf32>, vector<64x256xf32> -> vector<64x256xf32>
    %c0_3 = arith.constant 0 : index
    %c0_4 = arith.constant 0 : index
    %3 = vector.load %arg3[%c0_3, %c0_4] : memref<1x256xf32, #tpu.memory_space<vmem>>, vector<1x256xf32>
    %4 = vector.broadcast %3 : vector<1x256xf32> to vector<64x256xf32>
    %5 = arith.addf %2, %4 : vector<64x256xf32>
    %c0_5 = arith.constant 0 : index
    %c0_6 = arith.constant 0 : index
    %6 = vector.load %arg5[%c0_5, %c0_6] : memref<64x256xf32, #tpu.memory_space<vmem>>, vector<64x256xf32>
    tpu.vector_store %arg5[%c0_5, %c0_6], %5 {strides = array<i32>} : memref<64x256xf32, #tpu.memory_space<vmem>>, vector<64x256xf32>,
    %c0_7 = arith.constant 0 : index
    %c0_8 = arith.constant 0 : index
    %c0_9 = arith.constant 0 : index
    %7 = vector.load %arg2[%c0_7, %c0_8, %c0_9] : memref<2x32x128xf32, #tpu.memory_space<vmem>>, vector<1x32x128xf32>
    %8 = vector.shape_cast %7 : vector<1x32x128xf32> to vector<32x128xf32>
    %cst_10 = arith.constant 0.000000e+00 : f32
    %9 = vector.broadcast %cst_10 : f32 to vector<8x32xf32>
    %cst_11 = arith.constant 0.000000e+00 : f32
    %10 = vector.broadcast %cst_11 : f32 to vector<8x32xf32>
    %c0_12 = arith.constant 0 : index
    %c0_13 = arith.constant 0 : index
    %11 = vector.load %arg5[%c0_12, %c0_13] : memref<64x256xf32, #tpu.memory_space<vmem>>, vector<8x128xf32>
    %cst_14 = arith.constant dense<0.000000e+00> : vector<8x128xf32>
    %12 = tpu.matmul %9, %8, %cst_14 {dimension_numbers = #tpu.dot_dimension_numbers<[1], [0], [0], [1], [0, 0, 1, 1], [], []>} : vector<8x32xf32>, vector<32x128xf32>, vector<8x128xf32> -> vector<8x128xf32>
    %13 = arith.addf %11, %12 : vector<8x128xf32>
    %14 = arith.negf %13 : vector<8x128xf32>
    %15 = math.exp %14 : vector<8x128xf32>
    %cst_15 = arith.constant 1.000000e+00 : f32
    %16 = vector.broadcast %cst_15 : f32 to vector<8x128xf32>
    %17 = arith.addf %16, %15 : vector<8x128xf32>
    %18 = arith.divf %16, %17 : vector<8x128xf32>
    %19 = vector.extract_strided_slice %18 {offsets = [0, 0], sizes = [8, 32], strides = [1, 1]} : vector<8x128xf32> to vector<8x32xf32>
    %20 = vector.extract_strided_slice %18 {offsets = [0, 32], sizes = [8, 32], strides = [1, 1]} : vector<8x128xf32> to vector<8x32xf32>
    %21 = vector.extract_strided_slice %18 {offsets = [0, 96], sizes = [8, 32], strides = [1, 1]} : vector<8x128xf32> to vector<8x32xf32>
    %22 = vector.extract_strided_slice %13 {offsets = [0, 64], sizes = [8, 32], strides = [1, 1]} : vector<8x128xf32> to vector<8x32xf32>
    %23 = math.tanh %22 : vector<8x32xf32>
    %24 = arith.mulf %20, %10 : vector<8x32xf32>
    %25 = arith.mulf %19, %23 : vector<8x32xf32>
    %26 = arith.addf %24, %25 : vector<8x32xf32>
    %27 = math.tanh %26 : vector<8x32xf32>
    %28 = arith.mulf %21, %27 : vector<8x32xf32>
    %c0_16 = arith.constant 0 : index
    %c0_17 = arith.constant 0 : index
    %29 = vector.load %arg4[%c0_16, %c0_17] : memref<64x64xf32, #tpu.memory_space<vmem>>, vector<8x32xf32>
    tpu.vector_store %arg4[%c0_16, %c0_17], %28 {strides = array<i32>} : memref<64x64xf32, #tpu.memory_space<vmem>>, vector<8x32xf32>,
    %c8 = arith.constant 8 : index
    %c0_18 = arith.constant 0 : index
    %30 = vector.load %arg5[%c8, %c0_18] : memref<64x256xf32, #tpu.memory_space<vmem>>, vector<8x128xf32>
    %cst_19 = arith.constant dense<0.000000e+00> : vector<8x128xf32>
    %31 = tpu.matmul %28, %8, %cst_19 {dimension_numbers = #tpu.dot_dimension_numbers<[1], [0], [0], [1], [0, 0, 1, 1], [], []>} : vector<8x32xf32>, vector<32x128xf32>, vector<8x128xf32> -> vector<8x128xf32>
    %32 = arith.addf %30, %31 : vector<8x128xf32>
    %33 = arith.negf %32 : vector<8x128xf32>
    %34 = math.exp %33 : vector<8x128xf32>
    %cst_20 = arith.constant 1.000000e+00 : f32
    %35 = vector.broadcast %cst_20 : f32 to vector<8x128xf32>
    %36 = arith.addf %35, %34 : vector<8x128xf32>
    %37 = arith.divf %35, %36 : vector<8x128xf32>
    %38 = vector.extract_strided_slice %37 {offsets = [0, 0], sizes = [8, 32], strides = [1, 1]} : vector<8x128xf32> to vector<8x32xf32>
    %39 = vector.extract_strided_slice %37 {offsets = [0, 32], sizes = [8, 32], strides = [1, 1]} : vector<8x128xf32> to vector<8x32xf32>
    %40 = vector.extract_strided_slice %37 {offsets = [0, 96], sizes = [8, 32], strides = [1, 1]} : vector<8x128xf32> to vector<8x32xf32>
    %41 = vector.extract_strided_slice %32 {offsets = [0, 64], sizes = [8, 32], strides = [1, 1]} : vector<8x128xf32> to vector<8x32xf32>
    %42 = math.tanh %41 : vector<8x32xf32>
    %43 = arith.mulf %39, %26 : vector<8x32xf32>
    %44 = arith.mulf %38, %42 : vector<8x32xf32>
    %45 = arith.addf %43, %44 : vector<8x32xf32>
    %46 = math.tanh %45 : vector<8x32xf32>
    %47 = arith.mulf %40, %46 : vector<8x32xf32>
    %c8_21 = arith.constant 8 : index
    %c0_22 = arith.constant 0 : index
    %48 = vector.load %arg4[%c8_21, %c0_22] : memref<64x64xf32, #tpu.memory_space<vmem>>, vector<8x32xf32>
    tpu.vector_store %arg4[%c8_21, %c0_22], %47 {strides = array<i32>} : memref<64x64xf32, #tpu.memory_space<vmem>>, vector<8x32xf32>,
    %c16 = arith.constant 16 : index
    %c0_23 = arith.constant 0 : index
    %49 = vector.load %arg5[%c16, %c0_23] : memref<64x256xf32, #tpu.memory_space<vmem>>, vector<8x128xf32>
    %cst_24 = arith.constant dense<0.000000e+00> : vector<8x128xf32>
    %50 = tpu.matmul %47, %8, %cst_24 {dimension_numbers = #tpu.dot_dimension_numbers<[1], [0], [0], [1], [0, 0, 1, 1], [], []>} : vector<8x32xf32>, vector<32x128xf32>, vector<8x128xf32> -> vector<8x128xf32>
    %51 = arith.addf %49, %50 : vector<8x128xf32>
    %52 = arith.negf %51 : vector<8x128xf32>
    %53 = math.exp %52 : vector<8x128xf32>
    %cst_25 = arith.constant 1.000000e+00 : f32
    %54 = vector.broadcast %cst_25 : f32 to vector<8x128xf32>
    %55 = arith.addf %54, %53 : vector<8x128xf32>
    %56 = arith.divf %54, %55 : vector<8x128xf32>
    %57 = vector.extract_strided_slice %56 {offsets = [0, 0], sizes = [8, 32], strides = [1, 1]} : vector<8x128xf32> to vector<8x32xf32>
    %58 = vector.extract_strided_slice %56 {offsets = [0, 32], sizes = [8, 32], strides = [1, 1]} : vector<8x128xf32> to vector<8x32xf32>
    %59 = vector.extract_strided_slice %56 {offsets = [0, 96], sizes = [8, 32], strides = [1, 1]} : vector<8x128xf32> to vector<8x32xf32>
    %60 = vector.extract_strided_slice %51 {offsets = [0, 64], sizes = [8, 32], strides = [1, 1]} : vector<8x128xf32> to vector<8x32xf32>
    %61 = math.tanh %60 : vector<8x32xf32>
    %62 = arith.mulf %58, %45 : vector<8x32xf32>
    %63 = arith.mulf %57, %61 : vector<8x32xf32>
    %64 = arith.addf %62, %63 : vector<8x32xf32>
    %65 = math.tanh %64 : vector<8x32xf32>
    %66 = arith.mulf %59, %65 : vector<8x32xf32>
    %c16_26 = arith.constant 16 : index
    %c0_27 = arith.constant 0 : index
    %67 = vector.load %arg4[%c16_26, %c0_27] : memref<64x64xf32, #tpu.memory_space<vmem>>, vector<8x32xf32>
    tpu.vector_store %arg4[%c16_26, %c0_27], %66 {strides = array<i32>} : memref<64x64xf32, #tpu.memory_space<vmem>>, vector<8x32xf32>,
    %c24 = arith.constant 24 : index
    %c0_28 = arith.constant 0 : index
    %68 = vector.load %arg5[%c24, %c0_28] : memref<64x256xf32, #tpu.memory_space<vmem>>, vector<8x128xf32>
    %cst_29 = arith.constant dense<0.000000e+00> : vector<8x128xf32>
    %69 = tpu.matmul %66, %8, %cst_29 {dimension_numbers = #tpu.dot_dimension_numbers<[1], [0], [0], [1], [0, 0, 1, 1], [], []>} : vector<8x32xf32>, vector<32x128xf32>, vector<8x128xf32> -> vector<8x128xf32>
    %70 = arith.addf %68, %69 : vector<8x128xf32>
    %71 = arith.negf %70 : vector<8x128xf32>
    %72 = math.exp %71 : vector<8x128xf32>
    %cst_30 = arith.constant 1.000000e+00 : f32
    %73 = vector.broadcast %cst_30 : f32 to vector<8x128xf32>
    %74 = arith.addf %73, %72 : vector<8x128xf32>
    %75 = arith.divf %73, %74 : vector<8x128xf32>
    %76 = vector.extract_strided_slice %75 {offsets = [0, 0], sizes = [8, 32], strides = [1, 1]} : vector<8x128xf32> to vector<8x32xf32>
    %77 = vector.extract_strided_slice %75 {offsets = [0, 32], sizes = [8, 32], strides = [1, 1]} : vector<8x128xf32> to vector<8x32xf32>
    %78 = vector.extract_strided_slice %75 {offsets = [0, 96], sizes = [8, 32], strides = [1, 1]} : vector<8x128xf32> to vector<8x32xf32>
    %79 = vector.extract_strided_slice %70 {offsets = [0, 64], sizes = [8, 32], strides = [1, 1]} : vector<8x128xf32> to vector<8x32xf32>
    %80 = math.tanh %79 : vector<8x32xf32>
    %81 = arith.mulf %77, %64 : vector<8x32xf32>
    %82 = arith.mulf %76, %80 : vector<8x32xf32>
    %83 = arith.addf %81, %82 : vector<8x32xf32>
    %84 = math.tanh %83 : vector<8x32xf32>
    %85 = arith.mulf %78, %84 : vector<8x32xf32>
    %c24_31 = arith.constant 24 : index
    %c0_32 = arith.constant 0 : index
    %86 = vector.load %arg4[%c24_31, %c0_32] : memref<64x64xf32, #tpu.memory_space<vmem>>, vector<8x32xf32>
    tpu.vector_store %arg4[%c24_31, %c0_32], %85 {strides = array<i32>} : memref<64x64xf32, #tpu.memory_space<vmem>>, vector<8x32xf32>,
    %c32 = arith.constant 32 : index
    %c0_33 = arith.constant 0 : index
    %87 = vector.load %arg5[%c32, %c0_33] : memref<64x256xf32, #tpu.memory_space<vmem>>, vector<8x128xf32>
    %cst_34 = arith.constant dense<0.000000e+00> : vector<8x128xf32>
    %88 = tpu.matmul %85, %8, %cst_34 {dimension_numbers = #tpu.dot_dimension_numbers<[1], [0], [0], [1], [0, 0, 1, 1], [], []>} : vector<8x32xf32>, vector<32x128xf32>, vector<8x128xf32> -> vector<8x128xf32>
    %89 = arith.addf %87, %88 : vector<8x128xf32>
    %90 = arith.negf %89 : vector<8x128xf32>
    %91 = math.exp %90 : vector<8x128xf32>
    %cst_35 = arith.constant 1.000000e+00 : f32
    %92 = vector.broadcast %cst_35 : f32 to vector<8x128xf32>
    %93 = arith.addf %92, %91 : vector<8x128xf32>
    %94 = arith.divf %92, %93 : vector<8x128xf32>
    %95 = vector.extract_strided_slice %94 {offsets = [0, 0], sizes = [8, 32], strides = [1, 1]} : vector<8x128xf32> to vector<8x32xf32>
    %96 = vector.extract_strided_slice %94 {offsets = [0, 32], sizes = [8, 32], strides = [1, 1]} : vector<8x128xf32> to vector<8x32xf32>
    %97 = vector.extract_strided_slice %94 {offsets = [0, 96], sizes = [8, 32], strides = [1, 1]} : vector<8x128xf32> to vector<8x32xf32>
    %98 = vector.extract_strided_slice %89 {offsets = [0, 64], sizes = [8, 32], strides = [1, 1]} : vector<8x128xf32> to vector<8x32xf32>
    %99 = math.tanh %98 : vector<8x32xf32>
    %100 = arith.mulf %96, %83 : vector<8x32xf32>
    %101 = arith.mulf %95, %99 : vector<8x32xf32>
    %102 = arith.addf %100, %101 : vector<8x32xf32>
    %103 = math.tanh %102 : vector<8x32xf32>
    %104 = arith.mulf %97, %103 : vector<8x32xf32>
    %c32_36 = arith.constant 32 : index
    %c0_37 = arith.constant 0 : index
    %105 = vector.load %arg4[%c32_36, %c0_37] : memref<64x64xf32, #tpu.memory_space<vmem>>, vector<8x32xf32>
    tpu.vector_store %arg4[%c32_36, %c0_37], %104 {strides = array<i32>} : memref<64x64xf32, #tpu.memory_space<vmem>>, vector<8x32xf32>,
    %c40 = arith.constant 40 : index
    %c0_38 = arith.constant 0 : index
    %106 = vector.load %arg5[%c40, %c0_38] : memref<64x256xf32, #tpu.memory_space<vmem>>, vector<8x128xf32>
    %cst_39 = arith.constant dense<0.000000e+00> : vector<8x128xf32>
    %107 = tpu.matmul %104, %8, %cst_39 {dimension_numbers = #tpu.dot_dimension_numbers<[1], [0], [0], [1], [0, 0, 1, 1], [], []>} : vector<8x32xf32>, vector<32x128xf32>, vector<8x128xf32> -> vector<8x128xf32>
    %108 = arith.addf %106, %107 : vector<8x128xf32>
    %109 = arith.negf %108 : vector<8x128xf32>
    %110 = math.exp %109 : vector<8x128xf32>
    %cst_40 = arith.constant 1.000000e+00 : f32
    %111 = vector.broadcast %cst_40 : f32 to vector<8x128xf32>
    %112 = arith.addf %111, %110 : vector<8x128xf32>
    %113 = arith.divf %111, %112 : vector<8x128xf32>
    %114 = vector.extract_strided_slice %113 {offsets = [0, 0], sizes = [8, 32], strides = [1, 1]} : vector<8x128xf32> to vector<8x32xf32>
    %115 = vector.extract_strided_slice %113 {offsets = [0, 32], sizes = [8, 32], strides = [1, 1]} : vector<8x128xf32> to vector<8x32xf32>
    %116 = vector.extract_strided_slice %113 {offsets = [0, 96], sizes = [8, 32], strides = [1, 1]} : vector<8x128xf32> to vector<8x32xf32>
    %117 = vector.extract_strided_slice %108 {offsets = [0, 64], sizes = [8, 32], strides = [1, 1]} : vector<8x128xf32> to vector<8x32xf32>
    %118 = math.tanh %117 : vector<8x32xf32>
    %119 = arith.mulf %115, %102 : vector<8x32xf32>
    %120 = arith.mulf %114, %118 : vector<8x32xf32>
    %121 = arith.addf %119, %120 : vector<8x32xf32>
    %122 = math.tanh %121 : vector<8x32xf32>
    %123 = arith.mulf %116, %122 : vector<8x32xf32>
    %c40_41 = arith.constant 40 : index
    %c0_42 = arith.constant 0 : index
    %124 = vector.load %arg4[%c40_41, %c0_42] : memref<64x64xf32, #tpu.memory_space<vmem>>, vector<8x32xf32>
    tpu.vector_store %arg4[%c40_41, %c0_42], %123 {strides = array<i32>} : memref<64x64xf32, #tpu.memory_space<vmem>>, vector<8x32xf32>,
    %c48 = arith.constant 48 : index
    %c0_43 = arith.constant 0 : index
    %125 = vector.load %arg5[%c48, %c0_43] : memref<64x256xf32, #tpu.memory_space<vmem>>, vector<8x128xf32>
    %cst_44 = arith.constant dense<0.000000e+00> : vector<8x128xf32>
    %126 = tpu.matmul %123, %8, %cst_44 {dimension_numbers = #tpu.dot_dimension_numbers<[1], [0], [0], [1], [0, 0, 1, 1], [], []>} : vector<8x32xf32>, vector<32x128xf32>, vector<8x128xf32> -> vector<8x128xf32>
    %127 = arith.addf %125, %126 : vector<8x128xf32>
    %128 = arith.negf %127 : vector<8x128xf32>
    %129 = math.exp %128 : vector<8x128xf32>
    %cst_45 = arith.constant 1.000000e+00 : f32
    %130 = vector.broadcast %cst_45 : f32 to vector<8x128xf32>
    %131 = arith.addf %130, %129 : vector<8x128xf32>
    %132 = arith.divf %130, %131 : vector<8x128xf32>
    %133 = vector.extract_strided_slice %132 {offsets = [0, 0], sizes = [8, 32], strides = [1, 1]} : vector<8x128xf32> to vector<8x32xf32>
    %134 = vector.extract_strided_slice %132 {offsets = [0, 32], sizes = [8, 32], strides = [1, 1]} : vector<8x128xf32> to vector<8x32xf32>
    %135 = vector.extract_strided_slice %132 {offsets = [0, 96], sizes = [8, 32], strides = [1, 1]} : vector<8x128xf32> to vector<8x32xf32>
    %136 = vector.extract_strided_slice %127 {offsets = [0, 64], sizes = [8, 32], strides = [1, 1]} : vector<8x128xf32> to vector<8x32xf32>
    %137 = math.tanh %136 : vector<8x32xf32>
    %138 = arith.mulf %134, %121 : vector<8x32xf32>
    %139 = arith.mulf %133, %137 : vector<8x32xf32>
    %140 = arith.addf %138, %139 : vector<8x32xf32>
    %141 = math.tanh %140 : vector<8x32xf32>
    %142 = arith.mulf %135, %141 : vector<8x32xf32>
    %c48_46 = arith.constant 48 : index
    %c0_47 = arith.constant 0 : index
    %143 = vector.load %arg4[%c48_46, %c0_47] : memref<64x64xf32, #tpu.memory_space<vmem>>, vector<8x32xf32>
    tpu.vector_store %arg4[%c48_46, %c0_47], %142 {strides = array<i32>} : memref<64x64xf32, #tpu.memory_space<vmem>>, vector<8x32xf32>,
    %c56 = arith.constant 56 : index
    %c0_48 = arith.constant 0 : index
    %144 = vector.load %arg5[%c56, %c0_48] : memref<64x256xf32, #tpu.memory_space<vmem>>, vector<8x128xf32>
    %cst_49 = arith.constant dense<0.000000e+00> : vector<8x128xf32>
    %145 = tpu.matmul %142, %8, %cst_49 {dimension_numbers = #tpu.dot_dimension_numbers<[1], [0], [0], [1], [0, 0, 1, 1], [], []>} : vector<8x32xf32>, vector<32x128xf32>, vector<8x128xf32> -> vector<8x128xf32>
    %146 = arith.addf %144, %145 : vector<8x128xf32>
    %147 = arith.negf %146 : vector<8x128xf32>
    %148 = math.exp %147 : vector<8x128xf32>
    %cst_50 = arith.constant 1.000000e+00 : f32
    %149 = vector.broadcast %cst_50 : f32 to vector<8x128xf32>
    %150 = arith.addf %149, %148 : vector<8x128xf32>
    %151 = arith.divf %149, %150 : vector<8x128xf32>
    %152 = vector.extract_strided_slice %151 {offsets = [0, 0], sizes = [8, 32], strides = [1, 1]} : vector<8x128xf32> to vector<8x32xf32>
    %153 = vector.extract_strided_slice %151 {offsets = [0, 32], sizes = [8, 32], strides = [1, 1]} : vector<8x128xf32> to vector<8x32xf32>
    %154 = vector.extract_strided_slice %151 {offsets = [0, 96], sizes = [8, 32], strides = [1, 1]} : vector<8x128xf32> to vector<8x32xf32>
    %155 = vector.extract_strided_slice %146 {offsets = [0, 64], sizes = [8, 32], strides = [1, 1]} : vector<8x128xf32> to vector<8x32xf32>
    %156 = math.tanh %155 : vector<8x32xf32>
    %157 = arith.mulf %153, %140 : vector<8x32xf32>
    %158 = arith.mulf %152, %156 : vector<8x32xf32>
    %159 = arith.addf %157, %158 : vector<8x32xf32>
    %160 = math.tanh %159 : vector<8x32xf32>
    %161 = arith.mulf %154, %160 : vector<8x32xf32>
    %c56_51 = arith.constant 56 : index
    %c0_52 = arith.constant 0 : index
    %162 = vector.load %arg4[%c56_51, %c0_52] : memref<64x64xf32, #tpu.memory_space<vmem>>, vector<8x32xf32>
    tpu.vector_store %arg4[%c56_51, %c0_52], %161 {strides = array<i32>} : memref<64x64xf32, #tpu.memory_space<vmem>>, vector<8x32xf32>,
    %c1 = arith.constant 1 : index
    %c0_53 = arith.constant 0 : index
    %c0_54 = arith.constant 0 : index
    %163 = vector.load %arg2[%c1, %c0_53, %c0_54] : memref<2x32x128xf32, #tpu.memory_space<vmem>>, vector<1x32x128xf32>
    %164 = vector.shape_cast %163 : vector<1x32x128xf32> to vector<32x128xf32>
    %cst_55 = arith.constant 0.000000e+00 : f32
    %165 = vector.broadcast %cst_55 : f32 to vector<8x32xf32>
    %cst_56 = arith.constant 0.000000e+00 : f32
    %166 = vector.broadcast %cst_56 : f32 to vector<8x32xf32>
    %c56_57 = arith.constant 56 : index
    %c128 = arith.constant 128 : index
    %167 = vector.load %arg5[%c56_57, %c128] : memref<64x256xf32, #tpu.memory_space<vmem>>, vector<8x128xf32>
    %cst_58 = arith.constant dense<0.000000e+00> : vector<8x128xf32>
    %168 = tpu.matmul %165, %164, %cst_58 {dimension_numbers = #tpu.dot_dimension_numbers<[1], [0], [0], [1], [0, 0, 1, 1], [], []>} : vector<8x32xf32>, vector<32x128xf32>, vector<8x128xf32> -> vector<8x128xf32>
    %169 = arith.addf %167, %168 : vector<8x128xf32>
    %170 = arith.negf %169 : vector<8x128xf32>
    %171 = math.exp %170 : vector<8x128xf32>
    %cst_59 = arith.constant 1.000000e+00 : f32
    %172 = vector.broadcast %cst_59 : f32 to vector<8x128xf32>
    %173 = arith.addf %172, %171 : vector<8x128xf32>
    %174 = arith.divf %172, %173 : vector<8x128xf32>
    %175 = vector.extract_strided_slice %174 {offsets = [0, 0], sizes = [8, 32], strides = [1, 1]} : vector<8x128xf32> to vector<8x32xf32>
    %176 = vector.extract_strided_slice %174 {offsets = [0, 32], sizes = [8, 32], strides = [1, 1]} : vector<8x128xf32> to vector<8x32xf32>
    %177 = vector.extract_strided_slice %174 {offsets = [0, 96], sizes = [8, 32], strides = [1, 1]} : vector<8x128xf32> to vector<8x32xf32>
    %178 = vector.extract_strided_slice %169 {offsets = [0, 64], sizes = [8, 32], strides = [1, 1]} : vector<8x128xf32> to vector<8x32xf32>
    %179 = math.tanh %178 : vector<8x32xf32>
    %180 = arith.mulf %176, %166 : vector<8x32xf32>
    %181 = arith.mulf %175, %179 : vector<8x32xf32>
    %182 = arith.addf %180, %181 : vector<8x32xf32>
    %183 = math.tanh %182 : vector<8x32xf32>
    %184 = arith.mulf %177, %183 : vector<8x32xf32>
    %c56_60 = arith.constant 56 : index
    %c32_61 = arith.constant 32 : index
    %185 = vector.load %arg4[%c56_60, %c32_61] : memref<64x64xf32, #tpu.memory_space<vmem>>, vector<8x32xf32>
    tpu.vector_store %arg4[%c56_60, %c32_61], %184 {strides = array<i32>} : memref<64x64xf32, #tpu.memory_space<vmem>>, vector<8x32xf32>,
    %c48_62 = arith.constant 48 : index
    %c128_63 = arith.constant 128 : index
    %186 = vector.load %arg5[%c48_62, %c128_63] : memref<64x256xf32, #tpu.memory_space<vmem>>, vector<8x128xf32>
    %cst_64 = arith.constant dense<0.000000e+00> : vector<8x128xf32>
    %187 = tpu.matmul %184, %164, %cst_64 {dimension_numbers = #tpu.dot_dimension_numbers<[1], [0], [0], [1], [0, 0, 1, 1], [], []>} : vector<8x32xf32>, vector<32x128xf32>, vector<8x128xf32> -> vector<8x128xf32>
    %188 = arith.addf %186, %187 : vector<8x128xf32>
    %189 = arith.negf %188 : vector<8x128xf32>
    %190 = math.exp %189 : vector<8x128xf32>
    %cst_65 = arith.constant 1.000000e+00 : f32
    %191 = vector.broadcast %cst_65 : f32 to vector<8x128xf32>
    %192 = arith.addf %191, %190 : vector<8x128xf32>
    %193 = arith.divf %191, %192 : vector<8x128xf32>
    %194 = vector.extract_strided_slice %193 {offsets = [0, 0], sizes = [8, 32], strides = [1, 1]} : vector<8x128xf32> to vector<8x32xf32>
    %195 = vector.extract_strided_slice %193 {offsets = [0, 32], sizes = [8, 32], strides = [1, 1]} : vector<8x128xf32> to vector<8x32xf32>
    %196 = vector.extract_strided_slice %193 {offsets = [0, 96], sizes = [8, 32], strides = [1, 1]} : vector<8x128xf32> to vector<8x32xf32>
    %197 = vector.extract_strided_slice %188 {offsets = [0, 64], sizes = [8, 32], strides = [1, 1]} : vector<8x128xf32> to vector<8x32xf32>
    %198 = math.tanh %197 : vector<8x32xf32>
    %199 = arith.mulf %195, %182 : vector<8x32xf32>
    %200 = arith.mulf %194, %198 : vector<8x32xf32>
    %201 = arith.addf %199, %200 : vector<8x32xf32>
    %202 = math.tanh %201 : vector<8x32xf32>
    %203 = arith.mulf %196, %202 : vector<8x32xf32>
    %c48_66 = arith.constant 48 : index
    %c32_67 = arith.constant 32 : index
    %204 = vector.load %arg4[%c48_66, %c32_67] : memref<64x64xf32, #tpu.memory_space<vmem>>, vector<8x32xf32>
    tpu.vector_store %arg4[%c48_66, %c32_67], %203 {strides = array<i32>} : memref<64x64xf32, #tpu.memory_space<vmem>>, vector<8x32xf32>,
    %c40_68 = arith.constant 40 : index
    %c128_69 = arith.constant 128 : index
    %205 = vector.load %arg5[%c40_68, %c128_69] : memref<64x256xf32, #tpu.memory_space<vmem>>, vector<8x128xf32>
    %cst_70 = arith.constant dense<0.000000e+00> : vector<8x128xf32>
    %206 = tpu.matmul %203, %164, %cst_70 {dimension_numbers = #tpu.dot_dimension_numbers<[1], [0], [0], [1], [0, 0, 1, 1], [], []>} : vector<8x32xf32>, vector<32x128xf32>, vector<8x128xf32> -> vector<8x128xf32>
    %207 = arith.addf %205, %206 : vector<8x128xf32>
    %208 = arith.negf %207 : vector<8x128xf32>
    %209 = math.exp %208 : vector<8x128xf32>
    %cst_71 = arith.constant 1.000000e+00 : f32
    %210 = vector.broadcast %cst_71 : f32 to vector<8x128xf32>
    %211 = arith.addf %210, %209 : vector<8x128xf32>
    %212 = arith.divf %210, %211 : vector<8x128xf32>
    %213 = vector.extract_strided_slice %212 {offsets = [0, 0], sizes = [8, 32], strides = [1, 1]} : vector<8x128xf32> to vector<8x32xf32>
    %214 = vector.extract_strided_slice %212 {offsets = [0, 32], sizes = [8, 32], strides = [1, 1]} : vector<8x128xf32> to vector<8x32xf32>
    %215 = vector.extract_strided_slice %212 {offsets = [0, 96], sizes = [8, 32], strides = [1, 1]} : vector<8x128xf32> to vector<8x32xf32>
    %216 = vector.extract_strided_slice %207 {offsets = [0, 64], sizes = [8, 32], strides = [1, 1]} : vector<8x128xf32> to vector<8x32xf32>
    %217 = math.tanh %216 : vector<8x32xf32>
    %218 = arith.mulf %214, %201 : vector<8x32xf32>
    %219 = arith.mulf %213, %217 : vector<8x32xf32>
    %220 = arith.addf %218, %219 : vector<8x32xf32>
    %221 = math.tanh %220 : vector<8x32xf32>
    %222 = arith.mulf %215, %221 : vector<8x32xf32>
    %c40_72 = arith.constant 40 : index
    %c32_73 = arith.constant 32 : index
    %223 = vector.load %arg4[%c40_72, %c32_73] : memref<64x64xf32, #tpu.memory_space<vmem>>, vector<8x32xf32>
    tpu.vector_store %arg4[%c40_72, %c32_73], %222 {strides = array<i32>} : memref<64x64xf32, #tpu.memory_space<vmem>>, vector<8x32xf32>,
    %c32_74 = arith.constant 32 : index
    %c128_75 = arith.constant 128 : index
    %224 = vector.load %arg5[%c32_74, %c128_75] : memref<64x256xf32, #tpu.memory_space<vmem>>, vector<8x128xf32>
    %cst_76 = arith.constant dense<0.000000e+00> : vector<8x128xf32>
    %225 = tpu.matmul %222, %164, %cst_76 {dimension_numbers = #tpu.dot_dimension_numbers<[1], [0], [0], [1], [0, 0, 1, 1], [], []>} : vector<8x32xf32>, vector<32x128xf32>, vector<8x128xf32> -> vector<8x128xf32>
    %226 = arith.addf %224, %225 : vector<8x128xf32>
    %227 = arith.negf %226 : vector<8x128xf32>
    %228 = math.exp %227 : vector<8x128xf32>
    %cst_77 = arith.constant 1.000000e+00 : f32
    %229 = vector.broadcast %cst_77 : f32 to vector<8x128xf32>
    %230 = arith.addf %229, %228 : vector<8x128xf32>
    %231 = arith.divf %229, %230 : vector<8x128xf32>
    %232 = vector.extract_strided_slice %231 {offsets = [0, 0], sizes = [8, 32], strides = [1, 1]} : vector<8x128xf32> to vector<8x32xf32>
    %233 = vector.extract_strided_slice %231 {offsets = [0, 32], sizes = [8, 32], strides = [1, 1]} : vector<8x128xf32> to vector<8x32xf32>
    %234 = vector.extract_strided_slice %231 {offsets = [0, 96], sizes = [8, 32], strides = [1, 1]} : vector<8x128xf32> to vector<8x32xf32>
    %235 = vector.extract_strided_slice %226 {offsets = [0, 64], sizes = [8, 32], strides = [1, 1]} : vector<8x128xf32> to vector<8x32xf32>
    %236 = math.tanh %235 : vector<8x32xf32>
    %237 = arith.mulf %233, %220 : vector<8x32xf32>
    %238 = arith.mulf %232, %236 : vector<8x32xf32>
    %239 = arith.addf %237, %238 : vector<8x32xf32>
    %240 = math.tanh %239 : vector<8x32xf32>
    %241 = arith.mulf %234, %240 : vector<8x32xf32>
    %c32_78 = arith.constant 32 : index
    %c32_79 = arith.constant 32 : index
    %242 = vector.load %arg4[%c32_78, %c32_79] : memref<64x64xf32, #tpu.memory_space<vmem>>, vector<8x32xf32>
    tpu.vector_store %arg4[%c32_78, %c32_79], %241 {strides = array<i32>} : memref<64x64xf32, #tpu.memory_space<vmem>>, vector<8x32xf32>,
    %c24_80 = arith.constant 24 : index
    %c128_81 = arith.constant 128 : index
    %243 = vector.load %arg5[%c24_80, %c128_81] : memref<64x256xf32, #tpu.memory_space<vmem>>, vector<8x128xf32>
    %cst_82 = arith.constant dense<0.000000e+00> : vector<8x128xf32>
    %244 = tpu.matmul %241, %164, %cst_82 {dimension_numbers = #tpu.dot_dimension_numbers<[1], [0], [0], [1], [0, 0, 1, 1], [], []>} : vector<8x32xf32>, vector<32x128xf32>, vector<8x128xf32> -> vector<8x128xf32>
    %245 = arith.addf %243, %244 : vector<8x128xf32>
    %246 = arith.negf %245 : vector<8x128xf32>
    %247 = math.exp %246 : vector<8x128xf32>
    %cst_83 = arith.constant 1.000000e+00 : f32
    %248 = vector.broadcast %cst_83 : f32 to vector<8x128xf32>
    %249 = arith.addf %248, %247 : vector<8x128xf32>
    %250 = arith.divf %248, %249 : vector<8x128xf32>
    %251 = vector.extract_strided_slice %250 {offsets = [0, 0], sizes = [8, 32], strides = [1, 1]} : vector<8x128xf32> to vector<8x32xf32>
    %252 = vector.extract_strided_slice %250 {offsets = [0, 32], sizes = [8, 32], strides = [1, 1]} : vector<8x128xf32> to vector<8x32xf32>
    %253 = vector.extract_strided_slice %250 {offsets = [0, 96], sizes = [8, 32], strides = [1, 1]} : vector<8x128xf32> to vector<8x32xf32>
    %254 = vector.extract_strided_slice %245 {offsets = [0, 64], sizes = [8, 32], strides = [1, 1]} : vector<8x128xf32> to vector<8x32xf32>
    %255 = math.tanh %254 : vector<8x32xf32>
    %256 = arith.mulf %252, %239 : vector<8x32xf32>
    %257 = arith.mulf %251, %255 : vector<8x32xf32>
    %258 = arith.addf %256, %257 : vector<8x32xf32>
    %259 = math.tanh %258 : vector<8x32xf32>
    %260 = arith.mulf %253, %259 : vector<8x32xf32>
    %c24_84 = arith.constant 24 : index
    %c32_85 = arith.constant 32 : index
    %261 = vector.load %arg4[%c24_84, %c32_85] : memref<64x64xf32, #tpu.memory_space<vmem>>, vector<8x32xf32>
    tpu.vector_store %arg4[%c24_84, %c32_85], %260 {strides = array<i32>} : memref<64x64xf32, #tpu.memory_space<vmem>>, vector<8x32xf32>,
    %c16_86 = arith.constant 16 : index
    %c128_87 = arith.constant 128 : index
    %262 = vector.load %arg5[%c16_86, %c128_87] : memref<64x256xf32, #tpu.memory_space<vmem>>, vector<8x128xf32>
    %cst_88 = arith.constant dense<0.000000e+00> : vector<8x128xf32>
    %263 = tpu.matmul %260, %164, %cst_88 {dimension_numbers = #tpu.dot_dimension_numbers<[1], [0], [0], [1], [0, 0, 1, 1], [], []>} : vector<8x32xf32>, vector<32x128xf32>, vector<8x128xf32> -> vector<8x128xf32>
    %264 = arith.addf %262, %263 : vector<8x128xf32>
    %265 = arith.negf %264 : vector<8x128xf32>
    %266 = math.exp %265 : vector<8x128xf32>
    %cst_89 = arith.constant 1.000000e+00 : f32
    %267 = vector.broadcast %cst_89 : f32 to vector<8x128xf32>
    %268 = arith.addf %267, %266 : vector<8x128xf32>
    %269 = arith.divf %267, %268 : vector<8x128xf32>
    %270 = vector.extract_strided_slice %269 {offsets = [0, 0], sizes = [8, 32], strides = [1, 1]} : vector<8x128xf32> to vector<8x32xf32>
    %271 = vector.extract_strided_slice %269 {offsets = [0, 32], sizes = [8, 32], strides = [1, 1]} : vector<8x128xf32> to vector<8x32xf32>
    %272 = vector.extract_strided_slice %269 {offsets = [0, 96], sizes = [8, 32], strides = [1, 1]} : vector<8x128xf32> to vector<8x32xf32>
    %273 = vector.extract_strided_slice %264 {offsets = [0, 64], sizes = [8, 32], strides = [1, 1]} : vector<8x128xf32> to vector<8x32xf32>
    %274 = math.tanh %273 : vector<8x32xf32>
    %275 = arith.mulf %271, %258 : vector<8x32xf32>
    %276 = arith.mulf %270, %274 : vector<8x32xf32>
    %277 = arith.addf %275, %276 : vector<8x32xf32>
    %278 = math.tanh %277 : vector<8x32xf32>
    %279 = arith.mulf %272, %278 : vector<8x32xf32>
    %c16_90 = arith.constant 16 : index
    %c32_91 = arith.constant 32 : index
    %280 = vector.load %arg4[%c16_90, %c32_91] : memref<64x64xf32, #tpu.memory_space<vmem>>, vector<8x32xf32>
    tpu.vector_store %arg4[%c16_90, %c32_91], %279 {strides = array<i32>} : memref<64x64xf32, #tpu.memory_space<vmem>>, vector<8x32xf32>,
    %c8_92 = arith.constant 8 : index
    %c128_93 = arith.constant 128 : index
    %281 = vector.load %arg5[%c8_92, %c128_93] : memref<64x256xf32, #tpu.memory_space<vmem>>, vector<8x128xf32>
    %cst_94 = arith.constant dense<0.000000e+00> : vector<8x128xf32>
    %282 = tpu.matmul %279, %164, %cst_94 {dimension_numbers = #tpu.dot_dimension_numbers<[1], [0], [0], [1], [0, 0, 1, 1], [], []>} : vector<8x32xf32>, vector<32x128xf32>, vector<8x128xf32> -> vector<8x128xf32>
    %283 = arith.addf %281, %282 : vector<8x128xf32>
    %284 = arith.negf %283 : vector<8x128xf32>
    %285 = math.exp %284 : vector<8x128xf32>
    %cst_95 = arith.constant 1.000000e+00 : f32
    %286 = vector.broadcast %cst_95 : f32 to vector<8x128xf32>
    %287 = arith.addf %286, %285 : vector<8x128xf32>
    %288 = arith.divf %286, %287 : vector<8x128xf32>
    %289 = vector.extract_strided_slice %288 {offsets = [0, 0], sizes = [8, 32], strides = [1, 1]} : vector<8x128xf32> to vector<8x32xf32>
    %290 = vector.extract_strided_slice %288 {offsets = [0, 32], sizes = [8, 32], strides = [1, 1]} : vector<8x128xf32> to vector<8x32xf32>
    %291 = vector.extract_strided_slice %288 {offsets = [0, 96], sizes = [8, 32], strides = [1, 1]} : vector<8x128xf32> to vector<8x32xf32>
    %292 = vector.extract_strided_slice %283 {offsets = [0, 64], sizes = [8, 32], strides = [1, 1]} : vector<8x128xf32> to vector<8x32xf32>
    %293 = math.tanh %292 : vector<8x32xf32>
    %294 = arith.mulf %290, %277 : vector<8x32xf32>
    %295 = arith.mulf %289, %293 : vector<8x32xf32>
    %296 = arith.addf %294, %295 : vector<8x32xf32>
    %297 = math.tanh %296 : vector<8x32xf32>
    %298 = arith.mulf %291, %297 : vector<8x32xf32>
    %c8_96 = arith.constant 8 : index
    %c32_97 = arith.constant 32 : index
    %299 = vector.load %arg4[%c8_96, %c32_97] : memref<64x64xf32, #tpu.memory_space<vmem>>, vector<8x32xf32>
    tpu.vector_store %arg4[%c8_96, %c32_97], %298 {strides = array<i32>} : memref<64x64xf32, #tpu.memory_space<vmem>>, vector<8x32xf32>,
    %c0_98 = arith.constant 0 : index
    %c128_99 = arith.constant 128 : index
    %300 = vector.load %arg5[%c0_98, %c128_99] : memref<64x256xf32, #tpu.memory_space<vmem>>, vector<8x128xf32>
    %cst_100 = arith.constant dense<0.000000e+00> : vector<8x128xf32>
    %301 = tpu.matmul %298, %164, %cst_100 {dimension_numbers = #tpu.dot_dimension_numbers<[1], [0], [0], [1], [0, 0, 1, 1], [], []>} : vector<8x32xf32>, vector<32x128xf32>, vector<8x128xf32> -> vector<8x128xf32>
    %302 = arith.addf %300, %301 : vector<8x128xf32>
    %303 = arith.negf %302 : vector<8x128xf32>
    %304 = math.exp %303 : vector<8x128xf32>
    %cst_101 = arith.constant 1.000000e+00 : f32
    %305 = vector.broadcast %cst_101 : f32 to vector<8x128xf32>
    %306 = arith.addf %305, %304 : vector<8x128xf32>
    %307 = arith.divf %305, %306 : vector<8x128xf32>
    %308 = vector.extract_strided_slice %307 {offsets = [0, 0], sizes = [8, 32], strides = [1, 1]} : vector<8x128xf32> to vector<8x32xf32>
    %309 = vector.extract_strided_slice %307 {offsets = [0, 32], sizes = [8, 32], strides = [1, 1]} : vector<8x128xf32> to vector<8x32xf32>
    %310 = vector.extract_strided_slice %307 {offsets = [0, 96], sizes = [8, 32], strides = [1, 1]} : vector<8x128xf32> to vector<8x32xf32>
    %311 = vector.extract_strided_slice %302 {offsets = [0, 64], sizes = [8, 32], strides = [1, 1]} : vector<8x128xf32> to vector<8x32xf32>
    %312 = math.tanh %311 : vector<8x32xf32>
    %313 = arith.mulf %309, %296 : vector<8x32xf32>
    %314 = arith.mulf %308, %312 : vector<8x32xf32>
    %315 = arith.addf %313, %314 : vector<8x32xf32>
    %316 = math.tanh %315 : vector<8x32xf32>
    %317 = arith.mulf %310, %316 : vector<8x32xf32>
    %c0_102 = arith.constant 0 : index
    %c32_103 = arith.constant 32 : index
    %318 = vector.load %arg4[%c0_102, %c32_103] : memref<64x64xf32, #tpu.memory_space<vmem>>, vector<8x32xf32>
    tpu.vector_store %arg4[%c0_102, %c32_103], %317 {strides = array<i32>} : memref<64x64xf32, #tpu.memory_space<vmem>>, vector<8x32xf32>,
    return
  }
}

module attributes {stable_mosaic.version = 11 : i64} {
  func.func @_bilstm_head_kernel(%arg0: memref<64x64xf32, #tpu.memory_space<vmem>>, %arg1: memref<64x256xf32, #tpu.memory_space<vmem>>, %arg2: memref<2x32x128xf32, #tpu.memory_space<vmem>>, %arg3: memref<1x256xf32, #tpu.memory_space<vmem>>, %arg4: memref<8x1xi32, #tpu.memory_space<vmem>>, %arg5: memref<64x32xf32, #tpu.memory_space<vmem>>, %arg6: memref<1x32xf32, #tpu.memory_space<vmem>>, %arg7: memref<32x32xf32, #tpu.memory_space<vmem>>, %arg8: memref<1x32xf32, #tpu.memory_space<vmem>>, %arg9: memref<8x32xf32, #tpu.memory_space<vmem>>, %arg10: memref<64x256xf32, #tpu.memory_space<vmem>>) attributes {dimension_semantics = [], scalar_prefetch = 0 : i64, scratch_operands = 1 : i64, tpu.core_type = #tpu.core_type<tc>} {
    %c0 = arith.constant 0 : index
    %c0_0 = arith.constant 0 : index
    %0 = vector.load %arg0[%c0, %c0_0] : memref<64x64xf32, #tpu.memory_space<vmem>>, vector<64x64xf32>
    %c0_1 = arith.constant 0 : index
    %c0_2 = arith.constant 0 : index
    %1 = vector.load %arg1[%c0_1, %c0_2] : memref<64x256xf32, #tpu.memory_space<vmem>>, vector<64x256xf32>
    %cst = arith.constant dense<0.000000e+00> : vector<64x256xf32>
    %2 = tpu.matmul %0, %1, %cst {dimension_numbers = #tpu.dot_dimension_numbers<[1], [0], [0], [1], [0, 0, 1, 1], [], []>} : vector<64x64xf32>, vector<64x256xf32>, vector<64x256xf32> -> vector<64x256xf32>
    %c0_3 = arith.constant 0 : index
    %c0_4 = arith.constant 0 : index
    %3 = vector.load %arg3[%c0_3, %c0_4] : memref<1x256xf32, #tpu.memory_space<vmem>>, vector<1x256xf32>
    %4 = vector.broadcast %3 : vector<1x256xf32> to vector<64x256xf32>
    %5 = arith.addf %2, %4 : vector<64x256xf32>
    %c0_5 = arith.constant 0 : index
    %c0_6 = arith.constant 0 : index
    %6 = vector.load %arg10[%c0_5, %c0_6] : memref<64x256xf32, #tpu.memory_space<vmem>>, vector<64x256xf32>
    tpu.vector_store %arg10[%c0_5, %c0_6], %5 {strides = array<i32>} : memref<64x256xf32, #tpu.memory_space<vmem>>, vector<64x256xf32>,
    %c0_7 = arith.constant 0 : index
    %c0_8 = arith.constant 0 : index
    %7 = vector.load %arg4[%c0_7, %c0_8] : memref<8x1xi32, #tpu.memory_space<vmem>>, vector<8x1xi32>
    %c0_9 = arith.constant 0 : index
    %c0_10 = arith.constant 0 : index
    %c0_11 = arith.constant 0 : index
    %8 = vector.load %arg2[%c0_9, %c0_10, %c0_11] : memref<2x32x128xf32, #tpu.memory_space<vmem>>, vector<1x32x128xf32>
    %9 = vector.shape_cast %8 : vector<1x32x128xf32> to vector<32x128xf32>
    %cst_12 = arith.constant 0.000000e+00 : f32
    %10 = vector.broadcast %cst_12 : f32 to vector<8x32xf32>
    %cst_13 = arith.constant 0.000000e+00 : f32
    %11 = vector.broadcast %cst_13 : f32 to vector<8x32xf32>
    %cst_14 = arith.constant 0.000000e+00 : f32
    %12 = vector.broadcast %cst_14 : f32 to vector<8x32xf32>
    %c0_15 = arith.constant 0 : index
    %c0_16 = arith.constant 0 : index
    %13 = vector.load %arg10[%c0_15, %c0_16] : memref<64x256xf32, #tpu.memory_space<vmem>>, vector<8x128xf32>
    %cst_17 = arith.constant dense<0.000000e+00> : vector<8x128xf32>
    %14 = tpu.matmul %10, %9, %cst_17 {dimension_numbers = #tpu.dot_dimension_numbers<[1], [0], [0], [1], [0, 0, 1, 1], [], []>} : vector<8x32xf32>, vector<32x128xf32>, vector<8x128xf32> -> vector<8x128xf32>
    %15 = arith.addf %13, %14 : vector<8x128xf32>
    %16 = arith.negf %15 : vector<8x128xf32>
    %17 = math.exp %16 : vector<8x128xf32>
    %cst_18 = arith.constant 1.000000e+00 : f32
    %18 = vector.broadcast %cst_18 : f32 to vector<8x128xf32>
    %19 = arith.addf %18, %17 : vector<8x128xf32>
    %20 = arith.divf %18, %19 : vector<8x128xf32>
    %21 = vector.extract_strided_slice %20 {offsets = [0, 0], sizes = [8, 32], strides = [1, 1]} : vector<8x128xf32> to vector<8x32xf32>
    %22 = vector.extract_strided_slice %20 {offsets = [0, 32], sizes = [8, 32], strides = [1, 1]} : vector<8x128xf32> to vector<8x32xf32>
    %23 = vector.extract_strided_slice %20 {offsets = [0, 96], sizes = [8, 32], strides = [1, 1]} : vector<8x128xf32> to vector<8x32xf32>
    %24 = vector.extract_strided_slice %15 {offsets = [0, 64], sizes = [8, 32], strides = [1, 1]} : vector<8x128xf32> to vector<8x32xf32>
    %25 = math.tanh %24 : vector<8x32xf32>
    %26 = arith.mulf %22, %11 : vector<8x32xf32>
    %27 = arith.mulf %21, %25 : vector<8x32xf32>
    %28 = arith.addf %26, %27 : vector<8x32xf32>
    %29 = math.tanh %28 : vector<8x32xf32>
    %30 = arith.mulf %23, %29 : vector<8x32xf32>
    %c0_i32 = arith.constant 0 : i32
    %31 = vector.broadcast %c0_i32 : i32 to vector<8x1xi32>
    %32 = arith.cmpi eq, %7, %31 : vector<8x1xi32>
    %33 = vector.shape_cast %32 : vector<8x1xi1> to vector<8x1xi1>
    %34 = vector.broadcast %33 : vector<8x1xi1> to vector<8x32xi1>
    %35 = arith.select %34, %30, %12 : vector<8x32xi1>, vector<8x32xf32>
    %c8 = arith.constant 8 : index
    %c0_19 = arith.constant 0 : index
    %36 = vector.load %arg10[%c8, %c0_19] : memref<64x256xf32, #tpu.memory_space<vmem>>, vector<8x128xf32>
    %cst_20 = arith.constant dense<0.000000e+00> : vector<8x128xf32>
    %37 = tpu.matmul %30, %9, %cst_20 {dimension_numbers = #tpu.dot_dimension_numbers<[1], [0], [0], [1], [0, 0, 1, 1], [], []>} : vector<8x32xf32>, vector<32x128xf32>, vector<8x128xf32> -> vector<8x128xf32>
    %38 = arith.addf %36, %37 : vector<8x128xf32>
    %39 = arith.negf %38 : vector<8x128xf32>
    %40 = math.exp %39 : vector<8x128xf32>
    %cst_21 = arith.constant 1.000000e+00 : f32
    %41 = vector.broadcast %cst_21 : f32 to vector<8x128xf32>
    %42 = arith.addf %41, %40 : vector<8x128xf32>
    %43 = arith.divf %41, %42 : vector<8x128xf32>
    %44 = vector.extract_strided_slice %43 {offsets = [0, 0], sizes = [8, 32], strides = [1, 1]} : vector<8x128xf32> to vector<8x32xf32>
    %45 = vector.extract_strided_slice %43 {offsets = [0, 32], sizes = [8, 32], strides = [1, 1]} : vector<8x128xf32> to vector<8x32xf32>
    %46 = vector.extract_strided_slice %43 {offsets = [0, 96], sizes = [8, 32], strides = [1, 1]} : vector<8x128xf32> to vector<8x32xf32>
    %47 = vector.extract_strided_slice %38 {offsets = [0, 64], sizes = [8, 32], strides = [1, 1]} : vector<8x128xf32> to vector<8x32xf32>
    %48 = math.tanh %47 : vector<8x32xf32>
    %49 = arith.mulf %45, %28 : vector<8x32xf32>
    %50 = arith.mulf %44, %48 : vector<8x32xf32>
    %51 = arith.addf %49, %50 : vector<8x32xf32>
    %52 = math.tanh %51 : vector<8x32xf32>
    %53 = arith.mulf %46, %52 : vector<8x32xf32>
    %c1_i32 = arith.constant 1 : i32
    %54 = vector.broadcast %c1_i32 : i32 to vector<8x1xi32>
    %55 = arith.cmpi eq, %7, %54 : vector<8x1xi32>
    %56 = vector.shape_cast %55 : vector<8x1xi1> to vector<8x1xi1>
    %57 = vector.broadcast %56 : vector<8x1xi1> to vector<8x32xi1>
    %58 = arith.select %57, %53, %35 : vector<8x32xi1>, vector<8x32xf32>
    %c16 = arith.constant 16 : index
    %c0_22 = arith.constant 0 : index
    %59 = vector.load %arg10[%c16, %c0_22] : memref<64x256xf32, #tpu.memory_space<vmem>>, vector<8x128xf32>
    %cst_23 = arith.constant dense<0.000000e+00> : vector<8x128xf32>
    %60 = tpu.matmul %53, %9, %cst_23 {dimension_numbers = #tpu.dot_dimension_numbers<[1], [0], [0], [1], [0, 0, 1, 1], [], []>} : vector<8x32xf32>, vector<32x128xf32>, vector<8x128xf32> -> vector<8x128xf32>
    %61 = arith.addf %59, %60 : vector<8x128xf32>
    %62 = arith.negf %61 : vector<8x128xf32>
    %63 = math.exp %62 : vector<8x128xf32>
    %cst_24 = arith.constant 1.000000e+00 : f32
    %64 = vector.broadcast %cst_24 : f32 to vector<8x128xf32>
    %65 = arith.addf %64, %63 : vector<8x128xf32>
    %66 = arith.divf %64, %65 : vector<8x128xf32>
    %67 = vector.extract_strided_slice %66 {offsets = [0, 0], sizes = [8, 32], strides = [1, 1]} : vector<8x128xf32> to vector<8x32xf32>
    %68 = vector.extract_strided_slice %66 {offsets = [0, 32], sizes = [8, 32], strides = [1, 1]} : vector<8x128xf32> to vector<8x32xf32>
    %69 = vector.extract_strided_slice %66 {offsets = [0, 96], sizes = [8, 32], strides = [1, 1]} : vector<8x128xf32> to vector<8x32xf32>
    %70 = vector.extract_strided_slice %61 {offsets = [0, 64], sizes = [8, 32], strides = [1, 1]} : vector<8x128xf32> to vector<8x32xf32>
    %71 = math.tanh %70 : vector<8x32xf32>
    %72 = arith.mulf %68, %51 : vector<8x32xf32>
    %73 = arith.mulf %67, %71 : vector<8x32xf32>
    %74 = arith.addf %72, %73 : vector<8x32xf32>
    %75 = math.tanh %74 : vector<8x32xf32>
    %76 = arith.mulf %69, %75 : vector<8x32xf32>
    %c2_i32 = arith.constant 2 : i32
    %77 = vector.broadcast %c2_i32 : i32 to vector<8x1xi32>
    %78 = arith.cmpi eq, %7, %77 : vector<8x1xi32>
    %79 = vector.shape_cast %78 : vector<8x1xi1> to vector<8x1xi1>
    %80 = vector.broadcast %79 : vector<8x1xi1> to vector<8x32xi1>
    %81 = arith.select %80, %76, %58 : vector<8x32xi1>, vector<8x32xf32>
    %c24 = arith.constant 24 : index
    %c0_25 = arith.constant 0 : index
    %82 = vector.load %arg10[%c24, %c0_25] : memref<64x256xf32, #tpu.memory_space<vmem>>, vector<8x128xf32>
    %cst_26 = arith.constant dense<0.000000e+00> : vector<8x128xf32>
    %83 = tpu.matmul %76, %9, %cst_26 {dimension_numbers = #tpu.dot_dimension_numbers<[1], [0], [0], [1], [0, 0, 1, 1], [], []>} : vector<8x32xf32>, vector<32x128xf32>, vector<8x128xf32> -> vector<8x128xf32>
    %84 = arith.addf %82, %83 : vector<8x128xf32>
    %85 = arith.negf %84 : vector<8x128xf32>
    %86 = math.exp %85 : vector<8x128xf32>
    %cst_27 = arith.constant 1.000000e+00 : f32
    %87 = vector.broadcast %cst_27 : f32 to vector<8x128xf32>
    %88 = arith.addf %87, %86 : vector<8x128xf32>
    %89 = arith.divf %87, %88 : vector<8x128xf32>
    %90 = vector.extract_strided_slice %89 {offsets = [0, 0], sizes = [8, 32], strides = [1, 1]} : vector<8x128xf32> to vector<8x32xf32>
    %91 = vector.extract_strided_slice %89 {offsets = [0, 32], sizes = [8, 32], strides = [1, 1]} : vector<8x128xf32> to vector<8x32xf32>
    %92 = vector.extract_strided_slice %89 {offsets = [0, 96], sizes = [8, 32], strides = [1, 1]} : vector<8x128xf32> to vector<8x32xf32>
    %93 = vector.extract_strided_slice %84 {offsets = [0, 64], sizes = [8, 32], strides = [1, 1]} : vector<8x128xf32> to vector<8x32xf32>
    %94 = math.tanh %93 : vector<8x32xf32>
    %95 = arith.mulf %91, %74 : vector<8x32xf32>
    %96 = arith.mulf %90, %94 : vector<8x32xf32>
    %97 = arith.addf %95, %96 : vector<8x32xf32>
    %98 = math.tanh %97 : vector<8x32xf32>
    %99 = arith.mulf %92, %98 : vector<8x32xf32>
    %c3_i32 = arith.constant 3 : i32
    %100 = vector.broadcast %c3_i32 : i32 to vector<8x1xi32>
    %101 = arith.cmpi eq, %7, %100 : vector<8x1xi32>
    %102 = vector.shape_cast %101 : vector<8x1xi1> to vector<8x1xi1>
    %103 = vector.broadcast %102 : vector<8x1xi1> to vector<8x32xi1>
    %104 = arith.select %103, %99, %81 : vector<8x32xi1>, vector<8x32xf32>
    %c32 = arith.constant 32 : index
    %c0_28 = arith.constant 0 : index
    %105 = vector.load %arg10[%c32, %c0_28] : memref<64x256xf32, #tpu.memory_space<vmem>>, vector<8x128xf32>
    %cst_29 = arith.constant dense<0.000000e+00> : vector<8x128xf32>
    %106 = tpu.matmul %99, %9, %cst_29 {dimension_numbers = #tpu.dot_dimension_numbers<[1], [0], [0], [1], [0, 0, 1, 1], [], []>} : vector<8x32xf32>, vector<32x128xf32>, vector<8x128xf32> -> vector<8x128xf32>
    %107 = arith.addf %105, %106 : vector<8x128xf32>
    %108 = arith.negf %107 : vector<8x128xf32>
    %109 = math.exp %108 : vector<8x128xf32>
    %cst_30 = arith.constant 1.000000e+00 : f32
    %110 = vector.broadcast %cst_30 : f32 to vector<8x128xf32>
    %111 = arith.addf %110, %109 : vector<8x128xf32>
    %112 = arith.divf %110, %111 : vector<8x128xf32>
    %113 = vector.extract_strided_slice %112 {offsets = [0, 0], sizes = [8, 32], strides = [1, 1]} : vector<8x128xf32> to vector<8x32xf32>
    %114 = vector.extract_strided_slice %112 {offsets = [0, 32], sizes = [8, 32], strides = [1, 1]} : vector<8x128xf32> to vector<8x32xf32>
    %115 = vector.extract_strided_slice %112 {offsets = [0, 96], sizes = [8, 32], strides = [1, 1]} : vector<8x128xf32> to vector<8x32xf32>
    %116 = vector.extract_strided_slice %107 {offsets = [0, 64], sizes = [8, 32], strides = [1, 1]} : vector<8x128xf32> to vector<8x32xf32>
    %117 = math.tanh %116 : vector<8x32xf32>
    %118 = arith.mulf %114, %97 : vector<8x32xf32>
    %119 = arith.mulf %113, %117 : vector<8x32xf32>
    %120 = arith.addf %118, %119 : vector<8x32xf32>
    %121 = math.tanh %120 : vector<8x32xf32>
    %122 = arith.mulf %115, %121 : vector<8x32xf32>
    %c4_i32 = arith.constant 4 : i32
    %123 = vector.broadcast %c4_i32 : i32 to vector<8x1xi32>
    %124 = arith.cmpi eq, %7, %123 : vector<8x1xi32>
    %125 = vector.shape_cast %124 : vector<8x1xi1> to vector<8x1xi1>
    %126 = vector.broadcast %125 : vector<8x1xi1> to vector<8x32xi1>
    %127 = arith.select %126, %122, %104 : vector<8x32xi1>, vector<8x32xf32>
    %c40 = arith.constant 40 : index
    %c0_31 = arith.constant 0 : index
    %128 = vector.load %arg10[%c40, %c0_31] : memref<64x256xf32, #tpu.memory_space<vmem>>, vector<8x128xf32>
    %cst_32 = arith.constant dense<0.000000e+00> : vector<8x128xf32>
    %129 = tpu.matmul %122, %9, %cst_32 {dimension_numbers = #tpu.dot_dimension_numbers<[1], [0], [0], [1], [0, 0, 1, 1], [], []>} : vector<8x32xf32>, vector<32x128xf32>, vector<8x128xf32> -> vector<8x128xf32>
    %130 = arith.addf %128, %129 : vector<8x128xf32>
    %131 = arith.negf %130 : vector<8x128xf32>
    %132 = math.exp %131 : vector<8x128xf32>
    %cst_33 = arith.constant 1.000000e+00 : f32
    %133 = vector.broadcast %cst_33 : f32 to vector<8x128xf32>
    %134 = arith.addf %133, %132 : vector<8x128xf32>
    %135 = arith.divf %133, %134 : vector<8x128xf32>
    %136 = vector.extract_strided_slice %135 {offsets = [0, 0], sizes = [8, 32], strides = [1, 1]} : vector<8x128xf32> to vector<8x32xf32>
    %137 = vector.extract_strided_slice %135 {offsets = [0, 32], sizes = [8, 32], strides = [1, 1]} : vector<8x128xf32> to vector<8x32xf32>
    %138 = vector.extract_strided_slice %135 {offsets = [0, 96], sizes = [8, 32], strides = [1, 1]} : vector<8x128xf32> to vector<8x32xf32>
    %139 = vector.extract_strided_slice %130 {offsets = [0, 64], sizes = [8, 32], strides = [1, 1]} : vector<8x128xf32> to vector<8x32xf32>
    %140 = math.tanh %139 : vector<8x32xf32>
    %141 = arith.mulf %137, %120 : vector<8x32xf32>
    %142 = arith.mulf %136, %140 : vector<8x32xf32>
    %143 = arith.addf %141, %142 : vector<8x32xf32>
    %144 = math.tanh %143 : vector<8x32xf32>
    %145 = arith.mulf %138, %144 : vector<8x32xf32>
    %c5_i32 = arith.constant 5 : i32
    %146 = vector.broadcast %c5_i32 : i32 to vector<8x1xi32>
    %147 = arith.cmpi eq, %7, %146 : vector<8x1xi32>
    %148 = vector.shape_cast %147 : vector<8x1xi1> to vector<8x1xi1>
    %149 = vector.broadcast %148 : vector<8x1xi1> to vector<8x32xi1>
    %150 = arith.select %149, %145, %127 : vector<8x32xi1>, vector<8x32xf32>
    %c48 = arith.constant 48 : index
    %c0_34 = arith.constant 0 : index
    %151 = vector.load %arg10[%c48, %c0_34] : memref<64x256xf32, #tpu.memory_space<vmem>>, vector<8x128xf32>
    %cst_35 = arith.constant dense<0.000000e+00> : vector<8x128xf32>
    %152 = tpu.matmul %145, %9, %cst_35 {dimension_numbers = #tpu.dot_dimension_numbers<[1], [0], [0], [1], [0, 0, 1, 1], [], []>} : vector<8x32xf32>, vector<32x128xf32>, vector<8x128xf32> -> vector<8x128xf32>
    %153 = arith.addf %151, %152 : vector<8x128xf32>
    %154 = arith.negf %153 : vector<8x128xf32>
    %155 = math.exp %154 : vector<8x128xf32>
    %cst_36 = arith.constant 1.000000e+00 : f32
    %156 = vector.broadcast %cst_36 : f32 to vector<8x128xf32>
    %157 = arith.addf %156, %155 : vector<8x128xf32>
    %158 = arith.divf %156, %157 : vector<8x128xf32>
    %159 = vector.extract_strided_slice %158 {offsets = [0, 0], sizes = [8, 32], strides = [1, 1]} : vector<8x128xf32> to vector<8x32xf32>
    %160 = vector.extract_strided_slice %158 {offsets = [0, 32], sizes = [8, 32], strides = [1, 1]} : vector<8x128xf32> to vector<8x32xf32>
    %161 = vector.extract_strided_slice %158 {offsets = [0, 96], sizes = [8, 32], strides = [1, 1]} : vector<8x128xf32> to vector<8x32xf32>
    %162 = vector.extract_strided_slice %153 {offsets = [0, 64], sizes = [8, 32], strides = [1, 1]} : vector<8x128xf32> to vector<8x32xf32>
    %163 = math.tanh %162 : vector<8x32xf32>
    %164 = arith.mulf %160, %143 : vector<8x32xf32>
    %165 = arith.mulf %159, %163 : vector<8x32xf32>
    %166 = arith.addf %164, %165 : vector<8x32xf32>
    %167 = math.tanh %166 : vector<8x32xf32>
    %168 = arith.mulf %161, %167 : vector<8x32xf32>
    %c6_i32 = arith.constant 6 : i32
    %169 = vector.broadcast %c6_i32 : i32 to vector<8x1xi32>
    %170 = arith.cmpi eq, %7, %169 : vector<8x1xi32>
    %171 = vector.shape_cast %170 : vector<8x1xi1> to vector<8x1xi1>
    %172 = vector.broadcast %171 : vector<8x1xi1> to vector<8x32xi1>
    %173 = arith.select %172, %168, %150 : vector<8x32xi1>, vector<8x32xf32>
    %c56 = arith.constant 56 : index
    %c0_37 = arith.constant 0 : index
    %174 = vector.load %arg10[%c56, %c0_37] : memref<64x256xf32, #tpu.memory_space<vmem>>, vector<8x128xf32>
    %cst_38 = arith.constant dense<0.000000e+00> : vector<8x128xf32>
    %175 = tpu.matmul %168, %9, %cst_38 {dimension_numbers = #tpu.dot_dimension_numbers<[1], [0], [0], [1], [0, 0, 1, 1], [], []>} : vector<8x32xf32>, vector<32x128xf32>, vector<8x128xf32> -> vector<8x128xf32>
    %176 = arith.addf %174, %175 : vector<8x128xf32>
    %177 = arith.negf %176 : vector<8x128xf32>
    %178 = math.exp %177 : vector<8x128xf32>
    %cst_39 = arith.constant 1.000000e+00 : f32
    %179 = vector.broadcast %cst_39 : f32 to vector<8x128xf32>
    %180 = arith.addf %179, %178 : vector<8x128xf32>
    %181 = arith.divf %179, %180 : vector<8x128xf32>
    %182 = vector.extract_strided_slice %181 {offsets = [0, 0], sizes = [8, 32], strides = [1, 1]} : vector<8x128xf32> to vector<8x32xf32>
    %183 = vector.extract_strided_slice %181 {offsets = [0, 32], sizes = [8, 32], strides = [1, 1]} : vector<8x128xf32> to vector<8x32xf32>
    %184 = vector.extract_strided_slice %181 {offsets = [0, 96], sizes = [8, 32], strides = [1, 1]} : vector<8x128xf32> to vector<8x32xf32>
    %185 = vector.extract_strided_slice %176 {offsets = [0, 64], sizes = [8, 32], strides = [1, 1]} : vector<8x128xf32> to vector<8x32xf32>
    %186 = math.tanh %185 : vector<8x32xf32>
    %187 = arith.mulf %183, %166 : vector<8x32xf32>
    %188 = arith.mulf %182, %186 : vector<8x32xf32>
    %189 = arith.addf %187, %188 : vector<8x32xf32>
    %190 = math.tanh %189 : vector<8x32xf32>
    %191 = arith.mulf %184, %190 : vector<8x32xf32>
    %c7_i32 = arith.constant 7 : i32
    %192 = vector.broadcast %c7_i32 : i32 to vector<8x1xi32>
    %193 = arith.cmpi eq, %7, %192 : vector<8x1xi32>
    %194 = vector.shape_cast %193 : vector<8x1xi1> to vector<8x1xi1>
    %195 = vector.broadcast %194 : vector<8x1xi1> to vector<8x32xi1>
    %196 = arith.select %195, %191, %173 : vector<8x32xi1>, vector<8x32xf32>
    %c1 = arith.constant 1 : index
    %c0_40 = arith.constant 0 : index
    %c0_41 = arith.constant 0 : index
    %197 = vector.load %arg2[%c1, %c0_40, %c0_41] : memref<2x32x128xf32, #tpu.memory_space<vmem>>, vector<1x32x128xf32>
    %198 = vector.shape_cast %197 : vector<1x32x128xf32> to vector<32x128xf32>
    %cst_42 = arith.constant 0.000000e+00 : f32
    %199 = vector.broadcast %cst_42 : f32 to vector<8x32xf32>
    %cst_43 = arith.constant 0.000000e+00 : f32
    %200 = vector.broadcast %cst_43 : f32 to vector<8x32xf32>
    %cst_44 = arith.constant 0.000000e+00 : f32
    %201 = vector.broadcast %cst_44 : f32 to vector<8x32xf32>
    %c56_45 = arith.constant 56 : index
    %c128 = arith.constant 128 : index
    %202 = vector.load %arg10[%c56_45, %c128] : memref<64x256xf32, #tpu.memory_space<vmem>>, vector<8x128xf32>
    %cst_46 = arith.constant dense<0.000000e+00> : vector<8x128xf32>
    %203 = tpu.matmul %199, %198, %cst_46 {dimension_numbers = #tpu.dot_dimension_numbers<[1], [0], [0], [1], [0, 0, 1, 1], [], []>} : vector<8x32xf32>, vector<32x128xf32>, vector<8x128xf32> -> vector<8x128xf32>
    %204 = arith.addf %202, %203 : vector<8x128xf32>
    %205 = arith.negf %204 : vector<8x128xf32>
    %206 = math.exp %205 : vector<8x128xf32>
    %cst_47 = arith.constant 1.000000e+00 : f32
    %207 = vector.broadcast %cst_47 : f32 to vector<8x128xf32>
    %208 = arith.addf %207, %206 : vector<8x128xf32>
    %209 = arith.divf %207, %208 : vector<8x128xf32>
    %210 = vector.extract_strided_slice %209 {offsets = [0, 0], sizes = [8, 32], strides = [1, 1]} : vector<8x128xf32> to vector<8x32xf32>
    %211 = vector.extract_strided_slice %209 {offsets = [0, 32], sizes = [8, 32], strides = [1, 1]} : vector<8x128xf32> to vector<8x32xf32>
    %212 = vector.extract_strided_slice %209 {offsets = [0, 96], sizes = [8, 32], strides = [1, 1]} : vector<8x128xf32> to vector<8x32xf32>
    %213 = vector.extract_strided_slice %204 {offsets = [0, 64], sizes = [8, 32], strides = [1, 1]} : vector<8x128xf32> to vector<8x32xf32>
    %214 = math.tanh %213 : vector<8x32xf32>
    %215 = arith.mulf %211, %200 : vector<8x32xf32>
    %216 = arith.mulf %210, %214 : vector<8x32xf32>
    %217 = arith.addf %215, %216 : vector<8x32xf32>
    %218 = math.tanh %217 : vector<8x32xf32>
    %219 = arith.mulf %212, %218 : vector<8x32xf32>
    %c7_i32_48 = arith.constant 7 : i32
    %220 = vector.broadcast %c7_i32_48 : i32 to vector<8x1xi32>
    %221 = arith.cmpi eq, %7, %220 : vector<8x1xi32>
    %222 = vector.shape_cast %221 : vector<8x1xi1> to vector<8x1xi1>
    %223 = vector.broadcast %222 : vector<8x1xi1> to vector<8x32xi1>
    %224 = arith.select %223, %219, %201 : vector<8x32xi1>, vector<8x32xf32>
    %c48_49 = arith.constant 48 : index
    %c128_50 = arith.constant 128 : index
    %225 = vector.load %arg10[%c48_49, %c128_50] : memref<64x256xf32, #tpu.memory_space<vmem>>, vector<8x128xf32>
    %cst_51 = arith.constant dense<0.000000e+00> : vector<8x128xf32>
    %226 = tpu.matmul %219, %198, %cst_51 {dimension_numbers = #tpu.dot_dimension_numbers<[1], [0], [0], [1], [0, 0, 1, 1], [], []>} : vector<8x32xf32>, vector<32x128xf32>, vector<8x128xf32> -> vector<8x128xf32>
    %227 = arith.addf %225, %226 : vector<8x128xf32>
    %228 = arith.negf %227 : vector<8x128xf32>
    %229 = math.exp %228 : vector<8x128xf32>
    %cst_52 = arith.constant 1.000000e+00 : f32
    %230 = vector.broadcast %cst_52 : f32 to vector<8x128xf32>
    %231 = arith.addf %230, %229 : vector<8x128xf32>
    %232 = arith.divf %230, %231 : vector<8x128xf32>
    %233 = vector.extract_strided_slice %232 {offsets = [0, 0], sizes = [8, 32], strides = [1, 1]} : vector<8x128xf32> to vector<8x32xf32>
    %234 = vector.extract_strided_slice %232 {offsets = [0, 32], sizes = [8, 32], strides = [1, 1]} : vector<8x128xf32> to vector<8x32xf32>
    %235 = vector.extract_strided_slice %232 {offsets = [0, 96], sizes = [8, 32], strides = [1, 1]} : vector<8x128xf32> to vector<8x32xf32>
    %236 = vector.extract_strided_slice %227 {offsets = [0, 64], sizes = [8, 32], strides = [1, 1]} : vector<8x128xf32> to vector<8x32xf32>
    %237 = math.tanh %236 : vector<8x32xf32>
    %238 = arith.mulf %234, %217 : vector<8x32xf32>
    %239 = arith.mulf %233, %237 : vector<8x32xf32>
    %240 = arith.addf %238, %239 : vector<8x32xf32>
    %241 = math.tanh %240 : vector<8x32xf32>
    %242 = arith.mulf %235, %241 : vector<8x32xf32>
    %c6_i32_53 = arith.constant 6 : i32
    %243 = vector.broadcast %c6_i32_53 : i32 to vector<8x1xi32>
    %244 = arith.cmpi eq, %7, %243 : vector<8x1xi32>
    %245 = vector.shape_cast %244 : vector<8x1xi1> to vector<8x1xi1>
    %246 = vector.broadcast %245 : vector<8x1xi1> to vector<8x32xi1>
    %247 = arith.select %246, %242, %224 : vector<8x32xi1>, vector<8x32xf32>
    %c40_54 = arith.constant 40 : index
    %c128_55 = arith.constant 128 : index
    %248 = vector.load %arg10[%c40_54, %c128_55] : memref<64x256xf32, #tpu.memory_space<vmem>>, vector<8x128xf32>
    %cst_56 = arith.constant dense<0.000000e+00> : vector<8x128xf32>
    %249 = tpu.matmul %242, %198, %cst_56 {dimension_numbers = #tpu.dot_dimension_numbers<[1], [0], [0], [1], [0, 0, 1, 1], [], []>} : vector<8x32xf32>, vector<32x128xf32>, vector<8x128xf32> -> vector<8x128xf32>
    %250 = arith.addf %248, %249 : vector<8x128xf32>
    %251 = arith.negf %250 : vector<8x128xf32>
    %252 = math.exp %251 : vector<8x128xf32>
    %cst_57 = arith.constant 1.000000e+00 : f32
    %253 = vector.broadcast %cst_57 : f32 to vector<8x128xf32>
    %254 = arith.addf %253, %252 : vector<8x128xf32>
    %255 = arith.divf %253, %254 : vector<8x128xf32>
    %256 = vector.extract_strided_slice %255 {offsets = [0, 0], sizes = [8, 32], strides = [1, 1]} : vector<8x128xf32> to vector<8x32xf32>
    %257 = vector.extract_strided_slice %255 {offsets = [0, 32], sizes = [8, 32], strides = [1, 1]} : vector<8x128xf32> to vector<8x32xf32>
    %258 = vector.extract_strided_slice %255 {offsets = [0, 96], sizes = [8, 32], strides = [1, 1]} : vector<8x128xf32> to vector<8x32xf32>
    %259 = vector.extract_strided_slice %250 {offsets = [0, 64], sizes = [8, 32], strides = [1, 1]} : vector<8x128xf32> to vector<8x32xf32>
    %260 = math.tanh %259 : vector<8x32xf32>
    %261 = arith.mulf %257, %240 : vector<8x32xf32>
    %262 = arith.mulf %256, %260 : vector<8x32xf32>
    %263 = arith.addf %261, %262 : vector<8x32xf32>
    %264 = math.tanh %263 : vector<8x32xf32>
    %265 = arith.mulf %258, %264 : vector<8x32xf32>
    %c5_i32_58 = arith.constant 5 : i32
    %266 = vector.broadcast %c5_i32_58 : i32 to vector<8x1xi32>
    %267 = arith.cmpi eq, %7, %266 : vector<8x1xi32>
    %268 = vector.shape_cast %267 : vector<8x1xi1> to vector<8x1xi1>
    %269 = vector.broadcast %268 : vector<8x1xi1> to vector<8x32xi1>
    %270 = arith.select %269, %265, %247 : vector<8x32xi1>, vector<8x32xf32>
    %c32_59 = arith.constant 32 : index
    %c128_60 = arith.constant 128 : index
    %271 = vector.load %arg10[%c32_59, %c128_60] : memref<64x256xf32, #tpu.memory_space<vmem>>, vector<8x128xf32>
    %cst_61 = arith.constant dense<0.000000e+00> : vector<8x128xf32>
    %272 = tpu.matmul %265, %198, %cst_61 {dimension_numbers = #tpu.dot_dimension_numbers<[1], [0], [0], [1], [0, 0, 1, 1], [], []>} : vector<8x32xf32>, vector<32x128xf32>, vector<8x128xf32> -> vector<8x128xf32>
    %273 = arith.addf %271, %272 : vector<8x128xf32>
    %274 = arith.negf %273 : vector<8x128xf32>
    %275 = math.exp %274 : vector<8x128xf32>
    %cst_62 = arith.constant 1.000000e+00 : f32
    %276 = vector.broadcast %cst_62 : f32 to vector<8x128xf32>
    %277 = arith.addf %276, %275 : vector<8x128xf32>
    %278 = arith.divf %276, %277 : vector<8x128xf32>
    %279 = vector.extract_strided_slice %278 {offsets = [0, 0], sizes = [8, 32], strides = [1, 1]} : vector<8x128xf32> to vector<8x32xf32>
    %280 = vector.extract_strided_slice %278 {offsets = [0, 32], sizes = [8, 32], strides = [1, 1]} : vector<8x128xf32> to vector<8x32xf32>
    %281 = vector.extract_strided_slice %278 {offsets = [0, 96], sizes = [8, 32], strides = [1, 1]} : vector<8x128xf32> to vector<8x32xf32>
    %282 = vector.extract_strided_slice %273 {offsets = [0, 64], sizes = [8, 32], strides = [1, 1]} : vector<8x128xf32> to vector<8x32xf32>
    %283 = math.tanh %282 : vector<8x32xf32>
    %284 = arith.mulf %280, %263 : vector<8x32xf32>
    %285 = arith.mulf %279, %283 : vector<8x32xf32>
    %286 = arith.addf %284, %285 : vector<8x32xf32>
    %287 = math.tanh %286 : vector<8x32xf32>
    %288 = arith.mulf %281, %287 : vector<8x32xf32>
    %c4_i32_63 = arith.constant 4 : i32
    %289 = vector.broadcast %c4_i32_63 : i32 to vector<8x1xi32>
    %290 = arith.cmpi eq, %7, %289 : vector<8x1xi32>
    %291 = vector.shape_cast %290 : vector<8x1xi1> to vector<8x1xi1>
    %292 = vector.broadcast %291 : vector<8x1xi1> to vector<8x32xi1>
    %293 = arith.select %292, %288, %270 : vector<8x32xi1>, vector<8x32xf32>
    %c24_64 = arith.constant 24 : index
    %c128_65 = arith.constant 128 : index
    %294 = vector.load %arg10[%c24_64, %c128_65] : memref<64x256xf32, #tpu.memory_space<vmem>>, vector<8x128xf32>
    %cst_66 = arith.constant dense<0.000000e+00> : vector<8x128xf32>
    %295 = tpu.matmul %288, %198, %cst_66 {dimension_numbers = #tpu.dot_dimension_numbers<[1], [0], [0], [1], [0, 0, 1, 1], [], []>} : vector<8x32xf32>, vector<32x128xf32>, vector<8x128xf32> -> vector<8x128xf32>
    %296 = arith.addf %294, %295 : vector<8x128xf32>
    %297 = arith.negf %296 : vector<8x128xf32>
    %298 = math.exp %297 : vector<8x128xf32>
    %cst_67 = arith.constant 1.000000e+00 : f32
    %299 = vector.broadcast %cst_67 : f32 to vector<8x128xf32>
    %300 = arith.addf %299, %298 : vector<8x128xf32>
    %301 = arith.divf %299, %300 : vector<8x128xf32>
    %302 = vector.extract_strided_slice %301 {offsets = [0, 0], sizes = [8, 32], strides = [1, 1]} : vector<8x128xf32> to vector<8x32xf32>
    %303 = vector.extract_strided_slice %301 {offsets = [0, 32], sizes = [8, 32], strides = [1, 1]} : vector<8x128xf32> to vector<8x32xf32>
    %304 = vector.extract_strided_slice %301 {offsets = [0, 96], sizes = [8, 32], strides = [1, 1]} : vector<8x128xf32> to vector<8x32xf32>
    %305 = vector.extract_strided_slice %296 {offsets = [0, 64], sizes = [8, 32], strides = [1, 1]} : vector<8x128xf32> to vector<8x32xf32>
    %306 = math.tanh %305 : vector<8x32xf32>
    %307 = arith.mulf %303, %286 : vector<8x32xf32>
    %308 = arith.mulf %302, %306 : vector<8x32xf32>
    %309 = arith.addf %307, %308 : vector<8x32xf32>
    %310 = math.tanh %309 : vector<8x32xf32>
    %311 = arith.mulf %304, %310 : vector<8x32xf32>
    %c3_i32_68 = arith.constant 3 : i32
    %312 = vector.broadcast %c3_i32_68 : i32 to vector<8x1xi32>
    %313 = arith.cmpi eq, %7, %312 : vector<8x1xi32>
    %314 = vector.shape_cast %313 : vector<8x1xi1> to vector<8x1xi1>
    %315 = vector.broadcast %314 : vector<8x1xi1> to vector<8x32xi1>
    %316 = arith.select %315, %311, %293 : vector<8x32xi1>, vector<8x32xf32>
    %c16_69 = arith.constant 16 : index
    %c128_70 = arith.constant 128 : index
    %317 = vector.load %arg10[%c16_69, %c128_70] : memref<64x256xf32, #tpu.memory_space<vmem>>, vector<8x128xf32>
    %cst_71 = arith.constant dense<0.000000e+00> : vector<8x128xf32>
    %318 = tpu.matmul %311, %198, %cst_71 {dimension_numbers = #tpu.dot_dimension_numbers<[1], [0], [0], [1], [0, 0, 1, 1], [], []>} : vector<8x32xf32>, vector<32x128xf32>, vector<8x128xf32> -> vector<8x128xf32>
    %319 = arith.addf %317, %318 : vector<8x128xf32>
    %320 = arith.negf %319 : vector<8x128xf32>
    %321 = math.exp %320 : vector<8x128xf32>
    %cst_72 = arith.constant 1.000000e+00 : f32
    %322 = vector.broadcast %cst_72 : f32 to vector<8x128xf32>
    %323 = arith.addf %322, %321 : vector<8x128xf32>
    %324 = arith.divf %322, %323 : vector<8x128xf32>
    %325 = vector.extract_strided_slice %324 {offsets = [0, 0], sizes = [8, 32], strides = [1, 1]} : vector<8x128xf32> to vector<8x32xf32>
    %326 = vector.extract_strided_slice %324 {offsets = [0, 32], sizes = [8, 32], strides = [1, 1]} : vector<8x128xf32> to vector<8x32xf32>
    %327 = vector.extract_strided_slice %324 {offsets = [0, 96], sizes = [8, 32], strides = [1, 1]} : vector<8x128xf32> to vector<8x32xf32>
    %328 = vector.extract_strided_slice %319 {offsets = [0, 64], sizes = [8, 32], strides = [1, 1]} : vector<8x128xf32> to vector<8x32xf32>
    %329 = math.tanh %328 : vector<8x32xf32>
    %330 = arith.mulf %326, %309 : vector<8x32xf32>
    %331 = arith.mulf %325, %329 : vector<8x32xf32>
    %332 = arith.addf %330, %331 : vector<8x32xf32>
    %333 = math.tanh %332 : vector<8x32xf32>
    %334 = arith.mulf %327, %333 : vector<8x32xf32>
    %c2_i32_73 = arith.constant 2 : i32
    %335 = vector.broadcast %c2_i32_73 : i32 to vector<8x1xi32>
    %336 = arith.cmpi eq, %7, %335 : vector<8x1xi32>
    %337 = vector.shape_cast %336 : vector<8x1xi1> to vector<8x1xi1>
    %338 = vector.broadcast %337 : vector<8x1xi1> to vector<8x32xi1>
    %339 = arith.select %338, %334, %316 : vector<8x32xi1>, vector<8x32xf32>
    %c8_74 = arith.constant 8 : index
    %c128_75 = arith.constant 128 : index
    %340 = vector.load %arg10[%c8_74, %c128_75] : memref<64x256xf32, #tpu.memory_space<vmem>>, vector<8x128xf32>
    %cst_76 = arith.constant dense<0.000000e+00> : vector<8x128xf32>
    %341 = tpu.matmul %334, %198, %cst_76 {dimension_numbers = #tpu.dot_dimension_numbers<[1], [0], [0], [1], [0, 0, 1, 1], [], []>} : vector<8x32xf32>, vector<32x128xf32>, vector<8x128xf32> -> vector<8x128xf32>
    %342 = arith.addf %340, %341 : vector<8x128xf32>
    %343 = arith.negf %342 : vector<8x128xf32>
    %344 = math.exp %343 : vector<8x128xf32>
    %cst_77 = arith.constant 1.000000e+00 : f32
    %345 = vector.broadcast %cst_77 : f32 to vector<8x128xf32>
    %346 = arith.addf %345, %344 : vector<8x128xf32>
    %347 = arith.divf %345, %346 : vector<8x128xf32>
    %348 = vector.extract_strided_slice %347 {offsets = [0, 0], sizes = [8, 32], strides = [1, 1]} : vector<8x128xf32> to vector<8x32xf32>
    %349 = vector.extract_strided_slice %347 {offsets = [0, 32], sizes = [8, 32], strides = [1, 1]} : vector<8x128xf32> to vector<8x32xf32>
    %350 = vector.extract_strided_slice %347 {offsets = [0, 96], sizes = [8, 32], strides = [1, 1]} : vector<8x128xf32> to vector<8x32xf32>
    %351 = vector.extract_strided_slice %342 {offsets = [0, 64], sizes = [8, 32], strides = [1, 1]} : vector<8x128xf32> to vector<8x32xf32>
    %352 = math.tanh %351 : vector<8x32xf32>
    %353 = arith.mulf %349, %332 : vector<8x32xf32>
    %354 = arith.mulf %348, %352 : vector<8x32xf32>
    %355 = arith.addf %353, %354 : vector<8x32xf32>
    %356 = math.tanh %355 : vector<8x32xf32>
    %357 = arith.mulf %350, %356 : vector<8x32xf32>
    %c1_i32_78 = arith.constant 1 : i32
    %358 = vector.broadcast %c1_i32_78 : i32 to vector<8x1xi32>
    %359 = arith.cmpi eq, %7, %358 : vector<8x1xi32>
    %360 = vector.shape_cast %359 : vector<8x1xi1> to vector<8x1xi1>
    %361 = vector.broadcast %360 : vector<8x1xi1> to vector<8x32xi1>
    %362 = arith.select %361, %357, %339 : vector<8x32xi1>, vector<8x32xf32>
    %c0_79 = arith.constant 0 : index
    %c128_80 = arith.constant 128 : index
    %363 = vector.load %arg10[%c0_79, %c128_80] : memref<64x256xf32, #tpu.memory_space<vmem>>, vector<8x128xf32>
    %cst_81 = arith.constant dense<0.000000e+00> : vector<8x128xf32>
    %364 = tpu.matmul %357, %198, %cst_81 {dimension_numbers = #tpu.dot_dimension_numbers<[1], [0], [0], [1], [0, 0, 1, 1], [], []>} : vector<8x32xf32>, vector<32x128xf32>, vector<8x128xf32> -> vector<8x128xf32>
    %365 = arith.addf %363, %364 : vector<8x128xf32>
    %366 = arith.negf %365 : vector<8x128xf32>
    %367 = math.exp %366 : vector<8x128xf32>
    %cst_82 = arith.constant 1.000000e+00 : f32
    %368 = vector.broadcast %cst_82 : f32 to vector<8x128xf32>
    %369 = arith.addf %368, %367 : vector<8x128xf32>
    %370 = arith.divf %368, %369 : vector<8x128xf32>
    %371 = vector.extract_strided_slice %370 {offsets = [0, 0], sizes = [8, 32], strides = [1, 1]} : vector<8x128xf32> to vector<8x32xf32>
    %372 = vector.extract_strided_slice %370 {offsets = [0, 32], sizes = [8, 32], strides = [1, 1]} : vector<8x128xf32> to vector<8x32xf32>
    %373 = vector.extract_strided_slice %370 {offsets = [0, 96], sizes = [8, 32], strides = [1, 1]} : vector<8x128xf32> to vector<8x32xf32>
    %374 = vector.extract_strided_slice %365 {offsets = [0, 64], sizes = [8, 32], strides = [1, 1]} : vector<8x128xf32> to vector<8x32xf32>
    %375 = math.tanh %374 : vector<8x32xf32>
    %376 = arith.mulf %372, %355 : vector<8x32xf32>
    %377 = arith.mulf %371, %375 : vector<8x32xf32>
    %378 = arith.addf %376, %377 : vector<8x32xf32>
    %379 = math.tanh %378 : vector<8x32xf32>
    %380 = arith.mulf %373, %379 : vector<8x32xf32>
    %c0_i32_83 = arith.constant 0 : i32
    %381 = vector.broadcast %c0_i32_83 : i32 to vector<8x1xi32>
    %382 = arith.cmpi eq, %7, %381 : vector<8x1xi32>
    %383 = vector.shape_cast %382 : vector<8x1xi1> to vector<8x1xi1>
    %384 = vector.broadcast %383 : vector<8x1xi1> to vector<8x32xi1>
    %385 = arith.select %384, %380, %362 : vector<8x32xi1>, vector<8x32xf32>
    %386 = tpu.concatenate %196, %385 in 1 : vector<8x32xf32>, vector<8x32xf32> -> vector<8x64xf32>
    %c0_84 = arith.constant 0 : index
    %c0_85 = arith.constant 0 : index
    %387 = vector.load %arg5[%c0_84, %c0_85] : memref<64x32xf32, #tpu.memory_space<vmem>>, vector<64x32xf32>
    %cst_86 = arith.constant dense<0.000000e+00> : vector<8x32xf32>
    %388 = tpu.matmul %386, %387, %cst_86 {dimension_numbers = #tpu.dot_dimension_numbers<[1], [0], [0], [1], [0, 0, 1, 1], [], []>} : vector<8x64xf32>, vector<64x32xf32>, vector<8x32xf32> -> vector<8x32xf32>
    %c0_87 = arith.constant 0 : index
    %c0_88 = arith.constant 0 : index
    %389 = vector.load %arg6[%c0_87, %c0_88] : memref<1x32xf32, #tpu.memory_space<vmem>>, vector<1x32xf32>
    %390 = vector.broadcast %389 : vector<1x32xf32> to vector<8x32xf32>
    %391 = arith.addf %388, %390 : vector<8x32xf32>
    %cst_89 = arith.constant 0.000000e+00 : f32
    %392 = vector.broadcast %cst_89 : f32 to vector<8x32xf32>
    %393 = arith.maximumf %391, %392 : vector<8x32xf32>
    %c0_90 = arith.constant 0 : index
    %c0_91 = arith.constant 0 : index
    %394 = vector.load %arg7[%c0_90, %c0_91] : memref<32x32xf32, #tpu.memory_space<vmem>>, vector<32x32xf32>
    %cst_92 = arith.constant dense<0.000000e+00> : vector<8x32xf32>
    %395 = tpu.matmul %393, %394, %cst_92 {dimension_numbers = #tpu.dot_dimension_numbers<[1], [0], [0], [1], [0, 0, 1, 1], [], []>} : vector<8x32xf32>, vector<32x32xf32>, vector<8x32xf32> -> vector<8x32xf32>
    %c0_93 = arith.constant 0 : index
    %c0_94 = arith.constant 0 : index
    %396 = vector.load %arg8[%c0_93, %c0_94] : memref<1x32xf32, #tpu.memory_space<vmem>>, vector<1x32xf32>
    %397 = vector.broadcast %396 : vector<1x32xf32> to vector<8x32xf32>
    %398 = arith.addf %395, %397 : vector<8x32xf32>
    %c0_95 = arith.constant 0 : index
    %c0_96 = arith.constant 0 : index
    %399 = vector.load %arg9[%c0_95, %c0_96] : memref<8x32xf32, #tpu.memory_space<vmem>>, vector<8x32xf32>
    tpu.vector_store %arg9[%c0_95, %c0_96], %398 {strides = array<i32>} : memref<8x32xf32, #tpu.memory_space<vmem>>, vector<8x32xf32>,
    return
  }
}

</mosaic_0001>

<llo_original>
// kernel: lstm_simclr_forward.3
$region0: #{lstm_simclr_forward.3}
  #allocation0 [shape = 'u32[]', space=smem, size = 0x4, offset = 0x4, fixed_abs, tag = 'smem constant byte address 0x4 - core index']
  #allocation1 [shape = 'u32[144,128]{1,0:T(1,128)}', space=vmem, size = 0x12000, scoped, tag = 'internal scratch']
  %s0 = inlined_call_operand.vmem [shape: s32[64,1], index: 0, kind: input, shape index: {}]
  %s1 = inlined_call_operand.vmem [shape: f32[32,32], index: 1, kind: input, shape index: {}]
  %s2 = inlined_call_operand.vmem [shape: f32[64,32], index: 2, kind: output, shape index: {}]
  %s3 = sld [smem:[#allocation0]]
  $region18: #{lstm_simclr_forward.3} parent=0
    _
  %s5 = ssub.s32 1, %s3
  %s6 = scalar_select 0, %s5, %s3
  // Predicated region
  $region2: #{lstm_simclr_forward.3} parent=0 // pred_check
    _
  $region3: #{lstm_simclr_forward.3} parent=0 // pred_check_branch
    %8 = sbr.rel (0) target = $region5
  $region4: #{lstm_simclr_forward.3} parent=0 // pred_region
    _
  $region5: #{lstm_simclr_forward.3} parent=0 // pred_fallthru
    _
  // Predicated region
  $region6: #{lstm_simclr_forward.3} parent=0 // pred_check
    _
  $region7: #{lstm_simclr_forward.3} parent=0 // pred_check_branch
    %10 = sbr.rel (0) target = $region9
  $region8: #{lstm_simclr_forward.3} parent=0 // pred_region
    _
  $region9: #{lstm_simclr_forward.3} parent=0 // pred_fallthru
    _
  %v11 = vlaneseq
  %v12 = vand.u32 %v11, 127
  %v13 = vld [vmem:[%s0] sm:$0xff]
  %v14 = vld [vmem:[%s0 + $0x8] sm:$0xff]
  %v15 = vld [vmem:[%s0 + $0x10] sm:$0xff]
  %v16 = vld [vmem:[%s0 + $0x18] sm:$0xff]
  %v17 = vld [vmem:[%s0 + $0x20] sm:$0xff]
  %v18 = vld [vmem:[%s0 + $0x28] sm:$0xff]
  %v19 = vld [vmem:[%s0 + $0x30] sm:$0xff]
  %v20 = vld [vmem:[%s0 + $0x38] sm:$0xff]
  %21 = vset.pattern.permute.xlu0 0
  %22 = vperm.xlu0 %21, %v13
  %v23 = vpop.permute.xlu0 %22
  %24 = vset.pattern.permute.xlu0 0
  %25 = vperm.xlu0 %24, %v14
  %v26 = vpop.permute.xlu0 %25
  %27 = vset.pattern.permute.xlu0 0
  %28 = vperm.xlu0 %27, %v15
  %v29 = vpop.permute.xlu0 %28
  %30 = vset.pattern.permute.xlu0 0
  %31 = vperm.xlu0 %30, %v16
  %v32 = vpop.permute.xlu0 %31
  %33 = vset.pattern.permute.xlu0 0
  %34 = vperm.xlu0 %33, %v17
  %v35 = vpop.permute.xlu0 %34
  %36 = vset.pattern.permute.xlu0 0
  %37 = vperm.xlu0 %36, %v18
  %v38 = vpop.permute.xlu0 %37
  %39 = vset.pattern.permute.xlu0 0
  %40 = vperm.xlu0 %39, %v19
  %v41 = vpop.permute.xlu0 %40
  %42 = vset.pattern.permute.xlu0 0
  %43 = vperm.xlu0 %42, %v20
  %v44 = vpop.permute.xlu0 %43
  %vm45 = vcmp.eq.s32.totalorder %v23, %v12
  %vm46 = vcmp.eq.s32.totalorder %v26, %v12
  %vm47 = vcmp.eq.s32.totalorder %v29, %v12
  %vm48 = vcmp.eq.s32.totalorder %v32, %v12
  %vm49 = vcmp.eq.s32.totalorder %v35, %v12
  %vm50 = vcmp.eq.s32.totalorder %v38, %v12
  %vm51 = vcmp.eq.s32.totalorder %v41, %v12
  %vm52 = vcmp.eq.s32.totalorder %v44, %v12
  %v53 = vsel %vm45, 1, 0
  %v54 = vsel %vm46, 1, 0
  %v55 = vsel %vm47, 1, 0
  %v56 = vsel %vm48, 1, 0
  %v57 = vsel %vm49, 1, 0
  %v58 = vsel %vm50, 1, 0
  %v59 = vsel %vm51, 1, 0
  %v60 = vsel %vm52, 1, 0
  %v61 = vcvt.s32.f32 %v53
  %v62 = vcvt.s32.f32 %v54
  %v63 = vcvt.s32.f32 %v55
  %v64 = vcvt.s32.f32 %v56
  %v65 = vcvt.s32.f32 %v57
  %v66 = vcvt.s32.f32 %v58
  %v67 = vcvt.s32.f32 %v59
  %v68 = vcvt.s32.f32 %v60
  %v69 = vld [vmem:[%s1] sm:$0xff]
  %v70 = vld [vmem:[%s1 + $0x8] sm:$0xff]
  %v71 = vld [vmem:[%s1 + $0x10] sm:$0xff]
  %v72 = vld [vmem:[%s1 + $0x18] sm:$0xff]
  %vm73 = vcmask 261120
  %v75 = vsel %vm73, %v61, 0
  %v78 = vsel %vm73, %v62, 0
  %v81 = vsel %vm73, %v63, 0
  %v84 = vsel %vm73, %v64, 0
  %v87 = vsel %vm73, %v65, 0
  %v90 = vsel %vm73, %v66, 0
  %v93 = vsel %vm73, %v67, 0
  %v96 = vsel %vm73, %v68, 0
  %98 = vmatprep.subr.mxu0 0.0
  %99 = vmatpush1.msra.mxu0 %v69
  %100 = vmatprep.subr.mxu0 0.0
  %101 = vmatpush1.msra.mxu0 %v70
  %102 = vmatprep.subr.mxu0 0.0
  %103 = vmatpush1.msra.mxu0 %v71
  %104 = vmatprep.subr.mxu0 0.0
  %105 = vmatpush1.msra.mxu0 %v72
  %106 = vmatprep.subr.mxu0 0.0
  %107 = vmatpush1.msra.mxu0 0.0
  %108 = vmatprep.subr.mxu0 0.0
  %109 = vmatpush1.msra.mxu0 0.0
  %110 = vmatprep.subr.mxu0 0.0
  %111 = vmatpush1.msra.mxu0 0.0
  %112 = vmatprep.subr.mxu0 0.0
  %113 = vmatpush1.msra.mxu0 0.0
  %114 = vmatprep.subr.mxu0 0.0
  %115 = vmatpush1.msra.mxu0 0.0
  %116 = vmatprep.subr.mxu0 0.0
  %117 = vmatpush1.msra.mxu0 0.0
  %118 = vmatprep.subr.mxu0 0.0
  %119 = vmatpush1.msra.mxu0 0.0
  %120 = vmatprep.subr.mxu0 0.0
  %121 = vmatpush1.msra.mxu0 0.0
  %122 = vmatprep.subr.mxu0 0.0
  %123 = vmatpush1.msra.mxu0 0.0
  %124 = vmatprep.subr.mxu0 0.0
  %125 = vmatpush1.msra.mxu0 0.0
  %126 = vmatprep.subr.mxu0 0.0
  %127 = vmatpush1.msra.mxu0 0.0
  %128 = vmatprep.subr.mxu0 0.0
  %129 = vmatpush1.msra.mxu0 0.0
  %130 = vmatprep.subr.mxu0 0.0
  %131 = vmatpush1.msra.mxu0 0.0
  %132 = vmatprep.subr.mxu0 0.0
  %133 = vmatpush1.msra.mxu0 0.0
  %134 = vmatprep.subr.mxu0 0.0
  %135 = vmatpush1.msra.mxu0 0.0
  %136 = vmatprep.subr.mxu0 0.0
  %137 = vmatpush1.msra.mxu0 0.0
  %138 = vmatprep.subr.mxu0 0.0
  %139 = vmatpush1.msra.mxu0 0.0
  %140 = vmatprep.subr.mxu0 0.0
  %141 = vmatpush1.msra.mxu0 0.0
  %142 = vmatprep.subr.mxu0 0.0
  %143 = vmatpush1.msra.mxu0 0.0
  %144 = vmatprep.subr.mxu0 0.0
  %145 = vmatpush1.msra.mxu0 0.0
  %146 = vmatprep.subr.mxu0 0.0
  %147 = vmatpush1.msra.mxu0 0.0
  %148 = vmatprep.subr.mxu0 0.0
  %149 = vmatpush1.msra.mxu0 0.0
  %150 = vmatprep.subr.mxu0 0.0
  %151 = vmatpush1.msra.mxu0 0.0
  %152 = vmatprep.subr.mxu0 0.0
  %153 = vmatpush1.msra.mxu0 0.0
  %154 = vmatprep.subr.mxu0 0.0
  %155 = vmatpush1.msra.mxu0 0.0
  %156 = vmatprep.subr.mxu0 0.0
  %157 = vmatpush1.msra.mxu0 0.0
  %158 = vmatprep.subr.mxu0 0.0
  %159 = vmatpush1.msra.mxu0 0.0
  %160 = vmatprep.subr.mxu0 0.0
  %161 = vmatpush1.msra.mxu0 0.0
  %162 = vmatprep.mubr.f32.mxu0 0.0
  %163 = vmatmul.mubr.f32.gmra.mrb[0].mxu0 %v75
  %v164 = vpop.f32.mrb[0].mxu0
  %v165 = vadd.f32 0.0, %v164
  %v166 = vpop.f32.mrb[0].mxu0
  %167 = vmatprep.mubr.f32.mxu0 0.0
  %168 = vmatmul.mubr.f32.gmra.mrb[0].mxu0 %v78
  %v169 = vpop.f32.mrb[0].mxu0
  %v170 = vadd.f32 0.0, %v169
  %v171 = vpop.f32.mrb[0].mxu0
  %172 = vmatprep.mubr.f32.mxu0 0.0
  %173 = vmatmul.mubr.f32.gmra.mrb[0].mxu0 %v81
  %v174 = vpop.f32.mrb[0].mxu0
  %v175 = vadd.f32 0.0, %v174
  %v176 = vpop.f32.mrb[0].mxu0
  %177 = vmatprep.mubr.f32.mxu0 0.0
  %178 = vmatmul.mubr.f32.gmra.mrb[0].mxu0 %v84
  %v179 = vpop.f32.mrb[0].mxu0
  %v180 = vadd.f32 0.0, %v179
  %v181 = vpop.f32.mrb[0].mxu0
  %182 = vmatprep.mubr.f32.mxu0 0.0
  %183 = vmatmul.mubr.f32.gmra.mrb[0].mxu0 %v87
  %v184 = vpop.f32.mrb[0].mxu0
  %v185 = vadd.f32 0.0, %v184
  %v186 = vpop.f32.mrb[0].mxu0
  %187 = vmatprep.mubr.f32.mxu0 0.0
  %188 = vmatmul.mubr.f32.gmra.mrb[0].mxu0 %v90
  %v189 = vpop.f32.mrb[0].mxu0
  %v190 = vadd.f32 0.0, %v189
  %v191 = vpop.f32.mrb[0].mxu0
  %192 = vmatprep.mubr.f32.mxu0 0.0
  %193 = vmatmul.mubr.f32.gmra.mrb[0].mxu0 %v93
  %v194 = vpop.f32.mrb[0].mxu0
  %v195 = vadd.f32 0.0, %v194
  %v196 = vpop.f32.mrb[0].mxu0
  %197 = vmatprep.mubr.f32.mxu0 0.0
  %198 = vmatmul.mubr.f32.gmra.mrb[0].mxu0 %v96
  %v199 = vpop.f32.mrb[0].mxu0
  %v200 = vadd.f32 0.0, %v199
  %v201 = vpop.f32.mrb[0].mxu0
  %202 = vdwg.mxu0
  %203 = vst.msk [vmem:[%s2] sm:$0xff] %vm73, %v165
  %204 = vst.msk [vmem:[%s2 + $0x8] sm:$0xff] %vm73, %v170
  %205 = vst.msk [vmem:[%s2 + $0x10] sm:$0xff] %vm73, %v175
  %206 = vst.msk [vmem:[%s2 + $0x18] sm:$0xff] %vm73, %v180
  %207 = vst.msk [vmem:[%s2 + $0x20] sm:$0xff] %vm73, %v185
  %208 = vst.msk [vmem:[%s2 + $0x28] sm:$0xff] %vm73, %v190
  %209 = vst.msk [vmem:[%s2 + $0x30] sm:$0xff] %vm73, %v195
  %210 = vst.msk [vmem:[%s2 + $0x38] sm:$0xff] %vm73, %v200
  // Predicated region
  $region10: #{lstm_simclr_forward.3} parent=0 // pred_check
    _
  $region11: #{lstm_simclr_forward.3} parent=0 // pred_check_branch
    %212 = sbr.rel (0) target = $region13
  $region12: #{lstm_simclr_forward.3} parent=0 // pred_region
    _
  $region13: #{lstm_simclr_forward.3} parent=0 // pred_fallthru
    _
  // Predicated region
  $region14: #{lstm_simclr_forward.3} parent=0 // pred_check
    _
  $region15: #{lstm_simclr_forward.3} parent=0 // pred_check_branch
    %214 = sbr.rel (0) target = $region17
  $region16: #{lstm_simclr_forward.3} parent=0 // pred_region
    _
  $region17: #{lstm_simclr_forward.3} parent=0 // pred_fallthru
    _

// kernel: lstm_simclr_forward.4
$region0: #{lstm_simclr_forward.4}
  #allocation0 [shape = 'u32[]', space=smem, size = 0x4, offset = 0x4, fixed_abs, tag = 'smem constant byte address 0x4 - core index']
  #allocation1 [shape = 'u32[144,128]{1,0:T(1,128)}', space=vmem, size = 0x12000, scoped, tag = 'internal scratch']
  #allocation2 [shape = 'f32[64,256]{1,0:T(8,128)}', space=vmem, size = 0x10000, scoped, tag = 'scratch operand']
  %s0 = inlined_call_operand.vmem [shape: f32[64,32], index: 0, kind: input, shape index: {}]
  %s1 = inlined_call_operand.vmem [shape: f32[32,256], index: 1, kind: input, shape index: {}]
  %s2 = inlined_call_operand.vmem [shape: f32[2,32,128], index: 2, kind: input, shape index: {}]
  %s3 = inlined_call_operand.vmem [shape: f32[1,256], index: 3, kind: input, shape index: {}]
  %s4 = inlined_call_operand.vmem [shape: f32[64,64], index: 4, kind: output, shape index: {}]
  %s5 = sld [smem:[#allocation0]]
  $region26: #{lstm_simclr_forward.4} parent=0
    _
  %s7 = ssub.s32 1, %s5
  %s8 = scalar_select 0, %s7, %s5
  // Predicated region
  $region2: #{lstm_simclr_forward.4} parent=0 // pred_check
    _
  $region3: #{lstm_simclr_forward.4} parent=0 // pred_check_branch
    %10 = sbr.rel (0) target = $region5
  $region4: #{lstm_simclr_forward.4} parent=0 // pred_region
    _
  $region5: #{lstm_simclr_forward.4} parent=0 // pred_fallthru
    _
  // Predicated region
  $region6: #{lstm_simclr_forward.4} parent=0 // pred_check
    _
  $region7: #{lstm_simclr_forward.4} parent=0 // pred_check_branch
    %12 = sbr.rel (0) target = $region9
  $region8: #{lstm_simclr_forward.4} parent=0 // pred_region
    _
  $region9: #{lstm_simclr_forward.4} parent=0 // pred_fallthru
    _
  // Predicated region
  $region10: #{lstm_simclr_forward.4} parent=0 // pred_check
    _
  $region11: #{lstm_simclr_forward.4} parent=0 // pred_check_branch
    %14 = sbr.rel (0) target = $region13
  $region12: #{lstm_simclr_forward.4} parent=0 // pred_region
    _
  $region13: #{lstm_simclr_forward.4} parent=0 // pred_fallthru
    _
  // Predicated region
  $region14: #{lstm_simclr_forward.4} parent=0 // pred_check
    _
  $region15: #{lstm_simclr_forward.4} parent=0 // pred_check_branch
    %16 = sbr.rel (0) target = $region17
  $region16: #{lstm_simclr_forward.4} parent=0 // pred_region
    _
  $region17: #{lstm_simclr_forward.4} parent=0 // pred_fallthru
    _
  %v17 = vld [vmem:[%s0] sm:$0xff]
  %v18 = vld [vmem:[%s0 + $0x8] sm:$0xff]
  %v19 = vld [vmem:[%s0 + $0x10] sm:$0xff]
  %v20 = vld [vmem:[%s0 + $0x18] sm:$0xff]
  %v21 = vld [vmem:[%s0 + $0x20] sm:$0xff]
  %v22 = vld [vmem:[%s0 + $0x28] sm:$0xff]
  %v23 = vld [vmem:[%s0 + $0x30] sm:$0xff]
  %v24 = vld [vmem:[%s0 + $0x38] sm:$0xff]
  %v25 = vld [vmem:[%s1] sm:$0xff]
  %v26 = vld [vmem:[%s1 + $0x8] sm:$0xff]
  %v27 = vld [vmem:[%s1 + $0x10] sm:$0xff]
  %v28 = vld [vmem:[%s1 + $0x18] sm:$0xff]
  %v29 = vld [vmem:[%s1 + $0x20] sm:$0xff]
  %v30 = vld [vmem:[%s1 + $0x28] sm:$0xff]
  %v31 = vld [vmem:[%s1 + $0x30] sm:$0xff]
  %v32 = vld [vmem:[%s1 + $0x38] sm:$0xff]
  %v33 = vld [vmem:[%s3] sm:$0x3]
  %v35 = vlaneseq
  %v36 = vshrl.u32 %v35, 7
  %v37 = vsub.s32 0, %v36
  %v38 = vrot.slane %v33, %v37
  %v39 = vlaneseq
  %v40 = vshrl.u32 %v39, 7
  %v41 = vsub.s32 1, %v40
  %v42 = vrot.slane %v33, %v41
  %vm45 = vcmask 261120
  %v47 = vsel %vm45, %v17, 0
  %v50 = vsel %vm45, %v18, 0
  %v53 = vsel %vm45, %v19, 0
  %v56 = vsel %vm45, %v20, 0
  %v59 = vsel %vm45, %v21, 0
  %v62 = vsel %vm45, %v22, 0
  %v65 = vsel %vm45, %v23, 0
  %v68 = vsel %vm45, %v24, 0
  %70 = vmatprep.subr.mxu0 %v26
  %71 = vmatpush1.msra.mxu0 %v25
  %72 = vmatprep.subr.mxu0 %v28
  %73 = vmatpush1.msra.mxu0 %v27
  %74 = vmatprep.subr.mxu0 %v30
  %75 = vmatpush1.msra.mxu0 %v29
  %76 = vmatprep.subr.mxu0 %v32
  %77 = vmatpush1.msra.mxu0 %v31
  %78 = vmatprep.subr.mxu0 0.0
  %79 = vmatpush1.msra.mxu0 0.0
  %80 = vmatprep.subr.mxu0 0.0
  %81 = vmatpush1.msra.mxu0 0.0
  %82 = vmatprep.subr.mxu0 0.0
  %83 = vmatpush1.msra.mxu0 0.0
  %84 = vmatprep.subr.mxu0 0.0
  %85 = vmatpush1.msra.mxu0 0.0
  %86 = vmatprep.subr.mxu0 0.0
  %87 = vmatpush1.msra.mxu0 0.0
  %88 = vmatprep.subr.mxu0 0.0
  %89 = vmatpush1.msra.mxu0 0.0
  %90 = vmatprep.subr.mxu0 0.0
  %91 = vmatpush1.msra.mxu0 0.0
  %92 = vmatprep.subr.mxu0 0.0
  %93 = vmatpush1.msra.mxu0 0.0
  %94 = vmatprep.subr.mxu0 0.0
  %95 = vmatpush1.msra.mxu0 0.0
  %96 = vmatprep.subr.mxu0 0.0
  %97 = vmatpush1.msra.mxu0 0.0
  %98 = vmatprep.subr.mxu0 0.0
  %99 = vmatpush1.msra.mxu0 0.0
  %100 = vmatprep.subr.mxu0 0.0
  %101 = vmatpush1.msra.mxu0 0.0
  %102 = vmatprep.subr.mxu0 0.0
  %103 = vmatpush1.msra.mxu0 0.0
  %104 = vmatprep.subr.mxu0 0.0
  %105 = vmatpush1.msra.mxu0 0.0
  %106 = vmatprep.subr.mxu0 0.0
  %107 = vmatpush1.msra.mxu0 0.0
  %108 = vmatprep.subr.mxu0 0.0
  %109 = vmatpush1.msra.mxu0 0.0
  %110 = vmatprep.subr.mxu0 0.0
  %111 = vmatpush1.msra.mxu0 0.0
  %112 = vmatprep.subr.mxu0 0.0
  %113 = vmatpush1.msra.mxu0 0.0
  %114 = vmatprep.subr.mxu0 0.0
  %115 = vmatpush1.msra.mxu0 0.0
  %116 = vmatprep.subr.mxu0 0.0
  %117 = vmatpush1.msra.mxu0 0.0
  %118 = vmatprep.subr.mxu0 0.0
  %119 = vmatpush1.msra.mxu0 0.0
  %120 = vmatprep.subr.mxu0 0.0
  %121 = vmatpush1.msra.mxu0 0.0
  %122 = vmatprep.subr.mxu0 0.0
  %123 = vmatpush1.msra.mxu0 0.0
  %124 = vmatprep.subr.mxu0 0.0
  %125 = vmatpush1.msra.mxu0 0.0
  %126 = vmatprep.subr.mxu0 0.0
  %127 = vmatpush1.msra.mxu0 0.0
  %128 = vmatprep.subr.mxu0 0.0
  %129 = vmatpush1.msra.mxu0 0.0
  %130 = vmatprep.subr.mxu0 0.0
  %131 = vmatpush1.msra.mxu0 0.0
  %132 = vmatprep.subr.mxu0 0.0
  %133 = vmatpush1.msra.mxu0 0.0
  %134 = vmatprep.mubr.f32.mxu0 0.0
  %135 = vmatmul.mubr.f32.gmra.mrb[0].mxu0 %v47
  %v136 = vpop.f32.mrb[0].mxu0
  %v137 = vadd.f32 %v38, %v136
  %v138 = vpop.f32.mrb[0].mxu0
  %v139 = vadd.f32 %v42, %v138
  %140 = vmatprep.mubr.f32.mxu0 0.0
  %141 = vmatmul.mubr.f32.gmra.mrb[0].mxu0 %v50
  %v142 = vpop.f32.mrb[0].mxu0
  %v143 = vadd.f32 %v38, %v142
  %v144 = vpop.f32.mrb[0].mxu0
  %v145 = vadd.f32 %v42, %v144
  %146 = vmatprep.mubr.f32.mxu0 0.0
  %147 = vmatmul.mubr.f32.gmra.mrb[0].mxu0 %v53
  %v148 = vpop.f32.mrb[0].mxu0
  %v149 = vadd.f32 %v38, %v148
  %v150 = vpop.f32.mrb[0].mxu0
  %v151 = vadd.f32 %v42, %v150
  %152 = vmatprep.mubr.f32.mxu0 0.0
  %153 = vmatmul.mubr.f32.gmra.mrb[0].mxu0 %v56
  %v154 = vpop.f32.mrb[0].mxu0
  %v155 = vadd.f32 %v38, %v154
  %v156 = vpop.f32.mrb[0].mxu0
  %v157 = vadd.f32 %v42, %v156
  %158 = vmatprep.mubr.f32.mxu0 0.0
  %159 = vmatmul.mubr.f32.gmra.mrb[0].mxu0 %v59
  %v160 = vpop.f32.mrb[0].mxu0
  %v161 = vadd.f32 %v38, %v160
  %v162 = vpop.f32.mrb[0].mxu0
  %v163 = vadd.f32 %v42, %v162
  %164 = vmatprep.mubr.f32.mxu0 0.0
  %165 = vmatmul.mubr.f32.gmra.mrb[0].mxu0 %v62
  %v166 = vpop.f32.mrb[0].mxu0
  %v167 = vadd.f32 %v38, %v166
  %v168 = vpop.f32.mrb[0].mxu0
  %v169 = vadd.f32 %v42, %v168
  %170 = vmatprep.mubr.f32.mxu0 0.0
  %171 = vmatmul.mubr.f32.gmra.mrb[0].mxu0 %v65
  %v172 = vpop.f32.mrb[0].mxu0
  %v173 = vadd.f32 %v38, %v172
  %v174 = vpop.f32.mrb[0].mxu0
  %v175 = vadd.f32 %v42, %v174
  %176 = vmatprep.mubr.f32.mxu0 0.0
  %177 = vmatmul.mubr.f32.gmra.mrb[0].mxu0 %v68
  %v178 = vpop.f32.mrb[0].mxu0
  %v179 = vadd.f32 %v38, %v178
  %v180 = vpop.f32.mrb[0].mxu0
  %v181 = vadd.f32 %v42, %v180
  %182 = vdwg.mxu0
  %183 = vst [vmem:[#allocation2] sm:$0xff] %v137
  %184 = vst [vmem:[#allocation2 + $0x8] sm:$0xff] %v139
  %185 = vst [vmem:[#allocation2 + $0x10] sm:$0xff] %v143
  %186 = vst [vmem:[#allocation2 + $0x18] sm:$0xff] %v145
  %187 = vst [vmem:[#allocation2 + $0x20] sm:$0xff] %v149
  %188 = vst [vmem:[#allocation2 + $0x28] sm:$0xff] %v151
  %189 = vst [vmem:[#allocation2 + $0x30] sm:$0xff] %v155
  %190 = vst [vmem:[#allocation2 + $0x38] sm:$0xff] %v157
  %191 = vst [vmem:[#allocation2 + $0x40] sm:$0xff] %v161
  %192 = vst [vmem:[#allocation2 + $0x48] sm:$0xff] %v163
  %193 = vst [vmem:[#allocation2 + $0x50] sm:$0xff] %v167
  %194 = vst [vmem:[#allocation2 + $0x58] sm:$0xff] %v169
  %195 = vst [vmem:[#allocation2 + $0x60] sm:$0xff] %v173
  %196 = vst [vmem:[#allocation2 + $0x68] sm:$0xff] %v175
  %197 = vst [vmem:[#allocation2 + $0x70] sm:$0xff] %v179
  %198 = vst [vmem:[#allocation2 + $0x78] sm:$0xff] %v181
  %v199 = vld [vmem:[%s2] sm:$0xff]
  %v200 = vld [vmem:[%s2 + $0x8] sm:$0xff]
  %v201 = vld [vmem:[%s2 + $0x10] sm:$0xff]
  %v202 = vld [vmem:[%s2 + $0x18] sm:$0xff]
  %v203 = vld [vmem:[#allocation2] sm:$0xff]
  %v205 = vsel %vm45, 0.0, 0
  %207 = vmatprep.subr.mxu0 0.0
  %208 = vmatpush1.msra.mxu0 %v199
  %209 = vmatprep.subr.mxu0 0.0
  %210 = vmatpush1.msra.mxu0 %v200
  %211 = vmatprep.subr.mxu0 0.0
  %212 = vmatpush1.msra.mxu0 %v201
  %213 = vmatprep.subr.mxu0 0.0
  %214 = vmatpush1.msra.mxu0 %v202
  %215 = vmatprep.subr.mxu0 0.0
  %216 = vmatpush1.msra.mxu0 0.0
  %217 = vmatprep.subr.mxu0 0.0
  %218 = vmatpush1.msra.mxu0 0.0
  %219 = vmatprep.subr.mxu0 0.0
  %220 = vmatpush1.msra.mxu0 0.0
  %221 = vmatprep.subr.mxu0 0.0
  %222 = vmatpush1.msra.mxu0 0.0
  %223 = vmatprep.subr.mxu0 0.0
  %224 = vmatpush1.msra.mxu0 0.0
  %225 = vmatprep.subr.mxu0 0.0
  %226 = vmatpush1.msra.mxu0 0.0
  %227 = vmatprep.subr.mxu0 0.0
  %228 = vmatpush1.msra.mxu0 0.0
  %229 = vmatprep.subr.mxu0 0.0
  %230 = vmatpush1.msra.mxu0 0.0
  %231 = vmatprep.subr.mxu0 0.0
  %232 = vmatpush1.msra.mxu0 0.0
  %233 = vmatprep.subr.mxu0 0.0
  %234 = vmatpush1.msra.mxu0 0.0
  %235 = vmatprep.subr.mxu0 0.0
  %236 = vmatpush1.msra.mxu0 0.0
  %237 = vmatprep.subr.mxu0 0.0
  %238 = vmatpush1.msra.mxu0 0.0
  %239 = vmatprep.subr.mxu0 0.0
  %240 = vmatpush1.msra.mxu0 0.0
  %241 = vmatprep.subr.mxu0 0.0
  %242 = vmatpush1.msra.mxu0 0.0
  %243 = vmatprep.subr.mxu0 0.0
  %244 = vmatpush1.msra.mxu0 0.0
  %245 = vmatprep.subr.mxu0 0.0
  %246 = vmatpush1.msra.mxu0 0.0
  %247 = vmatprep.subr.mxu0 0.0
  %248 = vmatpush1.msra.mxu0 0.0
  %249 = vmatprep.subr.mxu0 0.0
  %250 = vmatpush1.msra.mxu0 0.0
  %251 = vmatprep.subr.mxu0 0.0
  %252 = vmatpush1.msra.mxu0 0.0
  %253 = vmatprep.subr.mxu0 0.0
  %254 = vmatpush1.msra.mxu0 0.0
  %255 = vmatprep.subr.mxu0 0.0
  %256 = vmatpush1.msra.mxu0 0.0
  %257 = vmatprep.subr.mxu0 0.0
  %258 = vmatpush1.msra.mxu0 0.0
  %259 = vmatprep.subr.mxu0 0.0
  %260 = vmatpush1.msra.mxu0 0.0
  %261 = vmatprep.subr.mxu0 0.0
  %262 = vmatpush1.msra.mxu0 0.0
  %263 = vmatprep.subr.mxu0 0.0
  %264 = vmatpush1.msra.mxu0 0.0
  %265 = vmatprep.subr.mxu0 0.0
  %266 = vmatpush1.msra.mxu0 0.0
  %267 = vmatprep.subr.mxu0 0.0
  %268 = vmatpush1.msra.mxu0 0.0
  %269 = vmatprep.subr.mxu0 0.0
  %270 = vmatpush1.msra.mxu0 0.0
  %271 = vmatprep.mubr.f32.mxu0 0.0
  %272 = vmatmul.mubr.f32.gmra.mrb[0].mxu0 %v205
  %v273 = vpop.f32.mrb[0].mxu0
  %v274 = vadd.f32 0.0, %v273
  %v275 = vpop.f32.mrb[0].mxu0
  %276 = vdwg.mxu0
  %v277 = vadd.f32 %v203, %v274
  %v278 = vxor.u32 %v277, 2147483648
  %v279 = vmul.f32 %v278, 1.442695
  %v280 = vpow.pop %v279
  %v281 = vadd.f32 %v280, 1.0
  %v282 = vrcp.pop %v281
  %v283 = vmul.f32 1.0, %v282
  %v284 = vtanh.pop %v277
  %v285 = vmul.f32 %v283, 0.0
  %287 = vrot.lane.b32.xlu0 %v284, 64
  %v288 = vpop.permute.xlu0 %287
  %v290 = vmul.f32 %v283, %v288
  %292 = vrot.lane.b32.xlu0 %v290, 32
  %v293 = vpop.permute.xlu0 %292
  %v295 = vadd.f32 %v285, %v293
  %v296 = vtanh.pop %v295
  %298 = vrot.lane.b32.xlu0 %v296, 64
  %v299 = vpop.permute.xlu0 %298
  %v301 = vmul.f32 %v283, %v299
  %303 = vrot.lane.b32.xlu0 %v301, 32
  %v304 = vpop.permute.xlu0 %303
  %306 = vst.msk [vmem:[%s4] sm:$0xff] %vm45, %v304
  %v307 = vld [vmem:[#allocation2 + $0x10] sm:$0xff]
  %v308 = vsel %vm45, %v304, 0
  %310 = vmatprep.subr.mxu0 0.0
  %311 = vmatpush1.msra.mxu0 %v199
  %312 = vmatprep.subr.mxu0 0.0
  %313 = vmatpush1.msra.mxu0 %v200
  %314 = vmatprep.subr.mxu0 0.0
  %315 = vmatpush1.msra.mxu0 %v201
  %316 = vmatprep.subr.mxu0 0.0
  %317 = vmatpush1.msra.mxu0 %v202
  %318 = vmatprep.subr.mxu0 0.0
  %319 = vmatpush1.msra.mxu0 0.0
  %320 = vmatprep.subr.mxu0 0.0
  %321 = vmatpush1.msra.mxu0 0.0
  %322 = vmatprep.subr.mxu0 0.0
  %323 = vmatpush1.msra.mxu0 0.0
  %324 = vmatprep.subr.mxu0 0.0
  %325 = vmatpush1.msra.mxu0 0.0
  %326 = vmatprep.subr.mxu0 0.0
  %327 = vmatpush1.msra.mxu0 0.0
  %328 = vmatprep.subr.mxu0 0.0
  %329 = vmatpush1.msra.mxu0 0.0
  %330 = vmatprep.subr.mxu0 0.0
  %331 = vmatpush1.msra.mxu0 0.0
  %332 = vmatprep.subr.mxu0 0.0
  %333 = vmatpush1.msra.mxu0 0.0
  %334 = vmatprep.subr.mxu0 0.0
  %335 = vmatpush1.msra.mxu0 0.0
  %336 = vmatprep.subr.mxu0 0.0
  %337 = vmatpush1.msra.mxu0 0.0
  %338 = vmatprep.subr.mxu0 0.0
  %339 = vmatpush1.msra.mxu0 0.0
  %340 = vmatprep.subr.mxu0 0.0
  %341 = vmatpush1.msra.mxu0 0.0
  %342 = vmatprep.subr.mxu0 0.0
  %343 = vmatpush1.msra.mxu0 0.0
  %344 = vmatprep.subr.mxu0 0.0
  %345 = vmatpush1.msra.mxu0 0.0
  %346 = vmatprep.subr.mxu0 0.0
  %347 = vmatpush1.msra.mxu0 0.0
  %348 = vmatprep.subr.mxu0 0.0
  %349 = vmatpush1.msra.mxu0 0.0
  %350 = vmatprep.subr.mxu0 0.0
  %351 = vmatpush1.msra.mxu0 0.0
  %352 = vmatprep.subr.mxu0 0.0
  %353 = vmatpush1.msra.mxu0 0.0
  %354 = vmatprep.subr.mxu0 0.0
  %355 = vmatpush1.msra.mxu0 0.0
  %356 = vmatprep.subr.mxu0 0.0
  %357 = vmatpush1.msra.mxu0 0.0
  %358 = vmatprep.subr.mxu0 0.0
  %359 = vmatpush1.msra.mxu0 0.0
  %360 = vmatprep.subr.mxu0 0.0
  %361 = vmatpush1.msra.mxu0 0.0
  %362 = vmatprep.subr.mxu0 0.0
  %363 = vmatpush1.msra.mxu0 0.0
  %364 = vmatprep.subr.mxu0 0.0
  %365 = vmatpush1.msra.mxu0 0.0
  %366 = vmatprep.subr.mxu0 0.0
  %367 = vmatpush1.msra.mxu0 0.0
  %368 = vmatprep.subr.mxu0 0.0
  %369 = vmatpush1.msra.mxu0 0.0
  %370 = vmatprep.subr.mxu0 0.0
  %371 = vmatpush1.msra.mxu0 0.0
  %372 = vmatprep.subr.mxu0 0.0
  %373 = vmatpush1.msra.mxu0 0.0
  %374 = vmatprep.mubr.f32.mxu0 0.0
  %375 = vmatmul.mubr.f32.gmra.mrb[0].mxu0 %v308
  %v376 = vpop.f32.mrb[0].mxu0
  %v377 = vadd.f32 0.0, %v376
  %v378 = vpop.f32.mrb[0].mxu0
  %379 = vdwg.mxu0
  %v380 = vadd.f32 %v307, %v377
  %v381 = vxor.u32 %v380, 2147483648
  %v382 = vmul.f32 %v381, 1.442695
  %v383 = vpow.pop %v382
  %v384 = vadd.f32 %v383, 1.0
  %v385 = vrcp.pop %v384
  %v386 = vmul.f32 1.0, %v385
  %v387 = vtanh.pop %v380
  %v388 = vmul.f32 %v386, %v295
  %390 = vrot.lane.b32.xlu0 %v387, 64
  %v391 = vpop.permute.xlu0 %390
  %v393 = vmul.f32 %v386, %v391
  %395 = vrot.lane.b32.xlu0 %v393, 32
  %v396 = vpop.permute.xlu0 %395
  %v398 = vadd.f32 %v388, %v396
  %v399 = vtanh.pop %v398
  %401 = vrot.lane.b32.xlu0 %v399, 64
  %v402 = vpop.permute.xlu0 %401
  %v404 = vmul.f32 %v386, %v402
  %406 = vrot.lane.b32.xlu0 %v404, 32
  %v407 = vpop.permute.xlu0 %406
  %409 = vst.msk [vmem:[%s4 + $0x8] sm:$0xff] %vm45, %v407
  %v410 = vld [vmem:[#allocation2 + $0x20] sm:$0xff]
  %v411 = vsel %vm45, %v407, 0
  %413 = vmatprep.subr.mxu0 0.0
  %414 = vmatpush1.msra.mxu0 %v199
  %415 = vmatprep.subr.mxu0 0.0
  %416 = vmatpush1.msra.mxu0 %v200
  %417 = vmatprep.subr.mxu0 0.0
  %418 = vmatpush1.msra.mxu0 %v201
  %419 = vmatprep.subr.mxu0 0.0
  %420 = vmatpush1.msra.mxu0 %v202
  %421 = vmatprep.subr.mxu0 0.0
  %422 = vmatpush1.msra.mxu0 0.0
  %423 = vmatprep.subr.mxu0 0.0
  %424 = vmatpush1.msra.mxu0 0.0
  %425 = vmatprep.subr.mxu0 0.0
  %426 = vmatpush1.msra.mxu0 0.0
  %427 = vmatprep.subr.mxu0 0.0
  %428 = vmatpush1.msra.mxu0 0.0
  %429 = vmatprep.subr.mxu0 0.0
  %430 = vmatpush1.msra.mxu0 0.0
  %431 = vmatprep.subr.mxu0 0.0
  %432 = vmatpush1.msra.mxu0 0.0
  %433 = vmatprep.subr.mxu0 0.0
  %434 = vmatpush1.msra.mxu0 0.0
  %435 = vmatprep.subr.mxu0 0.0
  %436 = vmatpush1.msra.mxu0 0.0
  %437 = vmatprep.subr.mxu0 0.0
  %438 = vmatpush1.msra.mxu0 0.0
  %439 = vmatprep.subr.mxu0 0.0
  %440 = vmatpush1.msra.mxu0 0.0
  %441 = vmatprep.subr.mxu0 0.0
  %442 = vmatpush1.msra.mxu0 0.0
  %443 = vmatprep.subr.mxu0 0.0
  %444 = vmatpush1.msra.mxu0 0.0
  %445 = vmatprep.subr.mxu0 0.0
  %446 = vmatpush1.msra.mxu0 0.0
  %447 = vmatprep.subr.mxu0 0.0
  %448 = vmatpush1.msra.mxu0 0.0
  %449 = vmatprep.subr.mxu0 0.0
  %450 = vmatpush1.msra.mxu0 0.0
  %451 = vmatprep.subr.mxu0 0.0
  %452 = vmatpush1.msra.mxu0 0.0
  %453 = vmatprep.subr.mxu0 0.0
  %454 = vmatpush1.msra.mxu0 0.0
  %455 = vmatprep.subr.mxu0 0.0
  %456 = vmatpush1.msra.mxu0 0.0
  %457 = vmatprep.subr.mxu0 0.0
  %458 = vmatpush1.msra.mxu0 0.0
  %459 = vmatprep.subr.mxu0 0.0
  %460 = vmatpush1.msra.mxu0 0.0
  %461 = vmatprep.subr.mxu0 0.0
  %462 = vmatpush1.msra.mxu0 0.0
  %463 = vmatprep.subr.mxu0 0.0
  %464 = vmatpush1.msra.mxu0 0.0
  %465 = vmatprep.subr.mxu0 0.0
  %466 = vmatpush1.msra.mxu0 0.0
  %467 = vmatprep.subr.mxu0 0.0
  %468 = vmatpush1.msra.mxu0 0.0
  %469 = vmatprep.subr.mxu0 0.0
  %470 = vmatpush1.msra.mxu0 0.0
  %471 = vmatprep.subr.mxu0 0.0
  %472 = vmatpush1.msra.mxu0 0.0
  %473 = vmatprep.subr.mxu0 0.0
  %474 = vmatpush1.msra.mxu0 0.0
  %475 = vmatprep.subr.mxu0 0.0
  %476 = vmatpush1.msra.mxu0 0.0
  %477 = vmatprep.mubr.f32.mxu0 0.0
  %478 = vmatmul.mubr.f32.gmra.mrb[0].mxu0 %v411
  %v479 = vpop.f32.mrb[0].mxu0
  %v480 = vadd.f32 0.0, %v479
  %v481 = vpop.f32.mrb[0].mxu0
  %482 = vdwg.mxu0
  %v483 = vadd.f32 %v410, %v480
  %v484 = vxor.u32 %v483, 2147483648
  %v485 = vmul.f32 %v484, 1.442695
  %v486 = vpow.pop %v485
  %v487 = vadd.f32 %v486, 1.0
  %v488 = vrcp.pop %v487
  %v489 = vmul.f32 1.0, %v488
  %v490 = vtanh.pop %v483
  %v491 = vmul.f32 %v489, %v398
  %493 = vrot.lane.b32.xlu0 %v490, 64
  %v494 = vpop.permute.xlu0 %493
  %v496 = vmul.f32 %v489, %v494
  %498 = vrot.lane.b32.xlu0 %v496, 32
  %v499 = vpop.permute.xlu0 %498
  %v501 = vadd.f32 %v491, %v499
  %v502 = vtanh.pop %v501
  %504 = vrot.lane.b32.xlu0 %v502, 64
  %v505 = vpop.permute.xlu0 %504
  %v507 = vmul.f32 %v489, %v505
  %509 = vrot.lane.b32.xlu0 %v507, 32
  %v510 = vpop.permute.xlu0 %509
  %512 = vst.msk [vmem:[%s4 + $0x10] sm:$0xff] %vm45, %v510
  %v513 = vld [vmem:[#allocation2 + $0x30] sm:$0xff]
  %v514 = vsel %vm45, %v510, 0
  %516 = vmatprep.subr.mxu0 0.0
  %517 = vmatpush1.msra.mxu0 %v199
  %518 = vmatprep.subr.mxu0 0.0
  %519 = vmatpush1.msra.mxu0 %v200
  %520 = vmatprep.subr.mxu0 0.0
  %521 = vmatpush1.msra.mxu0 %v201
  %522 = vmatprep.subr.mxu0 0.0
  %523 = vmatpush1.msra.mxu0 %v202
  %524 = vmatprep.subr.mxu0 0.0
  %525 = vmatpush1.msra.mxu0 0.0
  %526 = vmatprep.subr.mxu0 0.0
  %527 = vmatpush1.msra.mxu0 0.0
  %528 = vmatprep.subr.mxu0 0.0
  %529 = vmatpush1.msra.mxu0 0.0
  %530 = vmatprep.subr.mxu0 0.0
  %531 = vmatpush1.msra.mxu0 0.0
  %532 = vmatprep.subr.mxu0 0.0
  %533 = vmatpush1.msra.mxu0 0.0
  %534 = vmatprep.subr.mxu0 0.0
  %535 = vmatpush1.msra.mxu0 0.0
  %536 = vmatprep.subr.mxu0 0.0
  %537 = vmatpush1.msra.mxu0 0.0
  %538 = vmatprep.subr.mxu0 0.0
  %539 = vmatpush1.msra.mxu0 0.0
  %540 = vmatprep.subr.mxu0 0.0
  %541 = vmatpush1.msra.mxu0 0.0
  %542 = vmatprep.subr.mxu0 0.0
  %543 = vmatpush1.msra.mxu0 0.0
  %544 = vmatprep.subr.mxu0 0.0
  %545 = vmatpush1.msra.mxu0 0.0
  %546 = vmatprep.subr.mxu0 0.0
  %547 = vmatpush1.msra.mxu0 0.0
  %548 = vmatprep.subr.mxu0 0.0
  %549 = vmatpush1.msra.mxu0 0.0
  %550 = vmatprep.subr.mxu0 0.0
  %551 = vmatpush1.msra.mxu0 0.0
  %552 = vmatprep.subr.mxu0 0.0
  %553 = vmatpush1.msra.mxu0 0.0
  %554 = vmatprep.subr.mxu0 0.0
  %555 = vmatpush1.msra.mxu0 0.0
  %556 = vmatprep.subr.mxu0 0.0
  %557 = vmatpush1.msra.mxu0 0.0
  %558 = vmatprep.subr.mxu0 0.0
  %559 = vmatpush1.msra.mxu0 0.0
  %560 = vmatprep.subr.mxu0 0.0
  %561 = vmatpush1.msra.mxu0 0.0
  %562 = vmatprep.subr.mxu0 0.0
  %563 = vmatpush1.msra.mxu0 0.0
  %564 = vmatprep.subr.mxu0 0.0
  %565 = vmatpush1.msra.mxu0 0.0
  %566 = vmatprep.subr.mxu0 0.0
  %567 = vmatpush1.msra.mxu0 0.0
  %568 = vmatprep.subr.mxu0 0.0
  %569 = vmatpush1.msra.mxu0 0.0
  %570 = vmatprep.subr.mxu0 0.0
  %571 = vmatpush1.msra.mxu0 0.0
  %572 = vmatprep.subr.mxu0 0.0
  %573 = vmatpush1.msra.mxu0 0.0
  %574 = vmatprep.subr.mxu0 0.0
  %575 = vmatpush1.msra.mxu0 0.0
  %576 = vmatprep.subr.mxu0 0.0
  %577 = vmatpush1.msra.mxu0 0.0
  %578 = vmatprep.subr.mxu0 0.0
  %579 = vmatpush1.msra.mxu0 0.0
  %580 = vmatprep.mubr.f32.mxu0 0.0
  %581 = vmatmul.mubr.f32.gmra.mrb[0].mxu0 %v514
  %v582 = vpop.f32.mrb[0].mxu0
  %v583 = vadd.f32 0.0, %v582
  %v584 = vpop.f32.mrb[0].mxu0
  %585 = vdwg.mxu0
  %v586 = vadd.f32 %v513, %v583
  %v587 = vxor.u32 %v586, 2147483648
  %v588 = vmul.f32 %v587, 1.442695
  %v589 = vpow.pop %v588
  %v590 = vadd.f32 %v589, 1.0
  %v591 = vrcp.pop %v590
  %v592 = vmul.f32 1.0, %v591
  %v593 = vtanh.pop %v586
  %v594 = vmul.f32 %v592, %v501
  %596 = vrot.lane.b32.xlu0 %v593, 64
  %v597 = vpop.permute.xlu0 %596
  %v599 = vmul.f32 %v592, %v597
  %601 = vrot.lane.b32.xlu0 %v599, 32
  %v602 = vpop.permute.xlu0 %601
  %v604 = vadd.f32 %v594, %v602
  %v605 = vtanh.pop %v604
  %607 = vrot.lane.b32.xlu0 %v605, 64
  %v608 = vpop.permute.xlu0 %607
  %v610 = vmul.f32 %v592, %v608
  %612 = vrot.lane.b32.xlu0 %v610, 32
  %v613 = vpop.permute.xlu0 %612
  %615 = vst.msk [vmem:[%s4 + $0x18] sm:$0xff] %vm45, %v613
  %v616 = vld [vmem:[#allocation2 + $0x40] sm:$0xff]
  %v617 = vsel %vm45, %v613, 0
  %619 = vmatprep.subr.mxu0 0.0
  %620 = vmatpush1.msra.mxu0 %v199
  %621 = vmatprep.subr.mxu0 0.0
  %622 = vmatpush1.msra.mxu0 %v200
  %623 = vmatprep.subr.mxu0 0.0
  %624 = vmatpush1.msra.mxu0 %v201
  %625 = vmatprep.subr.mxu0 0.0
  %626 = vmatpush1.msra.mxu0 %v202
  %627 = vmatprep.subr.mxu0 0.0
  %628 = vmatpush1.msra.mxu0 0.0
  %629 = vmatprep.subr.mxu0 0.0
  %630 = vmatpush1.msra.mxu0 0.0
  %631 = vmatprep.subr.mxu0 0.0
  %632 = vmatpush1.msra.mxu0 0.0
  %633 = vmatprep.subr.mxu0 0.0
  %634 = vmatpush1.msra.mxu0 0.0
  %635 = vmatprep.subr.mxu0 0.0
  %636 = vmatpush1.msra.mxu0 0.0
  %637 = vmatprep.subr.mxu0 0.0
  %638 = vmatpush1.msra.mxu0 0.0
  %639 = vmatprep.subr.mxu0 0.0
  %640 = vmatpush1.msra.mxu0 0.0
  %641 = vmatprep.subr.mxu0 0.0
  %642 = vmatpush1.msra.mxu0 0.0
  %643 = vmatprep.subr.mxu0 0.0
  %644 = vmatpush1.msra.mxu0 0.0
  %645 = vmatprep.subr.mxu0 0.0
  %646 = vmatpush1.msra.mxu0 0.0
  %647 = vmatprep.subr.mxu0 0.0
  %648 = vmatpush1.msra.mxu0 0.0
  %649 = vmatprep.subr.mxu0 0.0
  %650 = vmatpush1.msra.mxu0 0.0
  %651 = vmatprep.subr.mxu0 0.0
  %652 = vmatpush1.msra.mxu0 0.0
  %653 = vmatprep.subr.mxu0 0.0
  %654 = vmatpush1.msra.mxu0 0.0
  %655 = vmatprep.subr.mxu0 0.0
  %656 = vmatpush1.msra.mxu0 0.0
  %657 = vmatprep.subr.mxu0 0.0
  %658 = vmatpush1.msra.mxu0 0.0
  %659 = vmatprep.subr.mxu0 0.0
  %660 = vmatpush1.msra.mxu0 0.0
  %661 = vmatprep.subr.mxu0 0.0
  %662 = vmatpush1.msra.mxu0 0.0
  %663 = vmatprep.subr.mxu0 0.0
  %664 = vmatpush1.msra.mxu0 0.0
  %665 = vmatprep.subr.mxu0 0.0
  %666 = vmatpush1.msra.mxu0 0.0
  %667 = vmatprep.subr.mxu0 0.0
  %668 = vmatpush1.msra.mxu0 0.0
  %669 = vmatprep.subr.mxu0 0.0
  %670 = vmatpush1.msra.mxu0 0.0
  %671 = vmatprep.subr.mxu0 0.0
  %672 = vmatpush1.msra.mxu0 0.0
  %673 = vmatprep.subr.mxu0 0.0
  %674 = vmatpush1.msra.mxu0 0.0
  %675 = vmatprep.subr.mxu0 0.0
  %676 = vmatpush1.msra.mxu0 0.0
  %677 = vmatprep.subr.mxu0 0.0
  %678 = vmatpush1.msra.mxu0 0.0
  %679 = vmatprep.subr.mxu0 0.0
  %680 = vmatpush1.msra.mxu0 0.0
  %681 = vmatprep.subr.mxu0 0.0
  %682 = vmatpush1.msra.mxu0 0.0
  %683 = vmatprep.mubr.f32.mxu0 0.0
  %684 = vmatmul.mubr.f32.gmra.mrb[0].mxu0 %v617
  %v685 = vpop.f32.mrb[0].mxu0
  %v686 = vadd.f32 0.0, %v685
  %v687 = vpop.f32.mrb[0].mxu0
  %688 = vdwg.mxu0
  %v689 = vadd.f32 %v616, %v686
  %v690 = vxor.u32 %v689, 2147483648
  %v691 = vmul.f32 %v690, 1.442695
  %v692 = vpow.pop %v691
  %v693 = vadd.f32 %v692, 1.0
  %v694 = vrcp.pop %v693
  %v695 = vmul.f32 1.0, %v694
  %v696 = vtanh.pop %v689
  %v697 = vmul.f32 %v695, %v604
  %699 = vrot.lane.b32.xlu0 %v696, 64
  %v700 = vpop.permute.xlu0 %699
  %v702 = vmul.f32 %v695, %v700
  %704 = vrot.lane.b32.xlu0 %v702, 32
  %v705 = vpop.permute.xlu0 %704
  %v707 = vadd.f32 %v697, %v705
  %v708 = vtanh.pop %v707
  %710 = vrot.lane.b32.xlu0 %v708, 64
  %v711 = vpop.permute.xlu0 %710
  %v713 = vmul.f32 %v695, %v711
  %715 = vrot.lane.b32.xlu0 %v713, 32
  %v716 = vpop.permute.xlu0 %715
  %718 = vst.msk [vmem:[%s4 + $0x20] sm:$0xff] %vm45, %v716
  %v719 = vld [vmem:[#allocation2 + $0x50] sm:$0xff]
  %v720 = vsel %vm45, %v716, 0
  %722 = vmatprep.subr.mxu0 0.0
  %723 = vmatpush1.msra.mxu0 %v199
  %724 = vmatprep.subr.mxu0 0.0
  %725 = vmatpush1.msra.mxu0 %v200
  %726 = vmatprep.subr.mxu0 0.0
  %727 = vmatpush1.msra.mxu0 %v201
  %728 = vmatprep.subr.mxu0 0.0
  %729 = vmatpush1.msra.mxu0 %v202
  %730 = vmatprep.subr.mxu0 0.0
  %731 = vmatpush1.msra.mxu0 0.0
  %732 = vmatprep.subr.mxu0 0.0
  %733 = vmatpush1.msra.mxu0 0.0
  %734 = vmatprep.subr.mxu0 0.0
  %735 = vmatpush1.msra.mxu0 0.0
  %736 = vmatprep.subr.mxu0 0.0
  %737 = vmatpush1.msra.mxu0 0.0
  %738 = vmatprep.subr.mxu0 0.0
  %739 = vmatpush1.msra.mxu0 0.0
  %740 = vmatprep.subr.mxu0 0.0
  %741 = vmatpush1.msra.mxu0 0.0
  %742 = vmatprep.subr.mxu0 0.0
  %743 = vmatpush1.msra.mxu0 0.0
  %744 = vmatprep.subr.mxu0 0.0
  %745 = vmatpush1.msra.mxu0 0.0
  %746 = vmatprep.subr.mxu0 0.0
  %747 = vmatpush1.msra.mxu0 0.0
  %748 = vmatprep.subr.mxu0 0.0
  %749 = vmatpush1.msra.mxu0 0.0
  %750 = vmatprep.subr.mxu0 0.0
  %751 = vmatpush1.msra.mxu0 0.0
  %752 = vmatprep.subr.mxu0 0.0
  %753 = vmatpush1.msra.mxu0 0.0
  %754 = vmatprep.subr.mxu0 0.0
  %755 = vmatpush1.msra.mxu0 0.0
  %756 = vmatprep.subr.mxu0 0.0
  %757 = vmatpush1.msra.mxu0 0.0
  %758 = vmatprep.subr.mxu0 0.0
  %759 = vmatpush1.msra.mxu0 0.0
  %760 = vmatprep.subr.mxu0 0.0
  %761 = vmatpush1.msra.mxu0 0.0
  %762 = vmatprep.subr.mxu0 0.0
  %763 = vmatpush1.msra.mxu0 0.0
  %764 = vmatprep.subr.mxu0 0.0
  %765 = vmatpush1.msra.mxu0 0.0
  %766 = vmatprep.subr.mxu0 0.0
  %767 = vmatpush1.msra.mxu0 0.0
  %768 = vmatprep.subr.mxu0 0.0
  %769 = vmatpush1.msra.mxu0 0.0
  %770 = vmatprep.subr.mxu0 0.0
  %771 = vmatpush1.msra.mxu0 0.0
  %772 = vmatprep.subr.mxu0 0.0
  %773 = vmatpush1.msra.mxu0 0.0
  %774 = vmatprep.subr.mxu0 0.0
  %775 = vmatpush1.msra.mxu0 0.0
  %776 = vmatprep.subr.mxu0 0.0
  %777 = vmatpush1.msra.mxu0 0.0
  %778 = vmatprep.subr.mxu0 0.0
  %779 = vmatpush1.msra.mxu0 0.0
  %780 = vmatprep.subr.mxu0 0.0
  %781 = vmatpush1.msra.mxu0 0.0
  %782 = vmatprep.subr.mxu0 0.0
  %783 = vmatpush1.msra.mxu0 0.0
  %784 = vmatprep.subr.mxu0 0.0
  %785 = vmatpush1.msra.mxu0 0.0
  %786 = vmatprep.mubr.f32.mxu0 0.0
  %787 = vmatmul.mubr.f32.gmra.mrb[0].mxu0 %v720
  %v788 = vpop.f32.mrb[0].mxu0
  %v789 = vadd.f32 0.0, %v788
  %v790 = vpop.f32.mrb[0].mxu0
  %791 = vdwg.mxu0
  %v792 = vadd.f32 %v719, %v789
  %v793 = vxor.u32 %v792, 2147483648
  %v794 = vmul.f32 %v793, 1.442695
  %v795 = vpow.pop %v794
  %v796 = vadd.f32 %v795, 1.0
  %v797 = vrcp.pop %v796
  %v798 = vmul.f32 1.0, %v797
  %v799 = vtanh.pop %v792
  %v800 = vmul.f32 %v798, %v707
  %802 = vrot.lane.b32.xlu0 %v799, 64
  %v803 = vpop.permute.xlu0 %802
  %v805 = vmul.f32 %v798, %v803
  %807 = vrot.lane.b32.xlu0 %v805, 32
  %v808 = vpop.permute.xlu0 %807
  %v810 = vadd.f32 %v800, %v808
  %v811 = vtanh.pop %v810
  %813 = vrot.lane.b32.xlu0 %v811, 64
  %v814 = vpop.permute.xlu0 %813
  %v816 = vmul.f32 %v798, %v814
  %818 = vrot.lane.b32.xlu0 %v816, 32
  %v819 = vpop.permute.xlu0 %818
  %821 = vst.msk [vmem:[%s4 + $0x28] sm:$0xff] %vm45, %v819
  %v822 = vld [vmem:[#allocation2 + $0x60] sm:$0xff]
  %v823 = vsel %vm45, %v819, 0
  %825 = vmatprep.subr.mxu0 0.0
  %826 = vmatpush1.msra.mxu0 %v199
  %827 = vmatprep.subr.mxu0 0.0
  %828 = vmatpush1.msra.mxu0 %v200
  %829 = vmatprep.subr.mxu0 0.0
  %830 = vmatpush1.msra.mxu0 %v201
  %831 = vmatprep.subr.mxu0 0.0
  %832 = vmatpush1.msra.mxu0 %v202
  %833 = vmatprep.subr.mxu0 0.0
  %834 = vmatpush1.msra.mxu0 0.0
  %835 = vmatprep.subr.mxu0 0.0
  %836 = vmatpush1.msra.mxu0 0.0
  %837 = vmatprep.subr.mxu0 0.0
  %838 = vmatpush1.msra.mxu0 0.0
  %839 = vmatprep.subr.mxu0 0.0
  %840 = vmatpush1.msra.mxu0 0.0
  %841 = vmatprep.subr.mxu0 0.0
  %842 = vmatpush1.msra.mxu0 0.0
  %843 = vmatprep.subr.mxu0 0.0
  %844 = vmatpush1.msra.mxu0 0.0
  %845 = vmatprep.subr.mxu0 0.0
  %846 = vmatpush1.msra.mxu0 0.0
  %847 = vmatprep.subr.mxu0 0.0
  %848 = vmatpush1.msra.mxu0 0.0
  %849 = vmatprep.subr.mxu0 0.0
  %850 = vmatpush1.msra.mxu0 0.0
  %851 = vmatprep.subr.mxu0 0.0
  %852 = vmatpush1.msra.mxu0 0.0
  %853 = vmatprep.subr.mxu0 0.0
  %854 = vmatpush1.msra.mxu0 0.0
  %855 = vmatprep.subr.mxu0 0.0
  %856 = vmatpush1.msra.mxu0 0.0
  %857 = vmatprep.subr.mxu0 0.0
  %858 = vmatpush1.msra.mxu0 0.0
  %859 = vmatprep.subr.mxu0 0.0
  %860 = vmatpush1.msra.mxu0 0.0
  %861 = vmatprep.subr.mxu0 0.0
  %862 = vmatpush1.msra.mxu0 0.0
  %863 = vmatprep.subr.mxu0 0.0
  %864 = vmatpush1.msra.mxu0 0.0
  %865 = vmatprep.subr.mxu0 0.0
  %866 = vmatpush1.msra.mxu0 0.0
  %867 = vmatprep.subr.mxu0 0.0
  %868 = vmatpush1.msra.mxu0 0.0
  %869 = vmatprep.subr.mxu0 0.0
  %870 = vmatpush1.msra.mxu0 0.0
  %871 = vmatprep.subr.mxu0 0.0
  %872 = vmatpush1.msra.mxu0 0.0
  %873 = vmatprep.subr.mxu0 0.0
  %874 = vmatpush1.msra.mxu0 0.0
  %875 = vmatprep.subr.mxu0 0.0
  %876 = vmatpush1.msra.mxu0 0.0
  %877 = vmatprep.subr.mxu0 0.0
  %878 = vmatpush1.msra.mxu0 0.0
  %879 = vmatprep.subr.mxu0 0.0
  %880 = vmatpush1.msra.mxu0 0.0
  %881 = vmatprep.subr.mxu0 0.0
  %882 = vmatpush1.msra.mxu0 0.0
  %883 = vmatprep.subr.mxu0 0.0
  %884 = vmatpush1.msra.mxu0 0.0
  %885 = vmatprep.subr.mxu0 0.0
  %886 = vmatpush1.msra.mxu0 0.0
  %887 = vmatprep.subr.mxu0 0.0
  %888 = vmatpush1.msra.mxu0 0.0
  %889 = vmatprep.mubr.f32.mxu0 0.0
  %890 = vmatmul.mubr.f32.gmra.mrb[0].mxu0 %v823
  %v891 = vpop.f32.mrb[0].mxu0
  %v892 = vadd.f32 0.0, %v891
  %v893 = vpop.f32.mrb[0].mxu0
  %894 = vdwg.mxu0
  %v895 = vadd.f32 %v822, %v892
  %v896 = vxor.u32 %v895, 2147483648
  %v897 = vmul.f32 %v896, 1.442695
  %v898 = vpow.pop %v897
  %v899 = vadd.f32 %v898, 1.0
  %v900 = vrcp.pop %v899
  %v901 = vmul.f32 1.0, %v900
  %v902 = vtanh.pop %v895
  %v903 = vmul.f32 %v901, %v810
  %905 = vrot.lane.b32.xlu0 %v902, 64
  %v906 = vpop.permute.xlu0 %905
  %v908 = vmul.f32 %v901, %v906
  %910 = vrot.lane.b32.xlu0 %v908, 32
  %v911 = vpop.permute.xlu0 %910
  %v913 = vadd.f32 %v903, %v911
  %v914 = vtanh.pop %v913
  %916 = vrot.lane.b32.xlu0 %v914, 64
  %v917 = vpop.permute.xlu0 %916
  %v919 = vmul.f32 %v901, %v917
  %921 = vrot.lane.b32.xlu0 %v919, 32
  %v922 = vpop.permute.xlu0 %921
  %924 = vst.msk [vmem:[%s4 + $0x30] sm:$0xff] %vm45, %v922
  %v925 = vld [vmem:[#allocation2 + $0x70] sm:$0xff]
  %v926 = vsel %vm45, %v922, 0
  %928 = vmatprep.subr.mxu0 0.0
  %929 = vmatpush1.msra.mxu0 %v199
  %930 = vmatprep.subr.mxu0 0.0
  %931 = vmatpush1.msra.mxu0 %v200
  %932 = vmatprep.subr.mxu0 0.0
  %933 = vmatpush1.msra.mxu0 %v201
  %934 = vmatprep.subr.mxu0 0.0
  %935 = vmatpush1.msra.mxu0 %v202
  %936 = vmatprep.subr.mxu0 0.0
  %937 = vmatpush1.msra.mxu0 0.0
  %938 = vmatprep.subr.mxu0 0.0
  %939 = vmatpush1.msra.mxu0 0.0
  %940 = vmatprep.subr.mxu0 0.0
  %941 = vmatpush1.msra.mxu0 0.0
  %942 = vmatprep.subr.mxu0 0.0
  %943 = vmatpush1.msra.mxu0 0.0
  %944 = vmatprep.subr.mxu0 0.0
  %945 = vmatpush1.msra.mxu0 0.0
  %946 = vmatprep.subr.mxu0 0.0
  %947 = vmatpush1.msra.mxu0 0.0
  %948 = vmatprep.subr.mxu0 0.0
  %949 = vmatpush1.msra.mxu0 0.0
  %950 = vmatprep.subr.mxu0 0.0
  %951 = vmatpush1.msra.mxu0 0.0
  %952 = vmatprep.subr.mxu0 0.0
  %953 = vmatpush1.msra.mxu0 0.0
  %954 = vmatprep.subr.mxu0 0.0
  %955 = vmatpush1.msra.mxu0 0.0
  %956 = vmatprep.subr.mxu0 0.0
  %957 = vmatpush1.msra.mxu0 0.0
  %958 = vmatprep.subr.mxu0 0.0
  %959 = vmatpush1.msra.mxu0 0.0
  %960 = vmatprep.subr.mxu0 0.0
  %961 = vmatpush1.msra.mxu0 0.0
  %962 = vmatprep.subr.mxu0 0.0
  %963 = vmatpush1.msra.mxu0 0.0
  %964 = vmatprep.subr.mxu0 0.0
  %965 = vmatpush1.msra.mxu0 0.0
  %966 = vmatprep.subr.mxu0 0.0
  %967 = vmatpush1.msra.mxu0 0.0
  %968 = vmatprep.subr.mxu0 0.0
  %969 = vmatpush1.msra.mxu0 0.0
  %970 = vmatprep.subr.mxu0 0.0
  %971 = vmatpush1.msra.mxu0 0.0
  %972 = vmatprep.subr.mxu0 0.0
  %973 = vmatpush1.msra.mxu0 0.0
  %974 = vmatprep.subr.mxu0 0.0
  %975 = vmatpush1.msra.mxu0 0.0
  %976 = vmatprep.subr.mxu0 0.0
  %977 = vmatpush1.msra.mxu0 0.0
  %978 = vmatprep.subr.mxu0 0.0
  %979 = vmatpush1.msra.mxu0 0.0
  %980 = vmatprep.subr.mxu0 0.0
  %981 = vmatpush1.msra.mxu0 0.0
  %982 = vmatprep.subr.mxu0 0.0
  %983 = vmatpush1.msra.mxu0 0.0
  %984 = vmatprep.subr.mxu0 0.0
  %985 = vmatpush1.msra.mxu0 0.0
  %986 = vmatprep.subr.mxu0 0.0
  %987 = vmatpush1.msra.mxu0 0.0
  %988 = vmatprep.subr.mxu0 0.0
  %989 = vmatpush1.msra.mxu0 0.0
  %990 = vmatprep.subr.mxu0 0.0
  %991 = vmatpush1.msra.mxu0 0.0
  %992 = vmatprep.mubr.f32.mxu0 0.0
  %993 = vmatmul.mubr.f32.gmra.mrb[0].mxu0 %v926
  %v994 = vpop.f32.mrb[0].mxu0
  %v995 = vadd.f32 0.0, %v994
  %v996 = vpop.f32.mrb[0].mxu0
  %997 = vdwg.mxu0
  %v998 = vadd.f32 %v925, %v995
  %v999 = vxor.u32 %v998, 2147483648
  %v1000 = vmul.f32 %v999, 1.442695
  %v1001 = vpow.pop %v1000
  %v1002 = vadd.f32 %v1001, 1.0
  %v1003 = vrcp.pop %v1002
  %v1004 = vmul.f32 1.0, %v1003
  %v1005 = vtanh.pop %v998
  %v1006 = vmul.f32 %v1004, %v913
  %1008 = vrot.lane.b32.xlu0 %v1005, 64
  %v1009 = vpop.permute.xlu0 %1008
  %v1011 = vmul.f32 %v1004, %v1009
  %1013 = vrot.lane.b32.xlu0 %v1011, 32
  %v1014 = vpop.permute.xlu0 %1013
  %v1016 = vadd.f32 %v1006, %v1014
  %v1017 = vtanh.pop %v1016
  %1019 = vrot.lane.b32.xlu0 %v1017, 64
  %v1020 = vpop.permute.xlu0 %1019
  %v1022 = vmul.f32 %v1004, %v1020
  %1024 = vrot.lane.b32.xlu0 %v1022, 32
  %v1025 = vpop.permute.xlu0 %1024
  %1027 = vst.msk [vmem:[%s4 + $0x38] sm:$0xff] %vm45, %v1025
  %s1028 = scalar_lea.vmem %s2, 32
  %v1029 = vld [vmem:[%s1028] sm:$0xff]
  %v1030 = vld [vmem:[%s1028 + $0x8] sm:$0xff]
  %v1031 = vld [vmem:[%s1028 + $0x10] sm:$0xff]
  %v1032 = vld [vmem:[%s1028 + $0x18] sm:$0xff]
  %v1033 = vld [vmem:[#allocation2 + $0x78] sm:$0xff]
  %1034 = vmatprep.subr.mxu0 0.0
  %1035 = vmatpush1.msra.mxu0 %v1029
  %1036 = vmatprep.subr.mxu0 0.0
  %1037 = vmatpush1.msra.mxu0 %v1030
  %1038 = vmatprep.subr.mxu0 0.0
  %1039 = vmatpush1.msra.mxu0 %v1031
  %1040 = vmatprep.subr.mxu0 0.0
  %1041 = vmatpush1.msra.mxu0 %v1032
  %1042 = vmatprep.subr.mxu0 0.0
  %1043 = vmatpush1.msra.mxu0 0.0
  %1044 = vmatprep.subr.mxu0 0.0
  %1045 = vmatpush1.msra.mxu0 0.0
  %1046 = vmatprep.subr.mxu0 0.0
  %1047 = vmatpush1.msra.mxu0 0.0
  %1048 = vmatprep.subr.mxu0 0.0
  %1049 = vmatpush1.msra.mxu0 0.0
  %1050 = vmatprep.subr.mxu0 0.0
  %1051 = vmatpush1.msra.mxu0 0.0
  %1052 = vmatprep.subr.mxu0 0.0
  %1053 = vmatpush1.msra.mxu0 0.0
  %1054 = vmatprep.subr.mxu0 0.0
  %1055 = vmatpush1.msra.mxu0 0.0
  %1056 = vmatprep.subr.mxu0 0.0
  %1057 = vmatpush1.msra.mxu0 0.0
  %1058 = vmatprep.subr.mxu0 0.0
  %1059 = vmatpush1.msra.mxu0 0.0
  %1060 = vmatprep.subr.mxu0 0.0
  %1061 = vmatpush1.msra.mxu0 0.0
  %1062 = vmatprep.subr.mxu0 0.0
  %1063 = vmatpush1.msra.mxu0 0.0
  %1064 = vmatprep.subr.mxu0 0.0
  %1065 = vmatpush1.msra.mxu0 0.0
  %1066 = vmatprep.subr.mxu0 0.0
  %1067 = vmatpush1.msra.mxu0 0.0
  %1068 = vmatprep.subr.mxu0 0.0
  %1069 = vmatpush1.msra.mxu0 0.0
  %1070 = vmatprep.subr.mxu0 0.0
  %1071 = vmatpush1.msra.mxu0 0.0
  %1072 = vmatprep.subr.mxu0 0.0
  %1073 = vmatpush1.msra.mxu0 0.0
  %1074 = vmatprep.subr.mxu0 0.0
  %1075 = vmatpush1.msra.mxu0 0.0
  %1076 = vmatprep.subr.mxu0 0.0
  %1077 = vmatpush1.msra.mxu0 0.0
  %1078 = vmatprep.subr.mxu0 0.0
  %1079 = vmatpush1.msra.mxu0 0.0
  %1080 = vmatprep.subr.mxu0 0.0
  %1081 = vmatpush1.msra.mxu0 0.0
  %1082 = vmatprep.subr.mxu0 0.0
  %1083 = vmatpush1.msra.mxu0 0.0
  %1084 = vmatprep.subr.mxu0 0.0
  %1085 = vmatpush1.msra.mxu0 0.0
  %1086 = vmatprep.subr.mxu0 0.0
  %1087 = vmatpush1.msra.mxu0 0.0
  %1088 = vmatprep.subr.mxu0 0.0
  %1089 = vmatpush1.msra.mxu0 0.0
  %1090 = vmatprep.subr.mxu0 0.0
  %1091 = vmatpush1.msra.mxu0 0.0
  %1092 = vmatprep.subr.mxu0 0.0
  %1093 = vmatpush1.msra.mxu0 0.0
  %1094 = vmatprep.subr.mxu0 0.0
  %1095 = vmatpush1.msra.mxu0 0.0
  %1096 = vmatprep.subr.mxu0 0.0
  %1097 = vmatpush1.msra.mxu0 0.0
  %1098 = vmatprep.mubr.f32.mxu0 0.0
  %1099 = vmatmul.mubr.f32.gmra.mrb[0].mxu0 %v205
  %v1100 = vpop.f32.mrb[0].mxu0
  %v1101 = vadd.f32 0.0, %v1100
  %v1102 = vpop.f32.mrb[0].mxu0
  %1103 = vdwg.mxu0
  %v1104 = vadd.f32 %v1033, %v1101
  %v1105 = vxor.u32 %v1104, 2147483648
  %v1106 = vmul.f32 %v1105, 1.442695
  %v1107 = vpow.pop %v1106
  %v1108 = vadd.f32 %v1107, 1.0
  %v1109 = vrcp.pop %v1108
  %v1110 = vmul.f32 1.0, %v1109
  %v1111 = vtanh.pop %v1104
  %v1112 = vmul.f32 %v1110, 0.0
  %1114 = vrot.lane.b32.xlu0 %v1111, 64
  %v1115 = vpop.permute.xlu0 %1114
  %v1117 = vmul.f32 %v1110, %v1115
  %1119 = vrot.lane.b32.xlu0 %v1117, 32
  %v1120 = vpop.permute.xlu0 %1119
  %v1122 = vadd.f32 %v1112, %v1120
  %v1123 = vtanh.pop %v1122
  %1125 = vrot.lane.b32.xlu0 %v1123, 64
  %v1126 = vpop.permute.xlu0 %1125
  %v1128 = vmul.f32 %v1110, %v1126
  %1130 = vrot.lane.b32.xlu0 %v1128, 64
  %v1131 = vpop.permute.xlu0 %1130
  %vm1133 = vcmask 523520
  %1134 = vst.msk [vmem:[%s4 + $0x38] sm:$0xff] %vm1133, %v1131
  %v1135 = vld [vmem:[#allocation2 + $0x68] sm:$0xff]
  %1136 = vrot.lane.b32.xlu0 %v1128, 32
  %v1137 = vpop.permute.xlu0 %1136
  %v1138 = vsel %vm45, %v1137, 0
  %1140 = vmatprep.subr.mxu0 0.0
  %1141 = vmatpush1.msra.mxu0 %v1029
  %1142 = vmatprep.subr.mxu0 0.0
  %1143 = vmatpush1.msra.mxu0 %v1030
  %1144 = vmatprep.subr.mxu0 0.0
  %1145 = vmatpush1.msra.mxu0 %v1031
  %1146 = vmatprep.subr.mxu0 0.0
  %1147 = vmatpush1.msra.mxu0 %v1032
  %1148 = vmatprep.subr.mxu0 0.0
  %1149 = vmatpush1.msra.mxu0 0.0
  %1150 = vmatprep.subr.mxu0 0.0
  %1151 = vmatpush1.msra.mxu0 0.0
  %1152 = vmatprep.subr.mxu0 0.0
  %1153 = vmatpush1.msra.mxu0 0.0
  %1154 = vmatprep.subr.mxu0 0.0
  %1155 = vmatpush1.msra.mxu0 0.0
  %1156 = vmatprep.subr.mxu0 0.0
  %1157 = vmatpush1.msra.mxu0 0.0
  %1158 = vmatprep.subr.mxu0 0.0
  %1159 = vmatpush1.msra.mxu0 0.0
  %1160 = vmatprep.subr.mxu0 0.0
  %1161 = vmatpush1.msra.mxu0 0.0
  %1162 = vmatprep.subr.mxu0 0.0
  %1163 = vmatpush1.msra.mxu0 0.0
  %1164 = vmatprep.subr.mxu0 0.0
  %1165 = vmatpush1.msra.mxu0 0.0
  %1166 = vmatprep.subr.mxu0 0.0
  %1167 = vmatpush1.msra.mxu0 0.0
  %1168 = vmatprep.subr.mxu0 0.0
  %1169 = vmatpush1.msra.mxu0 0.0
  %1170 = vmatprep.subr.mxu0 0.0
  %1171 = vmatpush1.msra.mxu0 0.0
  %1172 = vmatprep.subr.mxu0 0.0
  %1173 = vmatpush1.msra.mxu0 0.0
  %1174 = vmatprep.subr.mxu0 0.0
  %1175 = vmatpush1.msra.mxu0 0.0
  %1176 = vmatprep.subr.mxu0 0.0
  %1177 = vmatpush1.msra.mxu0 0.0
  %1178 = vmatprep.subr.mxu0 0.0
  %1179 = vmatpush1.msra.mxu0 0.0
  %1180 = vmatprep.subr.mxu0 0.0
  %1181 = vmatpush1.msra.mxu0 0.0
  %1182 = vmatprep.subr.mxu0 0.0
  %1183 = vmatpush1.msra.mxu0 0.0
  %1184 = vmatprep.subr.mxu0 0.0
  %1185 = vmatpush1.msra.mxu0 0.0
  %1186 = vmatprep.subr.mxu0 0.0
  %1187 = vmatpush1.msra.mxu0 0.0
  %1188 = vmatprep.subr.mxu0 0.0
  %1189 = vmatpush1.msra.mxu0 0.0
  %1190 = vmatprep.subr.mxu0 0.0
  %1191 = vmatpush1.msra.mxu0 0.0
  %1192 = vmatprep.subr.mxu0 0.0
  %1193 = vmatpush1.msra.mxu0 0.0
  %1194 = vmatprep.subr.mxu0 0.0
  %1195 = vmatpush1.msra.mxu0 0.0
  %1196 = vmatprep.subr.mxu0 0.0
  %1197 = vmatpush1.msra.mxu0 0.0
  %1198 = vmatprep.subr.mxu0 0.0
  %1199 = vmatpush1.msra.mxu0 0.0
  %1200 = vmatprep.subr.mxu0 0.0
  %1201 = vmatpush1.msra.mxu0 0.0
  %1202 = vmatprep.subr.mxu0 0.0
  %1203 = vmatpush1.msra.mxu0 0.0
  %1204 = vmatprep.mubr.f32.mxu0 0.0
  %1205 = vmatmul.mubr.f32.gmra.mrb[0].mxu0 %v1138
  %v1206 = vpop.f32.mrb[0].mxu0
  %v1207 = vadd.f32 0.0, %v1206
  %v1208 = vpop.f32.mrb[0].mxu0
  %1209 = vdwg.mxu0
  %v1210 = vadd.f32 %v1135, %v1207
  %v1211 = vxor.u32 %v1210, 2147483648
  %v1212 = vmul.f32 %v1211, 1.442695
  %v1213 = vpow.pop %v1212
  %v1214 = vadd.f32 %v1213, 1.0
  %v1215 = vrcp.pop %v1214
  %v1216 = vmul.f32 1.0, %v1215
  %v1217 = vtanh.pop %v1210
  %v1218 = vmul.f32 %v1216, %v1122
  %1220 = vrot.lane.b32.xlu0 %v1217, 64
  %v1221 = vpop.permute.xlu0 %1220
  %v1223 = vmul.f32 %v1216, %v1221
  %1225 = vrot.lane.b32.xlu0 %v1223, 32
  %v1226 = vpop.permute.xlu0 %1225
  %v1228 = vadd.f32 %v1218, %v1226
  %v1229 = vtanh.pop %v1228
  %1231 = vrot.lane.b32.xlu0 %v1229, 64
  %v1232 = vpop.permute.xlu0 %1231
  %v1234 = vmul.f32 %v1216, %v1232
  %1236 = vrot.lane.b32.xlu0 %v1234, 64
  %v1237 = vpop.permute.xlu0 %1236
  %1239 = vst.msk [vmem:[%s4 + $0x30] sm:$0xff] %vm1133, %v1237
  %v1240 = vld [vmem:[#allocation2 + $0x58] sm:$0xff]
  %1241 = vrot.lane.b32.xlu0 %v1234, 32
  %v1242 = vpop.permute.xlu0 %1241
  %v1243 = vsel %vm45, %v1242, 0
  %1245 = vmatprep.subr.mxu0 0.0
  %1246 = vmatpush1.msra.mxu0 %v1029
  %1247 = vmatprep.subr.mxu0 0.0
  %1248 = vmatpush1.msra.mxu0 %v1030
  %1249 = vmatprep.subr.mxu0 0.0
  %1250 = vmatpush1.msra.mxu0 %v1031
  %1251 = vmatprep.subr.mxu0 0.0
  %1252 = vmatpush1.msra.mxu0 %v1032
  %1253 = vmatprep.subr.mxu0 0.0
  %1254 = vmatpush1.msra.mxu0 0.0
  %1255 = vmatprep.subr.mxu0 0.0
  %1256 = vmatpush1.msra.mxu0 0.0
  %1257 = vmatprep.subr.mxu0 0.0
  %1258 = vmatpush1.msra.mxu0 0.0
  %1259 = vmatprep.subr.mxu0 0.0
  %1260 = vmatpush1.msra.mxu0 0.0
  %1261 = vmatprep.subr.mxu0 0.0
  %1262 = vmatpush1.msra.mxu0 0.0
  %1263 = vmatprep.subr.mxu0 0.0
  %1264 = vmatpush1.msra.mxu0 0.0
  %1265 = vmatprep.subr.mxu0 0.0
  %1266 = vmatpush1.msra.mxu0 0.0
  %1267 = vmatprep.subr.mxu0 0.0
  %1268 = vmatpush1.msra.mxu0 0.0
  %1269 = vmatprep.subr.mxu0 0.0
  %1270 = vmatpush1.msra.mxu0 0.0
  %1271 = vmatprep.subr.mxu0 0.0
  %1272 = vmatpush1.msra.mxu0 0.0
  %1273 = vmatprep.subr.mxu0 0.0
  %1274 = vmatpush1.msra.mxu0 0.0
  %1275 = vmatprep.subr.mxu0 0.0
  %1276 = vmatpush1.msra.mxu0 0.0
  %1277 = vmatprep.subr.mxu0 0.0
  %1278 = vmatpush1.msra.mxu0 0.0
  %1279 = vmatprep.subr.mxu0 0.0
  %1280 = vmatpush1.msra.mxu0 0.0
  %1281 = vmatprep.subr.mxu0 0.0
  %1282 = vmatpush1.msra.mxu0 0.0
  %1283 = vmatprep.subr.mxu0 0.0
  %1284 = vmatpush1.msra.mxu0 0.0
  %1285 = vmatprep.subr.mxu0 0.0
  %1286 = vmatpush1.msra.mxu0 0.0
  %1287 = vmatprep.subr.mxu0 0.0
  %1288 = vmatpush1.msra.mxu0 0.0
  %1289 = vmatprep.subr.mxu0 0.0
  %1290 = vmatpush1.msra.mxu0 0.0
  %1291 = vmatprep.subr.mxu0 0.0
  %1292 = vmatpush1.msra.mxu0 0.0
  %1293 = vmatprep.subr.mxu0 0.0
  %1294 = vmatpush1.msra.mxu0 0.0
  %1295 = vmatprep.subr.mxu0 0.0
  %1296 = vmatpush1.msra.mxu0 0.0
  %1297 = vmatprep.subr.mxu0 0.0
  %1298 = vmatpush1.msra.mxu0 0.0
  %1299 = vmatprep.subr.mxu0 0.0
  %1300 = vmatpush1.msra.mxu0 0.0
  %1301 = vmatprep.subr.mxu0 0.0
  %1302 = vmatpush1.msra.mxu0 0.0
  %1303 = vmatprep.subr.mxu0 0.0
  %1304 = vmatpush1.msra.mxu0 0.0
  %1305 = vmatprep.subr.mxu0 0.0
  %1306 = vmatpush1.msra.mxu0 0.0
  %1307 = vmatprep.subr.mxu0 0.0
  %1308 = vmatpush1.msra.mxu0 0.0
  %1309 = vmatprep.mubr.f32.mxu0 0.0
  %1310 = vmatmul.mubr.f32.gmra.mrb[0].mxu0 %v1243
  %v1311 = vpop.f32.mrb[0].mxu0
  %v1312 = vadd.f32 0.0, %v1311
  %v1313 = vpop.f32.mrb[0].mxu0
  %1314 = vdwg.mxu0
  %v1315 = vadd.f32 %v1240, %v1312
  %v1316 = vxor.u32 %v1315, 2147483648
  %v1317 = vmul.f32 %v1316, 1.442695
  %v1318 = vpow.pop %v1317
  %v1319 = vadd.f32 %v1318, 1.0
  %v1320 = vrcp.pop %v1319
  %v1321 = vmul.f32 1.0, %v1320
  %v1322 = vtanh.pop %v1315
  %v1323 = vmul.f32 %v1321, %v1228
  %1325 = vrot.lane.b32.xlu0 %v1322, 64
  %v1326 = vpop.permute.xlu0 %1325
  %v1328 = vmul.f32 %v1321, %v1326
  %1330 = vrot.lane.b32.xlu0 %v1328, 32
  %v1331 = vpop.permute.xlu0 %1330
  %v1333 = vadd.f32 %v1323, %v1331
  %v1334 = vtanh.pop %v1333
  %1336 = vrot.lane.b32.xlu0 %v1334, 64
  %v1337 = vpop.permute.xlu0 %1336
  %v1339 = vmul.f32 %v1321, %v1337
  %1341 = vrot.lane.b32.xlu0 %v1339, 64
  %v1342 = vpop.permute.xlu0 %1341
  %1344 = vst.msk [vmem:[%s4 + $0x28] sm:$0xff] %vm1133, %v1342
  %v1345 = vld [vmem:[#allocation2 + $0x48] sm:$0xff]
  %1346 = vrot.lane.b32.xlu0 %v1339, 32
  %v1347 = vpop.permute.xlu0 %1346
  %v1348 = vsel %vm45, %v1347, 0
  %1350 = vmatprep.subr.mxu0 0.0
  %1351 = vmatpush1.msra.mxu0 %v1029
  %1352 = vmatprep.subr.mxu0 0.0
  %1353 = vmatpush1.msra.mxu0 %v1030
  %1354 = vmatprep.subr.mxu0 0.0
  %1355 = vmatpush1.msra.mxu0 %v1031
  %1356 = vmatprep.subr.mxu0 0.0
  %1357 = vmatpush1.msra.mxu0 %v1032
  %1358 = vmatprep.subr.mxu0 0.0
  %1359 = vmatpush1.msra.mxu0 0.0
  %1360 = vmatprep.subr.mxu0 0.0
  %1361 = vmatpush1.msra.mxu0 0.0
  %1362 = vmatprep.subr.mxu0 0.0
  %1363 = vmatpush1.msra.mxu0 0.0
  %1364 = vmatprep.subr.mxu0 0.0
  %1365 = vmatpush1.msra.mxu0 0.0
  %1366 = vmatprep.subr.mxu0 0.0
  %1367 = vmatpush1.msra.mxu0 0.0
  %1368 = vmatprep.subr.mxu0 0.0
  %1369 = vmatpush1.msra.mxu0 0.0
  %1370 = vmatprep.subr.mxu0 0.0
  %1371 = vmatpush1.msra.mxu0 0.0
  %1372 = vmatprep.subr.mxu0 0.0
  %1373 = vmatpush1.msra.mxu0 0.0
  %1374 = vmatprep.subr.mxu0 0.0
  %1375 = vmatpush1.msra.mxu0 0.0
  %1376 = vmatprep.subr.mxu0 0.0
  %1377 = vmatpush1.msra.mxu0 0.0
  %1378 = vmatprep.subr.mxu0 0.0
  %1379 = vmatpush1.msra.mxu0 0.0
  %1380 = vmatprep.subr.mxu0 0.0
  %1381 = vmatpush1.msra.mxu0 0.0
  %1382 = vmatprep.subr.mxu0 0.0
  %1383 = vmatpush1.msra.mxu0 0.0
  %1384 = vmatprep.subr.mxu0 0.0
  %1385 = vmatpush1.msra.mxu0 0.0
  %1386 = vmatprep.subr.mxu0 0.0
  %1387 = vmatpush1.msra.mxu0 0.0
  %1388 = vmatprep.subr.mxu0 0.0
  %1389 = vmatpush1.msra.mxu0 0.0
  %1390 = vmatprep.subr.mxu0 0.0
  %1391 = vmatpush1.msra.mxu0 0.0
  %1392 = vmatprep.subr.mxu0 0.0
  %1393 = vmatpush1.msra.mxu0 0.0
  %1394 = vmatprep.subr.mxu0 0.0
  %1395 = vmatpush1.msra.mxu0 0.0
  %1396 = vmatprep.subr.mxu0 0.0
  %1397 = vmatpush1.msra.mxu0 0.0
  %1398 = vmatprep.subr.mxu0 0.0
  %1399 = vmatpush1.msra.mxu0 0.0
  %1400 = vmatprep.subr.mxu0 0.0
  %1401 = vmatpush1.msra.mxu0 0.0
  %1402 = vmatprep.subr.mxu0 0.0
  %1403 = vmatpush1.msra.mxu0 0.0
  %1404 = vmatprep.subr.mxu0 0.0
  %1405 = vmatpush1.msra.mxu0 0.0
  %1406 = vmatprep.subr.mxu0 0.0
  %1407 = vmatpush1.msra.mxu0 0.0
  %1408 = vmatprep.subr.mxu0 0.0
  %1409 = vmatpush1.msra.mxu0 0.0
  %1410 = vmatprep.subr.mxu0 0.0
  %1411 = vmatpush1.msra.mxu0 0.0
  %1412 = vmatprep.subr.mxu0 0.0
  %1413 = vmatpush1.msra.mxu0 0.0
  %1414 = vmatprep.mubr.f32.mxu0 0.0
  %1415 = vmatmul.mubr.f32.gmra.mrb[0].mxu0 %v1348
  %v1416 = vpop.f32.mrb[0].mxu0
  %v1417 = vadd.f32 0.0, %v1416
  %v1418 = vpop.f32.mrb[0].mxu0
  %1419 = vdwg.mxu0
  %v1420 = vadd.f32 %v1345, %v1417
  %v1421 = vxor.u32 %v1420, 2147483648
  %v1422 = vmul.f32 %v1421, 1.442695
  %v1423 = vpow.pop %v1422
  %v1424 = vadd.f32 %v1423, 1.0
  %v1425 = vrcp.pop %v1424
  %v1426 = vmul.f32 1.0, %v1425
  %v1427 = vtanh.pop %v1420
  %v1428 = vmul.f32 %v1426, %v1333
  %1430 = vrot.lane.b32.xlu0 %v1427, 64
  %v1431 = vpop.permute.xlu0 %1430
  %v1433 = vmul.f32 %v1426, %v1431
  %1435 = vrot.lane.b32.xlu0 %v1433, 32
  %v1436 = vpop.permute.xlu0 %1435
  %v1438 = vadd.f32 %v1428, %v1436
  %v1439 = vtanh.pop %v1438
  %1441 = vrot.lane.b32.xlu0 %v1439, 64
  %v1442 = vpop.permute.xlu0 %1441
  %v1444 = vmul.f32 %v1426, %v1442
  %1446 = vrot.lane.b32.xlu0 %v1444, 64
  %v1447 = vpop.permute.xlu0 %1446
  %1449 = vst.msk [vmem:[%s4 + $0x20] sm:$0xff] %vm1133, %v1447
  %v1450 = vld [vmem:[#allocation2 + $0x38] sm:$0xff]
  %1451 = vrot.lane.b32.xlu0 %v1444, 32
  %v1452 = vpop.permute.xlu0 %1451
  %v1453 = vsel %vm45, %v1452, 0
  %1455 = vmatprep.subr.mxu0 0.0
  %1456 = vmatpush1.msra.mxu0 %v1029
  %1457 = vmatprep.subr.mxu0 0.0
  %1458 = vmatpush1.msra.mxu0 %v1030
  %1459 = vmatprep.subr.mxu0 0.0
  %1460 = vmatpush1.msra.mxu0 %v1031
  %1461 = vmatprep.subr.mxu0 0.0
  %1462 = vmatpush1.msra.mxu0 %v1032
  %1463 = vmatprep.subr.mxu0 0.0
  %1464 = vmatpush1.msra.mxu0 0.0
  %1465 = vmatprep.subr.mxu0 0.0
  %1466 = vmatpush1.msra.mxu0 0.0
  %1467 = vmatprep.subr.mxu0 0.0
  %1468 = vmatpush1.msra.mxu0 0.0
  %1469 = vmatprep.subr.mxu0 0.0
  %1470 = vmatpush1.msra.mxu0 0.0
  %1471 = vmatprep.subr.mxu0 0.0
  %1472 = vmatpush1.msra.mxu0 0.0
  %1473 = vmatprep.subr.mxu0 0.0
  %1474 = vmatpush1.msra.mxu0 0.0
  %1475 = vmatprep.subr.mxu0 0.0
  %1476 = vmatpush1.msra.mxu0 0.0
  %1477 = vmatprep.subr.mxu0 0.0
  %1478 = vmatpush1.msra.mxu0 0.0
  %1479 = vmatprep.subr.mxu0 0.0
  %1480 = vmatpush1.msra.mxu0 0.0
  %1481 = vmatprep.subr.mxu0 0.0
  %1482 = vmatpush1.msra.mxu0 0.0
  %1483 = vmatprep.subr.mxu0 0.0
  %1484 = vmatpush1.msra.mxu0 0.0
  %1485 = vmatprep.subr.mxu0 0.0
  %1486 = vmatpush1.msra.mxu0 0.0
  %1487 = vmatprep.subr.mxu0 0.0
  %1488 = vmatpush1.msra.mxu0 0.0
  %1489 = vmatprep.subr.mxu0 0.0
  %1490 = vmatpush1.msra.mxu0 0.0
  %1491 = vmatprep.subr.mxu0 0.0
  %1492 = vmatpush1.msra.mxu0 0.0
  %1493 = vmatprep.subr.mxu0 0.0
  %1494 = vmatpush1.msra.mxu0 0.0
  %1495 = vmatprep.subr.mxu0 0.0
  %1496 = vmatpush1.msra.mxu0 0.0
  %1497 = vmatprep.subr.mxu0 0.0
  %1498 = vmatpush1.msra.mxu0 0.0
  %1499 = vmatprep.subr.mxu0 0.0
  %1500 = vmatpush1.msra.mxu0 0.0
  %1501 = vmatprep.subr.mxu0 0.0
  %1502 = vmatpush1.msra.mxu0 0.0
  %1503 = vmatprep.subr.mxu0 0.0
  %1504 = vmatpush1.msra.mxu0 0.0
  %1505 = vmatprep.subr.mxu0 0.0
  %1506 = vmatpush1.msra.mxu0 0.0
  %1507 = vmatprep.subr.mxu0 0.0
  %1508 = vmatpush1.msra.mxu0 0.0
  %1509 = vmatprep.subr.mxu0 0.0
  %1510 = vmatpush1.msra.mxu0 0.0
  %1511 = vmatprep.subr.mxu0 0.0
  %1512 = vmatpush1.msra.mxu0 0.0
  %1513 = vmatprep.subr.mxu0 0.0
  %1514 = vmatpush1.msra.mxu0 0.0
  %1515 = vmatprep.subr.mxu0 0.0
  %1516 = vmatpush1.msra.mxu0 0.0
  %1517 = vmatprep.subr.mxu0 0.0
  %1518 = vmatpush1.msra.mxu0 0.0
  %1519 = vmatprep.mubr.f32.mxu0 0.0
  %1520 = vmatmul.mubr.f32.gmra.mrb[0].mxu0 %v1453
  %v1521 = vpop.f32.mrb[0].mxu0
  %v1522 = vadd.f32 0.0, %v1521
  %v1523 = vpop.f32.mrb[0].mxu0
  %1524 = vdwg.mxu0
  %v1525 = vadd.f32 %v1450, %v1522
  %v1526 = vxor.u32 %v1525, 2147483648
  %v1527 = vmul.f32 %v1526, 1.442695
  %v1528 = vpow.pop %v1527
  %v1529 = vadd.f32 %v1528, 1.0
  %v1530 = vrcp.pop %v1529
  %v1531 = vmul.f32 1.0, %v1530
  %v1532 = vtanh.pop %v1525
  %v1533 = vmul.f32 %v1531, %v1438
  %1535 = vrot.lane.b32.xlu0 %v1532, 64
  %v1536 = vpop.permute.xlu0 %1535
  %v1538 = vmul.f32 %v1531, %v1536
  %1540 = vrot.lane.b32.xlu0 %v1538, 32
  %v1541 = vpop.permute.xlu0 %1540
  %v1543 = vadd.f32 %v1533, %v1541
  %v1544 = vtanh.pop %v1543
  %1546 = vrot.lane.b32.xlu0 %v1544, 64
  %v1547 = vpop.permute.xlu0 %1546
  %v1549 = vmul.f32 %v1531, %v1547
  %1551 = vrot.lane.b32.xlu0 %v1549, 64
  %v1552 = vpop.permute.xlu0 %1551
  %1554 = vst.msk [vmem:[%s4 + $0x18] sm:$0xff] %vm1133, %v1552
  %v1555 = vld [vmem:[#allocation2 + $0x28] sm:$0xff]
  %1556 = vrot.lane.b32.xlu0 %v1549, 32
  %v1557 = vpop.permute.xlu0 %1556
  %v1558 = vsel %vm45, %v1557, 0
  %1560 = vmatprep.subr.mxu0 0.0
  %1561 = vmatpush1.msra.mxu0 %v1029
  %1562 = vmatprep.subr.mxu0 0.0
  %1563 = vmatpush1.msra.mxu0 %v1030
  %1564 = vmatprep.subr.mxu0 0.0
  %1565 = vmatpush1.msra.mxu0 %v1031
  %1566 = vmatprep.subr.mxu0 0.0
  %1567 = vmatpush1.msra.mxu0 %v1032
  %1568 = vmatprep.subr.mxu0 0.0
  %1569 = vmatpush1.msra.mxu0 0.0
  %1570 = vmatprep.subr.mxu0 0.0
  %1571 = vmatpush1.msra.mxu0 0.0
  %1572 = vmatprep.subr.mxu0 0.0
  %1573 = vmatpush1.msra.mxu0 0.0
  %1574 = vmatprep.subr.mxu0 0.0
  %1575 = vmatpush1.msra.mxu0 0.0
  %1576 = vmatprep.subr.mxu0 0.0
  %1577 = vmatpush1.msra.mxu0 0.0
  %1578 = vmatprep.subr.mxu0 0.0
  %1579 = vmatpush1.msra.mxu0 0.0
  %1580 = vmatprep.subr.mxu0 0.0
  %1581 = vmatpush1.msra.mxu0 0.0
  %1582 = vmatprep.subr.mxu0 0.0
  %1583 = vmatpush1.msra.mxu0 0.0
  %1584 = vmatprep.subr.mxu0 0.0
  %1585 = vmatpush1.msra.mxu0 0.0
  %1586 = vmatprep.subr.mxu0 0.0
  %1587 = vmatpush1.msra.mxu0 0.0
  %1588 = vmatprep.subr.mxu0 0.0
  %1589 = vmatpush1.msra.mxu0 0.0
  %1590 = vmatprep.subr.mxu0 0.0
  %1591 = vmatpush1.msra.mxu0 0.0
  %1592 = vmatprep.subr.mxu0 0.0
  %1593 = vmatpush1.msra.mxu0 0.0
  %1594 = vmatprep.subr.mxu0 0.0
  %1595 = vmatpush1.msra.mxu0 0.0
  %1596 = vmatprep.subr.mxu0 0.0
  %1597 = vmatpush1.msra.mxu0 0.0
  %1598 = vmatprep.subr.mxu0 0.0
  %1599 = vmatpush1.msra.mxu0 0.0
  %1600 = vmatprep.subr.mxu0 0.0
  %1601 = vmatpush1.msra.mxu0 0.0
  %1602 = vmatprep.subr.mxu0 0.0
  %1603 = vmatpush1.msra.mxu0 0.0
  %1604 = vmatprep.subr.mxu0 0.0
  %1605 = vmatpush1.msra.mxu0 0.0
  %1606 = vmatprep.subr.mxu0 0.0
  %1607 = vmatpush1.msra.mxu0 0.0
  %1608 = vmatprep.subr.mxu0 0.0
  %1609 = vmatpush1.msra.mxu0 0.0
  %1610 = vmatprep.subr.mxu0 0.0
  %1611 = vmatpush1.msra.mxu0 0.0
  %1612 = vmatprep.subr.mxu0 0.0
  %1613 = vmatpush1.msra.mxu0 0.0
  %1614 = vmatprep.subr.mxu0 0.0
  %1615 = vmatpush1.msra.mxu0 0.0
  %1616 = vmatprep.subr.mxu0 0.0
  %1617 = vmatpush1.msra.mxu0 0.0
  %1618 = vmatprep.subr.mxu0 0.0
  %1619 = vmatpush1.msra.mxu0 0.0
  %1620 = vmatprep.subr.mxu0 0.0
  %1621 = vmatpush1.msra.mxu0 0.0
  %1622 = vmatprep.subr.mxu0 0.0
  %1623 = vmatpush1.msra.mxu0 0.0
  %1624 = vmatprep.mubr.f32.mxu0 0.0
  %1625 = vmatmul.mubr.f32.gmra.mrb[0].mxu0 %v1558
  %v1626 = vpop.f32.mrb[0].mxu0
  %v1627 = vadd.f32 0.0, %v1626
  %v1628 = vpop.f32.mrb[0].mxu0
  %1629 = vdwg.mxu0
  %v1630 = vadd.f32 %v1555, %v1627
  %v1631 = vxor.u32 %v1630, 2147483648
  %v1632 = vmul.f32 %v1631, 1.442695
  %v1633 = vpow.pop %v1632
  %v1634 = vadd.f32 %v1633, 1.0
  %v1635 = vrcp.pop %v1634
  %v1636 = vmul.f32 1.0, %v1635
  %v1637 = vtanh.pop %v1630
  %v1638 = vmul.f32 %v1636, %v1543
  %1640 = vrot.lane.b32.xlu0 %v1637, 64
  %v1641 = vpop.permute.xlu0 %1640
  %v1643 = vmul.f32 %v1636, %v1641
  %1645 = vrot.lane.b32.xlu0 %v1643, 32
  %v1646 = vpop.permute.xlu0 %1645
  %v1648 = vadd.f32 %v1638, %v1646
  %v1649 = vtanh.pop %v1648
  %1651 = vrot.lane.b32.xlu0 %v1649, 64
  %v1652 = vpop.permute.xlu0 %1651
  %v1654 = vmul.f32 %v1636, %v1652
  %1656 = vrot.lane.b32.xlu0 %v1654, 64
  %v1657 = vpop.permute.xlu0 %1656
  %1659 = vst.msk [vmem:[%s4 + $0x10] sm:$0xff] %vm1133, %v1657
  %v1660 = vld [vmem:[#allocation2 + $0x18] sm:$0xff]
  %1661 = vrot.lane.b32.xlu0 %v1654, 32
  %v1662 = vpop.permute.xlu0 %1661
  %v1663 = vsel %vm45, %v1662, 0
  %1665 = vmatprep.subr.mxu0 0.0
  %1666 = vmatpush1.msra.mxu0 %v1029
  %1667 = vmatprep.subr.mxu0 0.0
  %1668 = vmatpush1.msra.mxu0 %v1030
  %1669 = vmatprep.subr.mxu0 0.0
  %1670 = vmatpush1.msra.mxu0 %v1031
  %1671 = vmatprep.subr.mxu0 0.0
  %1672 = vmatpush1.msra.mxu0 %v1032
  %1673 = vmatprep.subr.mxu0 0.0
  %1674 = vmatpush1.msra.mxu0 0.0
  %1675 = vmatprep.subr.mxu0 0.0
  %1676 = vmatpush1.msra.mxu0 0.0
  %1677 = vmatprep.subr.mxu0 0.0
  %1678 = vmatpush1.msra.mxu0 0.0
  %1679 = vmatprep.subr.mxu0 0.0
  %1680 = vmatpush1.msra.mxu0 0.0
  %1681 = vmatprep.subr.mxu0 0.0
  %1682 = vmatpush1.msra.mxu0 0.0
  %1683 = vmatprep.subr.mxu0 0.0
  %1684 = vmatpush1.msra.mxu0 0.0
  %1685 = vmatprep.subr.mxu0 0.0
  %1686 = vmatpush1.msra.mxu0 0.0
  %1687 = vmatprep.subr.mxu0 0.0
  %1688 = vmatpush1.msra.mxu0 0.0
  %1689 = vmatprep.subr.mxu0 0.0
  %1690 = vmatpush1.msra.mxu0 0.0
  %1691 = vmatprep.subr.mxu0 0.0
  %1692 = vmatpush1.msra.mxu0 0.0
  %1693 = vmatprep.subr.mxu0 0.0
  %1694 = vmatpush1.msra.mxu0 0.0
  %1695 = vmatprep.subr.mxu0 0.0
  %1696 = vmatpush1.msra.mxu0 0.0
  %1697 = vmatprep.subr.mxu0 0.0
  %1698 = vmatpush1.msra.mxu0 0.0
  %1699 = vmatprep.subr.mxu0 0.0
  %1700 = vmatpush1.msra.mxu0 0.0
  %1701 = vmatprep.subr.mxu0 0.0
  %1702 = vmatpush1.msra.mxu0 0.0
  %1703 = vmatprep.subr.mxu0 0.0
  %1704 = vmatpush1.msra.mxu0 0.0
  %1705 = vmatprep.subr.mxu0 0.0
  %1706 = vmatpush1.msra.mxu0 0.0
  %1707 = vmatprep.subr.mxu0 0.0
  %1708 = vmatpush1.msra.mxu0 0.0
  %1709 = vmatprep.subr.mxu0 0.0
  %1710 = vmatpush1.msra.mxu0 0.0
  %1711 = vmatprep.subr.mxu0 0.0
  %1712 = vmatpush1.msra.mxu0 0.0
  %1713 = vmatprep.subr.mxu0 0.0
  %1714 = vmatpush1.msra.mxu0 0.0
  %1715 = vmatprep.subr.mxu0 0.0
  %1716 = vmatpush1.msra.mxu0 0.0
  %1717 = vmatprep.subr.mxu0 0.0
  %1718 = vmatpush1.msra.mxu0 0.0
  %1719 = vmatprep.subr.mxu0 0.0
  %1720 = vmatpush1.msra.mxu0 0.0
  %1721 = vmatprep.subr.mxu0 0.0
  %1722 = vmatpush1.msra.mxu0 0.0
  %1723 = vmatprep.subr.mxu0 0.0
  %1724 = vmatpush1.msra.mxu0 0.0
  %1725 = vmatprep.subr.mxu0 0.0
  %1726 = vmatpush1.msra.mxu0 0.0
  %1727 = vmatprep.subr.mxu0 0.0
  %1728 = vmatpush1.msra.mxu0 0.0
  %1729 = vmatprep.mubr.f32.mxu0 0.0
  %1730 = vmatmul.mubr.f32.gmra.mrb[0].mxu0 %v1663
  %v1731 = vpop.f32.mrb[0].mxu0
  %v1732 = vadd.f32 0.0, %v1731
  %v1733 = vpop.f32.mrb[0].mxu0
  %1734 = vdwg.mxu0
  %v1735 = vadd.f32 %v1660, %v1732
  %v1736 = vxor.u32 %v1735, 2147483648
  %v1737 = vmul.f32 %v1736, 1.442695
  %v1738 = vpow.pop %v1737
  %v1739 = vadd.f32 %v1738, 1.0
  %v1740 = vrcp.pop %v1739
  %v1741 = vmul.f32 1.0, %v1740
  %v1742 = vtanh.pop %v1735
  %v1743 = vmul.f32 %v1741, %v1648
  %1745 = vrot.lane.b32.xlu0 %v1742, 64
  %v1746 = vpop.permute.xlu0 %1745
  %v1748 = vmul.f32 %v1741, %v1746
  %1750 = vrot.lane.b32.xlu0 %v1748, 32
  %v1751 = vpop.permute.xlu0 %1750
  %v1753 = vadd.f32 %v1743, %v1751
  %v1754 = vtanh.pop %v1753
  %1756 = vrot.lane.b32.xlu0 %v1754, 64
  %v1757 = vpop.permute.xlu0 %1756
  %v1759 = vmul.f32 %v1741, %v1757
  %1761 = vrot.lane.b32.xlu0 %v1759, 64
  %v1762 = vpop.permute.xlu0 %1761
  %1764 = vst.msk [vmem:[%s4 + $0x8] sm:$0xff] %vm1133, %v1762
  %v1765 = vld [vmem:[#allocation2 + $0x8] sm:$0xff]
  %1766 = vrot.lane.b32.xlu0 %v1759, 32
  %v1767 = vpop.permute.xlu0 %1766
  %v1768 = vsel %vm45, %v1767, 0
  %1770 = vmatprep.subr.mxu0 0.0
  %1771 = vmatpush1.msra.mxu0 %v1029
  %1772 = vmatprep.subr.mxu0 0.0
  %1773 = vmatpush1.msra.mxu0 %v1030
  %1774 = vmatprep.subr.mxu0 0.0
  %1775 = vmatpush1.msra.mxu0 %v1031
  %1776 = vmatprep.subr.mxu0 0.0
  %1777 = vmatpush1.msra.mxu0 %v1032
  %1778 = vmatprep.subr.mxu0 0.0
  %1779 = vmatpush1.msra.mxu0 0.0
  %1780 = vmatprep.subr.mxu0 0.0
  %1781 = vmatpush1.msra.mxu0 0.0
  %1782 = vmatprep.subr.mxu0 0.0
  %1783 = vmatpush1.msra.mxu0 0.0
  %1784 = vmatprep.subr.mxu0 0.0
  %1785 = vmatpush1.msra.mxu0 0.0
  %1786 = vmatprep.subr.mxu0 0.0
  %1787 = vmatpush1.msra.mxu0 0.0
  %1788 = vmatprep.subr.mxu0 0.0
  %1789 = vmatpush1.msra.mxu0 0.0
  %1790 = vmatprep.subr.mxu0 0.0
  %1791 = vmatpush1.msra.mxu0 0.0
  %1792 = vmatprep.subr.mxu0 0.0
  %1793 = vmatpush1.msra.mxu0 0.0
  %1794 = vmatprep.subr.mxu0 0.0
  %1795 = vmatpush1.msra.mxu0 0.0
  %1796 = vmatprep.subr.mxu0 0.0
  %1797 = vmatpush1.msra.mxu0 0.0
  %1798 = vmatprep.subr.mxu0 0.0
  %1799 = vmatpush1.msra.mxu0 0.0
  %1800 = vmatprep.subr.mxu0 0.0
  %1801 = vmatpush1.msra.mxu0 0.0
  %1802 = vmatprep.subr.mxu0 0.0
  %1803 = vmatpush1.msra.mxu0 0.0
  %1804 = vmatprep.subr.mxu0 0.0
  %1805 = vmatpush1.msra.mxu0 0.0
  %1806 = vmatprep.subr.mxu0 0.0
  %1807 = vmatpush1.msra.mxu0 0.0
  %1808 = vmatprep.subr.mxu0 0.0
  %1809 = vmatpush1.msra.mxu0 0.0
  %1810 = vmatprep.subr.mxu0 0.0
  %1811 = vmatpush1.msra.mxu0 0.0
  %1812 = vmatprep.subr.mxu0 0.0
  %1813 = vmatpush1.msra.mxu0 0.0
  %1814 = vmatprep.subr.mxu0 0.0
  %1815 = vmatpush1.msra.mxu0 0.0
  %1816 = vmatprep.subr.mxu0 0.0
  %1817 = vmatpush1.msra.mxu0 0.0
  %1818 = vmatprep.subr.mxu0 0.0
  %1819 = vmatpush1.msra.mxu0 0.0
  %1820 = vmatprep.subr.mxu0 0.0
  %1821 = vmatpush1.msra.mxu0 0.0
  %1822 = vmatprep.subr.mxu0 0.0
  %1823 = vmatpush1.msra.mxu0 0.0
  %1824 = vmatprep.subr.mxu0 0.0
  %1825 = vmatpush1.msra.mxu0 0.0
  %1826 = vmatprep.subr.mxu0 0.0
  %1827 = vmatpush1.msra.mxu0 0.0
  %1828 = vmatprep.subr.mxu0 0.0
  %1829 = vmatpush1.msra.mxu0 0.0
  %1830 = vmatprep.subr.mxu0 0.0
  %1831 = vmatpush1.msra.mxu0 0.0
  %1832 = vmatprep.subr.mxu0 0.0
  %1833 = vmatpush1.msra.mxu0 0.0
  %1834 = vmatprep.mubr.f32.mxu0 0.0
  %1835 = vmatmul.mubr.f32.gmra.mrb[0].mxu0 %v1768
  %v1836 = vpop.f32.mrb[0].mxu0
  %v1837 = vadd.f32 0.0, %v1836
  %v1838 = vpop.f32.mrb[0].mxu0
  %1839 = vdwg.mxu0
  %v1840 = vadd.f32 %v1765, %v1837
  %v1841 = vxor.u32 %v1840, 2147483648
  %v1842 = vmul.f32 %v1841, 1.442695
  %v1843 = vpow.pop %v1842
  %v1844 = vadd.f32 %v1843, 1.0
  %v1845 = vrcp.pop %v1844
  %v1846 = vmul.f32 1.0, %v1845
  %v1847 = vtanh.pop %v1840
  %v1848 = vmul.f32 %v1846, %v1753
  %1850 = vrot.lane.b32.xlu0 %v1847, 64
  %v1851 = vpop.permute.xlu0 %1850
  %v1853 = vmul.f32 %v1846, %v1851
  %1855 = vrot.lane.b32.xlu0 %v1853, 32
  %v1856 = vpop.permute.xlu0 %1855
  %v1858 = vadd.f32 %v1848, %v1856
  %v1859 = vtanh.pop %v1858
  %1861 = vrot.lane.b32.xlu0 %v1859, 64
  %v1862 = vpop.permute.xlu0 %1861
  %v1864 = vmul.f32 %v1846, %v1862
  %1866 = vrot.lane.b32.xlu0 %v1864, 64
  %v1867 = vpop.permute.xlu0 %1866
  %1869 = vst.msk [vmem:[%s4] sm:$0xff] %vm1133, %v1867
  // Predicated region
  $region18: #{lstm_simclr_forward.4} parent=0 // pred_check
    _
  $region19: #{lstm_simclr_forward.4} parent=0 // pred_check_branch
    %1871 = sbr.rel (0) target = $region21
  $region20: #{lstm_simclr_forward.4} parent=0 // pred_region
    _
  $region21: #{lstm_simclr_forward.4} parent=0 // pred_fallthru
    _
  // Predicated region
  $region22: #{lstm_simclr_forward.4} parent=0 // pred_check
    _
  $region23: #{lstm_simclr_forward.4} parent=0 // pred_check_branch
    %1873 = sbr.rel (0) target = $region25
  $region24: #{lstm_simclr_forward.4} parent=0 // pred_region
    _
  $region25: #{lstm_simclr_forward.4} parent=0 // pred_fallthru
    _

// kernel: lstm_simclr_forward.5
$region0: #{lstm_simclr_forward.5}
  #allocation0 [shape = 'u32[]', space=smem, size = 0x4, offset = 0x4, fixed_abs, tag = 'smem constant byte address 0x4 - core index']
  #allocation1 [shape = 'u32[144,128]{1,0:T(1,128)}', space=vmem, size = 0x12000, scoped, tag = 'internal scratch']
  #allocation2 [shape = 'f32[64,256]{1,0:T(8,128)}', space=vmem, size = 0x10000, scoped, tag = 'scratch operand']
  %s0 = inlined_call_operand.vmem [shape: f32[64,64], index: 0, kind: input, shape index: {}]
  %s1 = inlined_call_operand.vmem [shape: f32[64,256], index: 1, kind: input, shape index: {}]
  %s2 = inlined_call_operand.vmem [shape: f32[2,32,128], index: 2, kind: input, shape index: {}]
  %s3 = inlined_call_operand.vmem [shape: f32[1,256], index: 3, kind: input, shape index: {}]
  %s4 = inlined_call_operand.vmem [shape: s32[8,1], index: 4, kind: input, shape index: {}]
  %s5 = inlined_call_operand.vmem [shape: f32[64,32], index: 5, kind: input, shape index: {}]
  %s6 = inlined_call_operand.vmem [shape: f32[1,32], index: 6, kind: input, shape index: {}]
  %s7 = inlined_call_operand.vmem [shape: f32[32,32], index: 7, kind: input, shape index: {}]
  %s8 = inlined_call_operand.vmem [shape: f32[1,32], index: 8, kind: input, shape index: {}]
  %s9 = inlined_call_operand.vmem [shape: f32[8,32], index: 9, kind: output, shape index: {}]
  %s10 = sld [smem:[#allocation0]]
  $region46: #{lstm_simclr_forward.5} parent=0
    _
  %s12 = ssub.s32 1, %s10
  %s13 = scalar_select 0, %s12, %s10
  // Predicated region
  $region2: #{lstm_simclr_forward.5} parent=0 // pred_check
    _
  $region3: #{lstm_simclr_forward.5} parent=0 // pred_check_branch
    %15 = sbr.rel (0) target = $region5
  $region4: #{lstm_simclr_forward.5} parent=0 // pred_region
    _
  $region5: #{lstm_simclr_forward.5} parent=0 // pred_fallthru
    _
  // Predicated region
  $region6: #{lstm_simclr_forward.5} parent=0 // pred_check
    _
  $region7: #{lstm_simclr_forward.5} parent=0 // pred_check_branch
    %17 = sbr.rel (0) target = $region9
  $region8: #{lstm_simclr_forward.5} parent=0 // pred_region
    _
  $region9: #{lstm_simclr_forward.5} parent=0 // pred_fallthru
    _
  // Predicated region
  $region10: #{lstm_simclr_forward.5} parent=0 // pred_check
    _
  $region11: #{lstm_simclr_forward.5} parent=0 // pred_check_branch
    %19 = sbr.rel (0) target = $region13
  $region12: #{lstm_simclr_forward.5} parent=0 // pred_region
    _
  $region13: #{lstm_simclr_forward.5} parent=0 // pred_fallthru
    _
  // Predicated region
  $region14: #{lstm_simclr_forward.5} parent=0 // pred_check
    _
  $region15: #{lstm_simclr_forward.5} parent=0 // pred_check_branch
    %21 = sbr.rel (0) target = $region17
  $region16: #{lstm_simclr_forward.5} parent=0 // pred_region
    _
  $region17: #{lstm_simclr_forward.5} parent=0 // pred_fallthru
    _
  // Predicated region
  $region18: #{lstm_simclr_forward.5} parent=0 // pred_check
    _
  $region19: #{lstm_simclr_forward.5} parent=0 // pred_check_branch
    %23 = sbr.rel (0) target = $region21
  $region20: #{lstm_simclr_forward.5} parent=0 // pred_region
    _
  $region21: #{lstm_simclr_forward.5} parent=0 // pred_fallthru
    _
  // Predicated region
  $region22: #{lstm_simclr_forward.5} parent=0 // pred_check
    _
  $region23: #{lstm_simclr_forward.5} parent=0 // pred_check_branch
    %25 = sbr.rel (0) target = $region25
  $region24: #{lstm_simclr_forward.5} parent=0 // pred_region
    _
  $region25: #{lstm_simclr_forward.5} parent=0 // pred_fallthru
    _
  // Predicated region
  $region26: #{lstm_simclr_forward.5} parent=0 // pred_check
    _
  $region27: #{lstm_simclr_forward.5} parent=0 // pred_check_branch
    %27 = sbr.rel (0) target = $region29
  $region28: #{lstm_simclr_forward.5} parent=0 // pred_region
    _
  $region29: #{lstm_simclr_forward.5} parent=0 // pred_fallthru
    _
  // Predicated region
  $region30: #{lstm_simclr_forward.5} parent=0 // pred_check
    _
  $region31: #{lstm_simclr_forward.5} parent=0 // pred_check_branch
    %29 = sbr.rel (0) target = $region33
  $region32: #{lstm_simclr_forward.5} parent=0 // pred_region
    _
  $region33: #{lstm_simclr_forward.5} parent=0 // pred_fallthru
    _
  // Predicated region
  $region34: #{lstm_simclr_forward.5} parent=0 // pred_check
    _
  $region35: #{lstm_simclr_forward.5} parent=0 // pred_check_branch
    %31 = sbr.rel (0) target = $region37
  $region36: #{lstm_simclr_forward.5} parent=0 // pred_region
    _
  $region37: #{lstm_simclr_forward.5} parent=0 // pred_fallthru
    _
  %v32 = vld [vmem:[%s0] sm:$0xff]
  %v33 = vld [vmem:[%s0 + $0x8] sm:$0xff]
  %v34 = vld [vmem:[%s0 + $0x10] sm:$0xff]
  %v35 = vld [vmem:[%s0 + $0x18] sm:$0xff]
  %v36 = vld [vmem:[%s0 + $0x20] sm:$0xff]
  %v37 = vld [vmem:[%s0 + $0x28] sm:$0xff]
  %v38 = vld [vmem:[%s0 + $0x30] sm:$0xff]
  %v39 = vld [vmem:[%s0 + $0x38] sm:$0xff]
  %v40 = vld [vmem:[%s1] sm:$0xff]
  %v41 = vld [vmem:[%s1 + $0x8] sm:$0xff]
  %v42 = vld [vmem:[%s1 + $0x10] sm:$0xff]
  %v43 = vld [vmem:[%s1 + $0x18] sm:$0xff]
  %v44 = vld [vmem:[%s1 + $0x20] sm:$0xff]
  %v45 = vld [vmem:[%s1 + $0x28] sm:$0xff]
  %v46 = vld [vmem:[%s1 + $0x30] sm:$0xff]
  %v47 = vld [vmem:[%s1 + $0x38] sm:$0xff]
  %v48 = vld [vmem:[%s1 + $0x40] sm:$0xff]
  %v49 = vld [vmem:[%s1 + $0x48] sm:$0xff]
  %v50 = vld [vmem:[%s1 + $0x50] sm:$0xff]
  %v51 = vld [vmem:[%s1 + $0x58] sm:$0xff]
  %v52 = vld [vmem:[%s1 + $0x60] sm:$0xff]
  %v53 = vld [vmem:[%s1 + $0x68] sm:$0xff]
  %v54 = vld [vmem:[%s1 + $0x70] sm:$0xff]
  %v55 = vld [vmem:[%s1 + $0x78] sm:$0xff]
  %v56 = vld [vmem:[%s3] sm:$0x3]
  %v58 = vlaneseq
  %v59 = vshrl.u32 %v58, 7
  %v60 = vsub.s32 0, %v59
  %v61 = vrot.slane %v56, %v60
  %v62 = vlaneseq
  %v63 = vshrl.u32 %v62, 7
  %v64 = vsub.s32 1, %v63
  %v65 = vrot.slane %v56, %v64
  %vm68 = vcmask 523264
  %v70 = vsel %vm68, %v32, 0
  %v73 = vsel %vm68, %v33, 0
  %v76 = vsel %vm68, %v34, 0
  %v79 = vsel %vm68, %v35, 0
  %v82 = vsel %vm68, %v36, 0
  %v85 = vsel %vm68, %v37, 0
  %v88 = vsel %vm68, %v38, 0
  %v91 = vsel %vm68, %v39, 0
  %93 = vmatprep.subr.mxu0 %v41
  %94 = vmatpush1.msra.mxu0 %v40
  %95 = vmatprep.subr.mxu0 %v43
  %96 = vmatpush1.msra.mxu0 %v42
  %97 = vmatprep.subr.mxu0 %v45
  %98 = vmatpush1.msra.mxu0 %v44
  %99 = vmatprep.subr.mxu0 %v47
  %100 = vmatpush1.msra.mxu0 %v46
  %101 = vmatprep.subr.mxu0 %v49
  %102 = vmatpush1.msra.mxu0 %v48
  %103 = vmatprep.subr.mxu0 %v51
  %104 = vmatpush1.msra.mxu0 %v50
  %105 = vmatprep.subr.mxu0 %v53
  %106 = vmatpush1.msra.mxu0 %v52
  %107 = vmatprep.subr.mxu0 %v55
  %108 = vmatpush1.msra.mxu0 %v54
  %109 = vmatprep.subr.mxu0 0.0
  %110 = vmatpush1.msra.mxu0 0.0
  %111 = vmatprep.subr.mxu0 0.0
  %112 = vmatpush1.msra.mxu0 0.0
  %113 = vmatprep.subr.mxu0 0.0
  %114 = vmatpush1.msra.mxu0 0.0
  %115 = vmatprep.subr.mxu0 0.0
  %116 = vmatpush1.msra.mxu0 0.0
  %117 = vmatprep.subr.mxu0 0.0
  %118 = vmatpush1.msra.mxu0 0.0
  %119 = vmatprep.subr.mxu0 0.0
  %120 = vmatpush1.msra.mxu0 0.0
  %121 = vmatprep.subr.mxu0 0.0
  %122 = vmatpush1.msra.mxu0 0.0
  %123 = vmatprep.subr.mxu0 0.0
  %124 = vmatpush1.msra.mxu0 0.0
  %125 = vmatprep.subr.mxu0 0.0
  %126 = vmatpush1.msra.mxu0 0.0
  %127 = vmatprep.subr.mxu0 0.0
  %128 = vmatpush1.msra.mxu0 0.0
  %129 = vmatprep.subr.mxu0 0.0
  %130 = vmatpush1.msra.mxu0 0.0
  %131 = vmatprep.subr.mxu0 0.0
  %132 = vmatpush1.msra.mxu0 0.0
  %133 = vmatprep.subr.mxu0 0.0
  %134 = vmatpush1.msra.mxu0 0.0
  %135 = vmatprep.subr.mxu0 0.0
  %136 = vmatpush1.msra.mxu0 0.0
  %137 = vmatprep.subr.mxu0 0.0
  %138 = vmatpush1.msra.mxu0 0.0
  %139 = vmatprep.subr.mxu0 0.0
  %140 = vmatpush1.msra.mxu0 0.0
  %141 = vmatprep.subr.mxu0 0.0
  %142 = vmatpush1.msra.mxu0 0.0
  %143 = vmatprep.subr.mxu0 0.0
  %144 = vmatpush1.msra.mxu0 0.0
  %145 = vmatprep.subr.mxu0 0.0
  %146 = vmatpush1.msra.mxu0 0.0
  %147 = vmatprep.subr.mxu0 0.0
  %148 = vmatpush1.msra.mxu0 0.0
  %149 = vmatprep.subr.mxu0 0.0
  %150 = vmatpush1.msra.mxu0 0.0
  %151 = vmatprep.subr.mxu0 0.0
  %152 = vmatpush1.msra.mxu0 0.0
  %153 = vmatprep.subr.mxu0 0.0
  %154 = vmatpush1.msra.mxu0 0.0
  %155 = vmatprep.subr.mxu0 0.0
  %156 = vmatpush1.msra.mxu0 0.0
  %157 = vmatprep.mubr.f32.mxu0 0.0
  %158 = vmatmul.mubr.f32.gmra.mrb[0].mxu0 %v70
  %v159 = vpop.f32.mrb[0].mxu0
  %v160 = vadd.f32 %v61, %v159
  %v161 = vpop.f32.mrb[0].mxu0
  %v162 = vadd.f32 %v65, %v161
  %163 = vmatprep.mubr.f32.mxu0 0.0
  %164 = vmatmul.mubr.f32.gmra.mrb[0].mxu0 %v73
  %v165 = vpop.f32.mrb[0].mxu0
  %v166 = vadd.f32 %v61, %v165
  %v167 = vpop.f32.mrb[0].mxu0
  %v168 = vadd.f32 %v65, %v167
  %169 = vmatprep.mubr.f32.mxu0 0.0
  %170 = vmatmul.mubr.f32.gmra.mrb[0].mxu0 %v76
  %v171 = vpop.f32.mrb[0].mxu0
  %v172 = vadd.f32 %v61, %v171
  %v173 = vpop.f32.mrb[0].mxu0
  %v174 = vadd.f32 %v65, %v173
  %175 = vmatprep.mubr.f32.mxu0 0.0
  %176 = vmatmul.mubr.f32.gmra.mrb[0].mxu0 %v79
  %v177 = vpop.f32.mrb[0].mxu0
  %v178 = vadd.f32 %v61, %v177
  %v179 = vpop.f32.mrb[0].mxu0
  %v180 = vadd.f32 %v65, %v179
  %181 = vmatprep.mubr.f32.mxu0 0.0
  %182 = vmatmul.mubr.f32.gmra.mrb[0].mxu0 %v82
  %v183 = vpop.f32.mrb[0].mxu0
  %v184 = vadd.f32 %v61, %v183
  %v185 = vpop.f32.mrb[0].mxu0
  %v186 = vadd.f32 %v65, %v185
  %187 = vmatprep.mubr.f32.mxu0 0.0
  %188 = vmatmul.mubr.f32.gmra.mrb[0].mxu0 %v85
  %v189 = vpop.f32.mrb[0].mxu0
  %v190 = vadd.f32 %v61, %v189
  %v191 = vpop.f32.mrb[0].mxu0
  %v192 = vadd.f32 %v65, %v191
  %193 = vmatprep.mubr.f32.mxu0 0.0
  %194 = vmatmul.mubr.f32.gmra.mrb[0].mxu0 %v88
  %v195 = vpop.f32.mrb[0].mxu0
  %v196 = vadd.f32 %v61, %v195
  %v197 = vpop.f32.mrb[0].mxu0
  %v198 = vadd.f32 %v65, %v197
  %199 = vmatprep.mubr.f32.mxu0 0.0
  %200 = vmatmul.mubr.f32.gmra.mrb[0].mxu0 %v91
  %v201 = vpop.f32.mrb[0].mxu0
  %v202 = vadd.f32 %v61, %v201
  %v203 = vpop.f32.mrb[0].mxu0
  %v204 = vadd.f32 %v65, %v203
  %205 = vdwg.mxu0
  %206 = vst [vmem:[#allocation2] sm:$0xff] %v160
  %207 = vst [vmem:[#allocation2 + $0x8] sm:$0xff] %v162
  %208 = vst [vmem:[#allocation2 + $0x10] sm:$0xff] %v166
  %209 = vst [vmem:[#allocation2 + $0x18] sm:$0xff] %v168
  %210 = vst [vmem:[#allocation2 + $0x20] sm:$0xff] %v172
  %211 = vst [vmem:[#allocation2 + $0x28] sm:$0xff] %v174
  %212 = vst [vmem:[#allocation2 + $0x30] sm:$0xff] %v178
  %213 = vst [vmem:[#allocation2 + $0x38] sm:$0xff] %v180
  %214 = vst [vmem:[#allocation2 + $0x40] sm:$0xff] %v184
  %215 = vst [vmem:[#allocation2 + $0x48] sm:$0xff] %v186
  %216 = vst [vmem:[#allocation2 + $0x50] sm:$0xff] %v190
  %217 = vst [vmem:[#allocation2 + $0x58] sm:$0xff] %v192
  %218 = vst [vmem:[#allocation2 + $0x60] sm:$0xff] %v196
  %219 = vst [vmem:[#allocation2 + $0x68] sm:$0xff] %v198
  %220 = vst [vmem:[#allocation2 + $0x70] sm:$0xff] %v202
  %221 = vst [vmem:[#allocation2 + $0x78] sm:$0xff] %v204
  %v222 = vld [vmem:[%s4] sm:$0xff]
  %v223 = vld [vmem:[%s2] sm:$0xff]
  %v224 = vld [vmem:[%s2 + $0x8] sm:$0xff]
  %v225 = vld [vmem:[%s2 + $0x10] sm:$0xff]
  %v226 = vld [vmem:[%s2 + $0x18] sm:$0xff]
  %v227 = vld [vmem:[#allocation2] sm:$0xff]
  %vm228 = vcmask 261120
  %v230 = vsel %vm228, 0.0, 0
  %232 = vmatprep.subr.mxu0 0.0
  %233 = vmatpush1.msra.mxu0 %v223
  %234 = vmatprep.subr.mxu0 0.0
  %235 = vmatpush1.msra.mxu0 %v224
  %236 = vmatprep.subr.mxu0 0.0
  %237 = vmatpush1.msra.mxu0 %v225
  %238 = vmatprep.subr.mxu0 0.0
  %239 = vmatpush1.msra.mxu0 %v226
  %240 = vmatprep.subr.mxu0 0.0
  %241 = vmatpush1.msra.mxu0 0.0
  %242 = vmatprep.subr.mxu0 0.0
  %243 = vmatpush1.msra.mxu0 0.0
  %244 = vmatprep.subr.mxu0 0.0
  %245 = vmatpush1.msra.mxu0 0.0
  %246 = vmatprep.subr.mxu0 0.0
  %247 = vmatpush1.msra.mxu0 0.0
  %248 = vmatprep.subr.mxu0 0.0
  %249 = vmatpush1.msra.mxu0 0.0
  %250 = vmatprep.subr.mxu0 0.0
  %251 = vmatpush1.msra.mxu0 0.0
  %252 = vmatprep.subr.mxu0 0.0
  %253 = vmatpush1.msra.mxu0 0.0
  %254 = vmatprep.subr.mxu0 0.0
  %255 = vmatpush1.msra.mxu0 0.0
  %256 = vmatprep.subr.mxu0 0.0
  %257 = vmatpush1.msra.mxu0 0.0
  %258 = vmatprep.subr.mxu0 0.0
  %259 = vmatpush1.msra.mxu0 0.0
  %260 = vmatprep.subr.mxu0 0.0
  %261 = vmatpush1.msra.mxu0 0.0
  %262 = vmatprep.subr.mxu0 0.0
  %263 = vmatpush1.msra.mxu0 0.0
  %264 = vmatprep.subr.mxu0 0.0
  %265 = vmatpush1.msra.mxu0 0.0
  %266 = vmatprep.subr.mxu0 0.0
  %267 = vmatpush1.msra.mxu0 0.0
  %268 = vmatprep.subr.mxu0 0.0
  %269 = vmatpush1.msra.mxu0 0.0
  %270 = vmatprep.subr.mxu0 0.0
  %271 = vmatpush1.msra.mxu0 0.0
  %272 = vmatprep.subr.mxu0 0.0
  %273 = vmatpush1.msra.mxu0 0.0
  %274 = vmatprep.subr.mxu0 0.0
  %275 = vmatpush1.msra.mxu0 0.0
  %276 = vmatprep.subr.mxu0 0.0
  %277 = vmatpush1.msra.mxu0 0.0
  %278 = vmatprep.subr.mxu0 0.0
  %279 = vmatpush1.msra.mxu0 0.0
  %280 = vmatprep.subr.mxu0 0.0
  %281 = vmatpush1.msra.mxu0 0.0
  %282 = vmatprep.subr.mxu0 0.0
  %283 = vmatpush1.msra.mxu0 0.0
  %284 = vmatprep.subr.mxu0 0.0
  %285 = vmatpush1.msra.mxu0 0.0
  %286 = vmatprep.subr.mxu0 0.0
  %287 = vmatpush1.msra.mxu0 0.0
  %288 = vmatprep.subr.mxu0 0.0
  %289 = vmatpush1.msra.mxu0 0.0
  %290 = vmatprep.subr.mxu0 0.0
  %291 = vmatpush1.msra.mxu0 0.0
  %292 = vmatprep.subr.mxu0 0.0
  %293 = vmatpush1.msra.mxu0 0.0
  %294 = vmatprep.subr.mxu0 0.0
  %295 = vmatpush1.msra.mxu0 0.0
  %296 = vmatprep.mubr.f32.mxu0 0.0
  %297 = vmatmul.mubr.f32.gmra.mrb[0].mxu0 %v230
  %v298 = vpop.f32.mrb[0].mxu0
  %v299 = vadd.f32 0.0, %v298
  %v300 = vpop.f32.mrb[0].mxu0
  %301 = vdwg.mxu0
  %v302 = vadd.f32 %v227, %v299
  %v303 = vxor.u32 %v302, 2147483648
  %v304 = vmul.f32 %v303, 1.442695
  %v305 = vpow.pop %v304
  %v306 = vadd.f32 %v305, 1.0
  %v307 = vrcp.pop %v306
  %v308 = vmul.f32 1.0, %v307
  %v309 = vtanh.pop %v302
  %v310 = vmul.f32 %v308, 0.0
  %312 = vrot.lane.b32.xlu0 %v309, 64
  %v313 = vpop.permute.xlu0 %312
  %v315 = vmul.f32 %v308, %v313
  %317 = vrot.lane.b32.xlu0 %v315, 32
  %v318 = vpop.permute.xlu0 %317
  %v320 = vadd.f32 %v310, %v318
  %v321 = vtanh.pop %v320
  %323 = vrot.lane.b32.xlu0 %v321, 64
  %v324 = vpop.permute.xlu0 %323
  %v326 = vmul.f32 %v308, %v324
  %vm327 = vcmp.eq.s32.totalorder %v222, 0
  %v328 = vsel %vm327, 1, 0
  %329 = vset.pattern.permute.xlu0 0
  %330 = vperm.xlu0 %329, %v328
  %v331 = vpop.permute.xlu0 %330
  %vm332 = vcmp.eq.s32.totalorder %v331, 1
  %v333 = vsel %vm332, %v326, 0.0
  %v334 = vld [vmem:[#allocation2 + $0x10] sm:$0xff]
  %336 = vrot.lane.b32.xlu0 %v326, 32
  %v337 = vpop.permute.xlu0 %336
  %v338 = vsel %vm228, %v337, 0
  %340 = vmatprep.subr.mxu0 0.0
  %341 = vmatpush1.msra.mxu0 %v223
  %342 = vmatprep.subr.mxu0 0.0
  %343 = vmatpush1.msra.mxu0 %v224
  %344 = vmatprep.subr.mxu0 0.0
  %345 = vmatpush1.msra.mxu0 %v225
  %346 = vmatprep.subr.mxu0 0.0
  %347 = vmatpush1.msra.mxu0 %v226
  %348 = vmatprep.subr.mxu0 0.0
  %349 = vmatpush1.msra.mxu0 0.0
  %350 = vmatprep.subr.mxu0 0.0
  %351 = vmatpush1.msra.mxu0 0.0
  %352 = vmatprep.subr.mxu0 0.0
  %353 = vmatpush1.msra.mxu0 0.0
  %354 = vmatprep.subr.mxu0 0.0
  %355 = vmatpush1.msra.mxu0 0.0
  %356 = vmatprep.subr.mxu0 0.0
  %357 = vmatpush1.msra.mxu0 0.0
  %358 = vmatprep.subr.mxu0 0.0
  %359 = vmatpush1.msra.mxu0 0.0
  %360 = vmatprep.subr.mxu0 0.0
  %361 = vmatpush1.msra.mxu0 0.0
  %362 = vmatprep.subr.mxu0 0.0
  %363 = vmatpush1.msra.mxu0 0.0
  %364 = vmatprep.subr.mxu0 0.0
  %365 = vmatpush1.msra.mxu0 0.0
  %366 = vmatprep.subr.mxu0 0.0
  %367 = vmatpush1.msra.mxu0 0.0
  %368 = vmatprep.subr.mxu0 0.0
  %369 = vmatpush1.msra.mxu0 0.0
  %370 = vmatprep.subr.mxu0 0.0
  %371 = vmatpush1.msra.mxu0 0.0
  %372 = vmatprep.subr.mxu0 0.0
  %373 = vmatpush1.msra.mxu0 0.0
  %374 = vmatprep.subr.mxu0 0.0
  %375 = vmatpush1.msra.mxu0 0.0
  %376 = vmatprep.subr.mxu0 0.0
  %377 = vmatpush1.msra.mxu0 0.0
  %378 = vmatprep.subr.mxu0 0.0
  %379 = vmatpush1.msra.mxu0 0.0
  %380 = vmatprep.subr.mxu0 0.0
  %381 = vmatpush1.msra.mxu0 0.0
  %382 = vmatprep.subr.mxu0 0.0
  %383 = vmatpush1.msra.mxu0 0.0
  %384 = vmatprep.subr.mxu0 0.0
  %385 = vmatpush1.msra.mxu0 0.0
  %386 = vmatprep.subr.mxu0 0.0
  %387 = vmatpush1.msra.mxu0 0.0
  %388 = vmatprep.subr.mxu0 0.0
  %389 = vmatpush1.msra.mxu0 0.0
  %390 = vmatprep.subr.mxu0 0.0
  %391 = vmatpush1.msra.mxu0 0.0
  %392 = vmatprep.subr.mxu0 0.0
  %393 = vmatpush1.msra.mxu0 0.0
  %394 = vmatprep.subr.mxu0 0.0
  %395 = vmatpush1.msra.mxu0 0.0
  %396 = vmatprep.subr.mxu0 0.0
  %397 = vmatpush1.msra.mxu0 0.0
  %398 = vmatprep.subr.mxu0 0.0
  %399 = vmatpush1.msra.mxu0 0.0
  %400 = vmatprep.subr.mxu0 0.0
  %401 = vmatpush1.msra.mxu0 0.0
  %402 = vmatprep.subr.mxu0 0.0
  %403 = vmatpush1.msra.mxu0 0.0
  %404 = vmatprep.mubr.f32.mxu0 0.0
  %405 = vmatmul.mubr.f32.gmra.mrb[0].mxu0 %v338
  %v406 = vpop.f32.mrb[0].mxu0
  %v407 = vadd.f32 0.0, %v406
  %v408 = vpop.f32.mrb[0].mxu0
  %409 = vdwg.mxu0
  %v410 = vadd.f32 %v334, %v407
  %v411 = vxor.u32 %v410, 2147483648
  %v412 = vmul.f32 %v411, 1.442695
  %v413 = vpow.pop %v412
  %v414 = vadd.f32 %v413, 1.0
  %v415 = vrcp.pop %v414
  %v416 = vmul.f32 1.0, %v415
  %v417 = vtanh.pop %v410
  %v418 = vmul.f32 %v416, %v320
  %420 = vrot.lane.b32.xlu0 %v417, 64
  %v421 = vpop.permute.xlu0 %420
  %v423 = vmul.f32 %v416, %v421
  %425 = vrot.lane.b32.xlu0 %v423, 32
  %v426 = vpop.permute.xlu0 %425
  %v428 = vadd.f32 %v418, %v426
  %v429 = vtanh.pop %v428
  %431 = vrot.lane.b32.xlu0 %v429, 64
  %v432 = vpop.permute.xlu0 %431
  %v434 = vmul.f32 %v416, %v432
  %vm435 = vcmp.eq.s32.totalorder %v222, 1
  %v436 = vsel %vm435, 1, 0
  %437 = vset.pattern.permute.xlu0 0
  %438 = vperm.xlu0 %437, %v436
  %v439 = vpop.permute.xlu0 %438
  %vm440 = vcmp.eq.s32.totalorder %v439, 1
  %v441 = vsel %vm440, %v434, %v333
  %v442 = vld [vmem:[#allocation2 + $0x20] sm:$0xff]
  %444 = vrot.lane.b32.xlu0 %v434, 32
  %v445 = vpop.permute.xlu0 %444
  %v446 = vsel %vm228, %v445, 0
  %448 = vmatprep.subr.mxu0 0.0
  %449 = vmatpush1.msra.mxu0 %v223
  %450 = vmatprep.subr.mxu0 0.0
  %451 = vmatpush1.msra.mxu0 %v224
  %452 = vmatprep.subr.mxu0 0.0
  %453 = vmatpush1.msra.mxu0 %v225
  %454 = vmatprep.subr.mxu0 0.0
  %455 = vmatpush1.msra.mxu0 %v226
  %456 = vmatprep.subr.mxu0 0.0
  %457 = vmatpush1.msra.mxu0 0.0
  %458 = vmatprep.subr.mxu0 0.0
  %459 = vmatpush1.msra.mxu0 0.0
  %460 = vmatprep.subr.mxu0 0.0
  %461 = vmatpush1.msra.mxu0 0.0
  %462 = vmatprep.subr.mxu0 0.0
  %463 = vmatpush1.msra.mxu0 0.0
  %464 = vmatprep.subr.mxu0 0.0
  %465 = vmatpush1.msra.mxu0 0.0
  %466 = vmatprep.subr.mxu0 0.0
  %467 = vmatpush1.msra.mxu0 0.0
  %468 = vmatprep.subr.mxu0 0.0
  %469 = vmatpush1.msra.mxu0 0.0
  %470 = vmatprep.subr.mxu0 0.0
  %471 = vmatpush1.msra.mxu0 0.0
  %472 = vmatprep.subr.mxu0 0.0
  %473 = vmatpush1.msra.mxu0 0.0
  %474 = vmatprep.subr.mxu0 0.0
  %475 = vmatpush1.msra.mxu0 0.0
  %476 = vmatprep.subr.mxu0 0.0
  %477 = vmatpush1.msra.mxu0 0.0
  %478 = vmatprep.subr.mxu0 0.0
  %479 = vmatpush1.msra.mxu0 0.0
  %480 = vmatprep.subr.mxu0 0.0
  %481 = vmatpush1.msra.mxu0 0.0
  %482 = vmatprep.subr.mxu0 0.0
  %483 = vmatpush1.msra.mxu0 0.0
  %484 = vmatprep.subr.mxu0 0.0
  %485 = vmatpush1.msra.mxu0 0.0
  %486 = vmatprep.subr.mxu0 0.0
  %487 = vmatpush1.msra.mxu0 0.0
  %488 = vmatprep.subr.mxu0 0.0
  %489 = vmatpush1.msra.mxu0 0.0
  %490 = vmatprep.subr.mxu0 0.0
  %491 = vmatpush1.msra.mxu0 0.0
  %492 = vmatprep.subr.mxu0 0.0
  %493 = vmatpush1.msra.mxu0 0.0
  %494 = vmatprep.subr.mxu0 0.0
  %495 = vmatpush1.msra.mxu0 0.0
  %496 = vmatprep.subr.mxu0 0.0
  %497 = vmatpush1.msra.mxu0 0.0
  %498 = vmatprep.subr.mxu0 0.0
  %499 = vmatpush1.msra.mxu0 0.0
  %500 = vmatprep.subr.mxu0 0.0
  %501 = vmatpush1.msra.mxu0 0.0
  %502 = vmatprep.subr.mxu0 0.0
  %503 = vmatpush1.msra.mxu0 0.0
  %504 = vmatprep.subr.mxu0 0.0
  %505 = vmatpush1.msra.mxu0 0.0
  %506 = vmatprep.subr.mxu0 0.0
  %507 = vmatpush1.msra.mxu0 0.0
  %508 = vmatprep.subr.mxu0 0.0
  %509 = vmatpush1.msra.mxu0 0.0
  %510 = vmatprep.subr.mxu0 0.0
  %511 = vmatpush1.msra.mxu0 0.0
  %512 = vmatprep.mubr.f32.mxu0 0.0
  %513 = vmatmul.mubr.f32.gmra.mrb[0].mxu0 %v446
  %v514 = vpop.f32.mrb[0].mxu0
  %v515 = vadd.f32 0.0, %v514
  %v516 = vpop.f32.mrb[0].mxu0
  %517 = vdwg.mxu0
  %v518 = vadd.f32 %v442, %v515
  %v519 = vxor.u32 %v518, 2147483648
  %v520 = vmul.f32 %v519, 1.442695
  %v521 = vpow.pop %v520
  %v522 = vadd.f32 %v521, 1.0
  %v523 = vrcp.pop %v522
  %v524 = vmul.f32 1.0, %v523
  %v525 = vtanh.pop %v518
  %v526 = vmul.f32 %v524, %v428
  %528 = vrot.lane.b32.xlu0 %v525, 64
  %v529 = vpop.permute.xlu0 %528
  %v531 = vmul.f32 %v524, %v529
  %533 = vrot.lane.b32.xlu0 %v531, 32
  %v534 = vpop.permute.xlu0 %533
  %v536 = vadd.f32 %v526, %v534
  %v537 = vtanh.pop %v536
  %539 = vrot.lane.b32.xlu0 %v537, 64
  %v540 = vpop.permute.xlu0 %539
  %v542 = vmul.f32 %v524, %v540
  %vm543 = vcmp.eq.s32.totalorder %v222, 2
  %v544 = vsel %vm543, 1, 0
  %545 = vset.pattern.permute.xlu0 0
  %546 = vperm.xlu0 %545, %v544
  %v547 = vpop.permute.xlu0 %546
  %vm548 = vcmp.eq.s32.totalorder %v547, 1
  %v549 = vsel %vm548, %v542, %v441
  %v550 = vld [vmem:[#allocation2 + $0x30] sm:$0xff]
  %552 = vrot.lane.b32.xlu0 %v542, 32
  %v553 = vpop.permute.xlu0 %552
  %v554 = vsel %vm228, %v553, 0
  %556 = vmatprep.subr.mxu0 0.0
  %557 = vmatpush1.msra.mxu0 %v223
  %558 = vmatprep.subr.mxu0 0.0
  %559 = vmatpush1.msra.mxu0 %v224
  %560 = vmatprep.subr.mxu0 0.0
  %561 = vmatpush1.msra.mxu0 %v225
  %562 = vmatprep.subr.mxu0 0.0
  %563 = vmatpush1.msra.mxu0 %v226
  %564 = vmatprep.subr.mxu0 0.0
  %565 = vmatpush1.msra.mxu0 0.0
  %566 = vmatprep.subr.mxu0 0.0
  %567 = vmatpush1.msra.mxu0 0.0
  %568 = vmatprep.subr.mxu0 0.0
  %569 = vmatpush1.msra.mxu0 0.0
  %570 = vmatprep.subr.mxu0 0.0
  %571 = vmatpush1.msra.mxu0 0.0
  %572 = vmatprep.subr.mxu0 0.0
  %573 = vmatpush1.msra.mxu0 0.0
  %574 = vmatprep.subr.mxu0 0.0
  %575 = vmatpush1.msra.mxu0 0.0
  %576 = vmatprep.subr.mxu0 0.0
  %577 = vmatpush1.msra.mxu0 0.0
  %578 = vmatprep.subr.mxu0 0.0
  %579 = vmatpush1.msra.mxu0 0.0
  %580 = vmatprep.subr.mxu0 0.0
  %581 = vmatpush1.msra.mxu0 0.0
  %582 = vmatprep.subr.mxu0 0.0
  %583 = vmatpush1.msra.mxu0 0.0
  %584 = vmatprep.subr.mxu0 0.0
  %585 = vmatpush1.msra.mxu0 0.0
  %586 = vmatprep.subr.mxu0 0.0
  %587 = vmatpush1.msra.mxu0 0.0
  %588 = vmatprep.subr.mxu0 0.0
  %589 = vmatpush1.msra.mxu0 0.0
  %590 = vmatprep.subr.mxu0 0.0
  %591 = vmatpush1.msra.mxu0 0.0
  %592 = vmatprep.subr.mxu0 0.0
  %593 = vmatpush1.msra.mxu0 0.0
  %594 = vmatprep.subr.mxu0 0.0
  %595 = vmatpush1.msra.mxu0 0.0
  %596 = vmatprep.subr.mxu0 0.0
  %597 = vmatpush1.msra.mxu0 0.0
  %598 = vmatprep.subr.mxu0 0.0
  %599 = vmatpush1.msra.mxu0 0.0
  %600 = vmatprep.subr.mxu0 0.0
  %601 = vmatpush1.msra.mxu0 0.0
  %602 = vmatprep.subr.mxu0 0.0
  %603 = vmatpush1.msra.mxu0 0.0
  %604 = vmatprep.subr.mxu0 0.0
  %605 = vmatpush1.msra.mxu0 0.0
  %606 = vmatprep.subr.mxu0 0.0
  %607 = vmatpush1.msra.mxu0 0.0
  %608 = vmatprep.subr.mxu0 0.0
  %609 = vmatpush1.msra.mxu0 0.0
  %610 = vmatprep.subr.mxu0 0.0
  %611 = vmatpush1.msra.mxu0 0.0
  %612 = vmatprep.subr.mxu0 0.0
  %613 = vmatpush1.msra.mxu0 0.0
  %614 = vmatprep.subr.mxu0 0.0
  %615 = vmatpush1.msra.mxu0 0.0
  %616 = vmatprep.subr.mxu0 0.0
  %617 = vmatpush1.msra.mxu0 0.0
  %618 = vmatprep.subr.mxu0 0.0
  %619 = vmatpush1.msra.mxu0 0.0
  %620 = vmatprep.mubr.f32.mxu0 0.0
  %621 = vmatmul.mubr.f32.gmra.mrb[0].mxu0 %v554
  %v622 = vpop.f32.mrb[0].mxu0
  %v623 = vadd.f32 0.0, %v622
  %v624 = vpop.f32.mrb[0].mxu0
  %625 = vdwg.mxu0
  %v626 = vadd.f32 %v550, %v623
  %v627 = vxor.u32 %v626, 2147483648
  %v628 = vmul.f32 %v627, 1.442695
  %v629 = vpow.pop %v628
  %v630 = vadd.f32 %v629, 1.0
  %v631 = vrcp.pop %v630
  %v632 = vmul.f32 1.0, %v631
  %v633 = vtanh.pop %v626
  %v634 = vmul.f32 %v632, %v536
  %636 = vrot.lane.b32.xlu0 %v633, 64
  %v637 = vpop.permute.xlu0 %636
  %v639 = vmul.f32 %v632, %v637
  %641 = vrot.lane.b32.xlu0 %v639, 32
  %v642 = vpop.permute.xlu0 %641
  %v644 = vadd.f32 %v634, %v642
  %v645 = vtanh.pop %v644
  %647 = vrot.lane.b32.xlu0 %v645, 64
  %v648 = vpop.permute.xlu0 %647
  %v650 = vmul.f32 %v632, %v648
  %vm651 = vcmp.eq.s32.totalorder %v222, 3
  %v652 = vsel %vm651, 1, 0
  %653 = vset.pattern.permute.xlu0 0
  %654 = vperm.xlu0 %653, %v652
  %v655 = vpop.permute.xlu0 %654
  %vm656 = vcmp.eq.s32.totalorder %v655, 1
  %v657 = vsel %vm656, %v650, %v549
  %v658 = vld [vmem:[#allocation2 + $0x40] sm:$0xff]
  %660 = vrot.lane.b32.xlu0 %v650, 32
  %v661 = vpop.permute.xlu0 %660
  %v662 = vsel %vm228, %v661, 0
  %664 = vmatprep.subr.mxu0 0.0
  %665 = vmatpush1.msra.mxu0 %v223
  %666 = vmatprep.subr.mxu0 0.0
  %667 = vmatpush1.msra.mxu0 %v224
  %668 = vmatprep.subr.mxu0 0.0
  %669 = vmatpush1.msra.mxu0 %v225
  %670 = vmatprep.subr.mxu0 0.0
  %671 = vmatpush1.msra.mxu0 %v226
  %672 = vmatprep.subr.mxu0 0.0
  %673 = vmatpush1.msra.mxu0 0.0
  %674 = vmatprep.subr.mxu0 0.0
  %675 = vmatpush1.msra.mxu0 0.0
  %676 = vmatprep.subr.mxu0 0.0
  %677 = vmatpush1.msra.mxu0 0.0
  %678 = vmatprep.subr.mxu0 0.0
  %679 = vmatpush1.msra.mxu0 0.0
  %680 = vmatprep.subr.mxu0 0.0
  %681 = vmatpush1.msra.mxu0 0.0
  %682 = vmatprep.subr.mxu0 0.0
  %683 = vmatpush1.msra.mxu0 0.0
  %684 = vmatprep.subr.mxu0 0.0
  %685 = vmatpush1.msra.mxu0 0.0
  %686 = vmatprep.subr.mxu0 0.0
  %687 = vmatpush1.msra.mxu0 0.0
  %688 = vmatprep.subr.mxu0 0.0
  %689 = vmatpush1.msra.mxu0 0.0
  %690 = vmatprep.subr.mxu0 0.0
  %691 = vmatpush1.msra.mxu0 0.0
  %692 = vmatprep.subr.mxu0 0.0
  %693 = vmatpush1.msra.mxu0 0.0
  %694 = vmatprep.subr.mxu0 0.0
  %695 = vmatpush1.msra.mxu0 0.0
  %696 = vmatprep.subr.mxu0 0.0
  %697 = vmatpush1.msra.mxu0 0.0
  %698 = vmatprep.subr.mxu0 0.0
  %699 = vmatpush1.msra.mxu0 0.0
  %700 = vmatprep.subr.mxu0 0.0
  %701 = vmatpush1.msra.mxu0 0.0
  %702 = vmatprep.subr.mxu0 0.0
  %703 = vmatpush1.msra.mxu0 0.0
  %704 = vmatprep.subr.mxu0 0.0
  %705 = vmatpush1.msra.mxu0 0.0
  %706 = vmatprep.subr.mxu0 0.0
  %707 = vmatpush1.msra.mxu0 0.0
  %708 = vmatprep.subr.mxu0 0.0
  %709 = vmatpush1.msra.mxu0 0.0
  %710 = vmatprep.subr.mxu0 0.0
  %711 = vmatpush1.msra.mxu0 0.0
  %712 = vmatprep.subr.mxu0 0.0
  %713 = vmatpush1.msra.mxu0 0.0
  %714 = vmatprep.subr.mxu0 0.0
  %715 = vmatpush1.msra.mxu0 0.0
  %716 = vmatprep.subr.mxu0 0.0
  %717 = vmatpush1.msra.mxu0 0.0
  %718 = vmatprep.subr.mxu0 0.0
  %719 = vmatpush1.msra.mxu0 0.0
  %720 = vmatprep.subr.mxu0 0.0
  %721 = vmatpush1.msra.mxu0 0.0
  %722 = vmatprep.subr.mxu0 0.0
  %723 = vmatpush1.msra.mxu0 0.0
  %724 = vmatprep.subr.mxu0 0.0
  %725 = vmatpush1.msra.mxu0 0.0
  %726 = vmatprep.subr.mxu0 0.0
  %727 = vmatpush1.msra.mxu0 0.0
  %728 = vmatprep.mubr.f32.mxu0 0.0
  %729 = vmatmul.mubr.f32.gmra.mrb[0].mxu0 %v662
  %v730 = vpop.f32.mrb[0].mxu0
  %v731 = vadd.f32 0.0, %v730
  %v732 = vpop.f32.mrb[0].mxu0
  %733 = vdwg.mxu0
  %v734 = vadd.f32 %v658, %v731
  %v735 = vxor.u32 %v734, 2147483648
  %v736 = vmul.f32 %v735, 1.442695
  %v737 = vpow.pop %v736
  %v738 = vadd.f32 %v737, 1.0
  %v739 = vrcp.pop %v738
  %v740 = vmul.f32 1.0, %v739
  %v741 = vtanh.pop %v734
  %v742 = vmul.f32 %v740, %v644
  %744 = vrot.lane.b32.xlu0 %v741, 64
  %v745 = vpop.permute.xlu0 %744
  %v747 = vmul.f32 %v740, %v745
  %749 = vrot.lane.b32.xlu0 %v747, 32
  %v750 = vpop.permute.xlu0 %749
  %v752 = vadd.f32 %v742, %v750
  %v753 = vtanh.pop %v752
  %755 = vrot.lane.b32.xlu0 %v753, 64
  %v756 = vpop.permute.xlu0 %755
  %v758 = vmul.f32 %v740, %v756
  %vm759 = vcmp.eq.s32.totalorder %v222, 4
  %v760 = vsel %vm759, 1, 0
  %761 = vset.pattern.permute.xlu0 0
  %762 = vperm.xlu0 %761, %v760
  %v763 = vpop.permute.xlu0 %762
  %vm764 = vcmp.eq.s32.totalorder %v763, 1
  %v765 = vsel %vm764, %v758, %v657
  %v766 = vld [vmem:[#allocation2 + $0x50] sm:$0xff]
  %768 = vrot.lane.b32.xlu0 %v758, 32
  %v769 = vpop.permute.xlu0 %768
  %v770 = vsel %vm228, %v769, 0
  %772 = vmatprep.subr.mxu0 0.0
  %773 = vmatpush1.msra.mxu0 %v223
  %774 = vmatprep.subr.mxu0 0.0
  %775 = vmatpush1.msra.mxu0 %v224
  %776 = vmatprep.subr.mxu0 0.0
  %777 = vmatpush1.msra.mxu0 %v225
  %778 = vmatprep.subr.mxu0 0.0
  %779 = vmatpush1.msra.mxu0 %v226
  %780 = vmatprep.subr.mxu0 0.0
  %781 = vmatpush1.msra.mxu0 0.0
  %782 = vmatprep.subr.mxu0 0.0
  %783 = vmatpush1.msra.mxu0 0.0
  %784 = vmatprep.subr.mxu0 0.0
  %785 = vmatpush1.msra.mxu0 0.0
  %786 = vmatprep.subr.mxu0 0.0
  %787 = vmatpush1.msra.mxu0 0.0
  %788 = vmatprep.subr.mxu0 0.0
  %789 = vmatpush1.msra.mxu0 0.0
  %790 = vmatprep.subr.mxu0 0.0
  %791 = vmatpush1.msra.mxu0 0.0
  %792 = vmatprep.subr.mxu0 0.0
  %793 = vmatpush1.msra.mxu0 0.0
  %794 = vmatprep.subr.mxu0 0.0
  %795 = vmatpush1.msra.mxu0 0.0
  %796 = vmatprep.subr.mxu0 0.0
  %797 = vmatpush1.msra.mxu0 0.0
  %798 = vmatprep.subr.mxu0 0.0
  %799 = vmatpush1.msra.mxu0 0.0
  %800 = vmatprep.subr.mxu0 0.0
  %801 = vmatpush1.msra.mxu0 0.0
  %802 = vmatprep.subr.mxu0 0.0
  %803 = vmatpush1.msra.mxu0 0.0
  %804 = vmatprep.subr.mxu0 0.0
  %805 = vmatpush1.msra.mxu0 0.0
  %806 = vmatprep.subr.mxu0 0.0
  %807 = vmatpush1.msra.mxu0 0.0
  %808 = vmatprep.subr.mxu0 0.0
  %809 = vmatpush1.msra.mxu0 0.0
  %810 = vmatprep.subr.mxu0 0.0
  %811 = vmatpush1.msra.mxu0 0.0
  %812 = vmatprep.subr.mxu0 0.0
  %813 = vmatpush1.msra.mxu0 0.0
  %814 = vmatprep.subr.mxu0 0.0
  %815 = vmatpush1.msra.mxu0 0.0
  %816 = vmatprep.subr.mxu0 0.0
  %817 = vmatpush1.msra.mxu0 0.0
  %818 = vmatprep.subr.mxu0 0.0
  %819 = vmatpush1.msra.mxu0 0.0
  %820 = vmatprep.subr.mxu0 0.0
  %821 = vmatpush1.msra.mxu0 0.0
  %822 = vmatprep.subr.mxu0 0.0
  %823 = vmatpush1.msra.mxu0 0.0
  %824 = vmatprep.subr.mxu0 0.0
  %825 = vmatpush1.msra.mxu0 0.0
  %826 = vmatprep.subr.mxu0 0.0
  %827 = vmatpush1.msra.mxu0 0.0
  %828 = vmatprep.subr.mxu0 0.0
  %829 = vmatpush1.msra.mxu0 0.0
  %830 = vmatprep.subr.mxu0 0.0
  %831 = vmatpush1.msra.mxu0 0.0
  %832 = vmatprep.subr.mxu0 0.0
  %833 = vmatpush1.msra.mxu0 0.0
  %834 = vmatprep.subr.mxu0 0.0
  %835 = vmatpush1.msra.mxu0 0.0
  %836 = vmatprep.mubr.f32.mxu0 0.0
  %837 = vmatmul.mubr.f32.gmra.mrb[0].mxu0 %v770
  %v838 = vpop.f32.mrb[0].mxu0
  %v839 = vadd.f32 0.0, %v838
  %v840 = vpop.f32.mrb[0].mxu0
  %841 = vdwg.mxu0
  %v842 = vadd.f32 %v766, %v839
  %v843 = vxor.u32 %v842, 2147483648
  %v844 = vmul.f32 %v843, 1.442695
  %v845 = vpow.pop %v844
  %v846 = vadd.f32 %v845, 1.0
  %v847 = vrcp.pop %v846
  %v848 = vmul.f32 1.0, %v847
  %v849 = vtanh.pop %v842
  %v850 = vmul.f32 %v848, %v752
  %852 = vrot.lane.b32.xlu0 %v849, 64
  %v853 = vpop.permute.xlu0 %852
  %v855 = vmul.f32 %v848, %v853
  %857 = vrot.lane.b32.xlu0 %v855, 32
  %v858 = vpop.permute.xlu0 %857
  %v860 = vadd.f32 %v850, %v858
  %v861 = vtanh.pop %v860
  %863 = vrot.lane.b32.xlu0 %v861, 64
  %v864 = vpop.permute.xlu0 %863
  %v866 = vmul.f32 %v848, %v864
  %vm867 = vcmp.eq.s32.totalorder %v222, 5
  %v868 = vsel %vm867, 1, 0
  %869 = vset.pattern.permute.xlu0 0
  %870 = vperm.xlu0 %869, %v868
  %v871 = vpop.permute.xlu0 %870
  %vm872 = vcmp.eq.s32.totalorder %v871, 1
  %v873 = vsel %vm872, %v866, %v765
  %v874 = vld [vmem:[#allocation2 + $0x60] sm:$0xff]
  %876 = vrot.lane.b32.xlu0 %v866, 32
  %v877 = vpop.permute.xlu0 %876
  %v878 = vsel %vm228, %v877, 0
  %880 = vmatprep.subr.mxu0 0.0
  %881 = vmatpush1.msra.mxu0 %v223
  %882 = vmatprep.subr.mxu0 0.0
  %883 = vmatpush1.msra.mxu0 %v224
  %884 = vmatprep.subr.mxu0 0.0
  %885 = vmatpush1.msra.mxu0 %v225
  %886 = vmatprep.subr.mxu0 0.0
  %887 = vmatpush1.msra.mxu0 %v226
  %888 = vmatprep.subr.mxu0 0.0
  %889 = vmatpush1.msra.mxu0 0.0
  %890 = vmatprep.subr.mxu0 0.0
  %891 = vmatpush1.msra.mxu0 0.0
  %892 = vmatprep.subr.mxu0 0.0
  %893 = vmatpush1.msra.mxu0 0.0
  %894 = vmatprep.subr.mxu0 0.0
  %895 = vmatpush1.msra.mxu0 0.0
  %896 = vmatprep.subr.mxu0 0.0
  %897 = vmatpush1.msra.mxu0 0.0
  %898 = vmatprep.subr.mxu0 0.0
  %899 = vmatpush1.msra.mxu0 0.0
  %900 = vmatprep.subr.mxu0 0.0
  %901 = vmatpush1.msra.mxu0 0.0
  %902 = vmatprep.subr.mxu0 0.0
  %903 = vmatpush1.msra.mxu0 0.0
  %904 = vmatprep.subr.mxu0 0.0
  %905 = vmatpush1.msra.mxu0 0.0
  %906 = vmatprep.subr.mxu0 0.0
  %907 = vmatpush1.msra.mxu0 0.0
  %908 = vmatprep.subr.mxu0 0.0
  %909 = vmatpush1.msra.mxu0 0.0
  %910 = vmatprep.subr.mxu0 0.0
  %911 = vmatpush1.msra.mxu0 0.0
  %912 = vmatprep.subr.mxu0 0.0
  %913 = vmatpush1.msra.mxu0 0.0
  %914 = vmatprep.subr.mxu0 0.0
  %915 = vmatpush1.msra.mxu0 0.0
  %916 = vmatprep.subr.mxu0 0.0
  %917 = vmatpush1.msra.mxu0 0.0
  %918 = vmatprep.subr.mxu0 0.0
  %919 = vmatpush1.msra.mxu0 0.0
  %920 = vmatprep.subr.mxu0 0.0
  %921 = vmatpush1.msra.mxu0 0.0
  %922 = vmatprep.subr.mxu0 0.0
  %923 = vmatpush1.msra.mxu0 0.0
  %924 = vmatprep.subr.mxu0 0.0
  %925 = vmatpush1.msra.mxu0 0.0
  %926 = vmatprep.subr.mxu0 0.0
  %927 = vmatpush1.msra.mxu0 0.0
  %928 = vmatprep.subr.mxu0 0.0
  %929 = vmatpush1.msra.mxu0 0.0
  %930 = vmatprep.subr.mxu0 0.0
  %931 = vmatpush1.msra.mxu0 0.0
  %932 = vmatprep.subr.mxu0 0.0
  %933 = vmatpush1.msra.mxu0 0.0
  %934 = vmatprep.subr.mxu0 0.0
  %935 = vmatpush1.msra.mxu0 0.0
  %936 = vmatprep.subr.mxu0 0.0
  %937 = vmatpush1.msra.mxu0 0.0
  %938 = vmatprep.subr.mxu0 0.0
  %939 = vmatpush1.msra.mxu0 0.0
  %940 = vmatprep.subr.mxu0 0.0
  %941 = vmatpush1.msra.mxu0 0.0
  %942 = vmatprep.subr.mxu0 0.0
  %943 = vmatpush1.msra.mxu0 0.0
  %944 = vmatprep.mubr.f32.mxu0 0.0
  %945 = vmatmul.mubr.f32.gmra.mrb[0].mxu0 %v878
  %v946 = vpop.f32.mrb[0].mxu0
  %v947 = vadd.f32 0.0, %v946
  %v948 = vpop.f32.mrb[0].mxu0
  %949 = vdwg.mxu0
  %v950 = vadd.f32 %v874, %v947
  %v951 = vxor.u32 %v950, 2147483648
  %v952 = vmul.f32 %v951, 1.442695
  %v953 = vpow.pop %v952
  %v954 = vadd.f32 %v953, 1.0
  %v955 = vrcp.pop %v954
  %v956 = vmul.f32 1.0, %v955
  %v957 = vtanh.pop %v950
  %v958 = vmul.f32 %v956, %v860
  %960 = vrot.lane.b32.xlu0 %v957, 64
  %v961 = vpop.permute.xlu0 %960
  %v963 = vmul.f32 %v956, %v961
  %965 = vrot.lane.b32.xlu0 %v963, 32
  %v966 = vpop.permute.xlu0 %965
  %v968 = vadd.f32 %v958, %v966
  %v969 = vtanh.pop %v968
  %971 = vrot.lane.b32.xlu0 %v969, 64
  %v972 = vpop.permute.xlu0 %971
  %v974 = vmul.f32 %v956, %v972
  %vm975 = vcmp.eq.s32.totalorder %v222, 6
  %v976 = vsel %vm975, 1, 0
  %977 = vset.pattern.permute.xlu0 0
  %978 = vperm.xlu0 %977, %v976
  %v979 = vpop.permute.xlu0 %978
  %vm980 = vcmp.eq.s32.totalorder %v979, 1
  %v981 = vsel %vm980, %v974, %v873
  %v982 = vld [vmem:[#allocation2 + $0x70] sm:$0xff]
  %984 = vrot.lane.b32.xlu0 %v974, 32
  %v985 = vpop.permute.xlu0 %984
  %v986 = vsel %vm228, %v985, 0
  %988 = vmatprep.subr.mxu0 0.0
  %989 = vmatpush1.msra.mxu0 %v223
  %990 = vmatprep.subr.mxu0 0.0
  %991 = vmatpush1.msra.mxu0 %v224
  %992 = vmatprep.subr.mxu0 0.0
  %993 = vmatpush1.msra.mxu0 %v225
  %994 = vmatprep.subr.mxu0 0.0
  %995 = vmatpush1.msra.mxu0 %v226
  %996 = vmatprep.subr.mxu0 0.0
  %997 = vmatpush1.msra.mxu0 0.0
  %998 = vmatprep.subr.mxu0 0.0
  %999 = vmatpush1.msra.mxu0 0.0
  %1000 = vmatprep.subr.mxu0 0.0
  %1001 = vmatpush1.msra.mxu0 0.0
  %1002 = vmatprep.subr.mxu0 0.0
  %1003 = vmatpush1.msra.mxu0 0.0
  %1004 = vmatprep.subr.mxu0 0.0
  %1005 = vmatpush1.msra.mxu0 0.0
  %1006 = vmatprep.subr.mxu0 0.0
  %1007 = vmatpush1.msra.mxu0 0.0
  %1008 = vmatprep.subr.mxu0 0.0
  %1009 = vmatpush1.msra.mxu0 0.0
  %1010 = vmatprep.subr.mxu0 0.0
  %1011 = vmatpush1.msra.mxu0 0.0
  %1012 = vmatprep.subr.mxu0 0.0
  %1013 = vmatpush1.msra.mxu0 0.0
  %1014 = vmatprep.subr.mxu0 0.0
  %1015 = vmatpush1.msra.mxu0 0.0
  %1016 = vmatprep.subr.mxu0 0.0
  %1017 = vmatpush1.msra.mxu0 0.0
  %1018 = vmatprep.subr.mxu0 0.0
  %1019 = vmatpush1.msra.mxu0 0.0
  %1020 = vmatprep.subr.mxu0 0.0
  %1021 = vmatpush1.msra.mxu0 0.0
  %1022 = vmatprep.subr.mxu0 0.0
  %1023 = vmatpush1.msra.mxu0 0.0
  %1024 = vmatprep.subr.mxu0 0.0
  %1025 = vmatpush1.msra.mxu0 0.0
  %1026 = vmatprep.subr.mxu0 0.0
  %1027 = vmatpush1.msra.mxu0 0.0
  %1028 = vmatprep.subr.mxu0 0.0
  %1029 = vmatpush1.msra.mxu0 0.0
  %1030 = vmatprep.subr.mxu0 0.0
  %1031 = vmatpush1.msra.mxu0 0.0
  %1032 = vmatprep.subr.mxu0 0.0
  %1033 = vmatpush1.msra.mxu0 0.0
  %1034 = vmatprep.subr.mxu0 0.0
  %1035 = vmatpush1.msra.mxu0 0.0
  %1036 = vmatprep.subr.mxu0 0.0
  %1037 = vmatpush1.msra.mxu0 0.0
  %1038 = vmatprep.subr.mxu0 0.0
  %1039 = vmatpush1.msra.mxu0 0.0
  %1040 = vmatprep.subr.mxu0 0.0
  %1041 = vmatpush1.msra.mxu0 0.0
  %1042 = vmatprep.subr.mxu0 0.0
  %1043 = vmatpush1.msra.mxu0 0.0
  %1044 = vmatprep.subr.mxu0 0.0
  %1045 = vmatpush1.msra.mxu0 0.0
  %1046 = vmatprep.subr.mxu0 0.0
  %1047 = vmatpush1.msra.mxu0 0.0
  %1048 = vmatprep.subr.mxu0 0.0
  %1049 = vmatpush1.msra.mxu0 0.0
  %1050 = vmatprep.subr.mxu0 0.0
  %1051 = vmatpush1.msra.mxu0 0.0
  %1052 = vmatprep.mubr.f32.mxu0 0.0
  %1053 = vmatmul.mubr.f32.gmra.mrb[0].mxu0 %v986
  %v1054 = vpop.f32.mrb[0].mxu0
  %v1055 = vadd.f32 0.0, %v1054
  %v1056 = vpop.f32.mrb[0].mxu0
  %1057 = vdwg.mxu0
  %v1058 = vadd.f32 %v982, %v1055
  %v1059 = vxor.u32 %v1058, 2147483648
  %v1060 = vmul.f32 %v1059, 1.442695
  %v1061 = vpow.pop %v1060
  %v1062 = vadd.f32 %v1061, 1.0
  %v1063 = vrcp.pop %v1062
  %v1064 = vmul.f32 1.0, %v1063
  %v1065 = vtanh.pop %v1058
  %v1066 = vmul.f32 %v1064, %v968
  %1068 = vrot.lane.b32.xlu0 %v1065, 64
  %v1069 = vpop.permute.xlu0 %1068
  %v1071 = vmul.f32 %v1064, %v1069
  %1073 = vrot.lane.b32.xlu0 %v1071, 32
  %v1074 = vpop.permute.xlu0 %1073
  %v1076 = vadd.f32 %v1066, %v1074
  %v1077 = vtanh.pop %v1076
  %1079 = vrot.lane.b32.xlu0 %v1077, 64
  %v1080 = vpop.permute.xlu0 %1079
  %v1082 = vmul.f32 %v1064, %v1080
  %vm1083 = vcmp.eq.s32.totalorder %v222, 7
  %v1084 = vsel %vm1083, 1, 0
  %1085 = vset.pattern.permute.xlu0 0
  %1086 = vperm.xlu0 %1085, %v1084
  %v1087 = vpop.permute.xlu0 %1086
  %vm1088 = vcmp.eq.s32.totalorder %v1087, 1
  %v1089 = vsel %vm1088, %v1082, %v981
  %s1090 = scalar_lea.vmem %s2, 32
  %v1091 = vld [vmem:[%s1090] sm:$0xff]
  %v1092 = vld [vmem:[%s1090 + $0x8] sm:$0xff]
  %v1093 = vld [vmem:[%s1090 + $0x10] sm:$0xff]
  %v1094 = vld [vmem:[%s1090 + $0x18] sm:$0xff]
  %v1095 = vld [vmem:[#allocation2 + $0x78] sm:$0xff]
  %1096 = vmatprep.subr.mxu0 0.0
  %1097 = vmatpush1.msra.mxu0 %v1091
  %1098 = vmatprep.subr.mxu0 0.0
  %1099 = vmatpush1.msra.mxu0 %v1092
  %1100 = vmatprep.subr.mxu0 0.0
  %1101 = vmatpush1.msra.mxu0 %v1093
  %1102 = vmatprep.subr.mxu0 0.0
  %1103 = vmatpush1.msra.mxu0 %v1094
  %1104 = vmatprep.subr.mxu0 0.0
  %1105 = vmatpush1.msra.mxu0 0.0
  %1106 = vmatprep.subr.mxu0 0.0
  %1107 = vmatpush1.msra.mxu0 0.0
  %1108 = vmatprep.subr.mxu0 0.0
  %1109 = vmatpush1.msra.mxu0 0.0
  %1110 = vmatprep.subr.mxu0 0.0
  %1111 = vmatpush1.msra.mxu0 0.0
  %1112 = vmatprep.subr.mxu0 0.0
  %1113 = vmatpush1.msra.mxu0 0.0
  %1114 = vmatprep.subr.mxu0 0.0
  %1115 = vmatpush1.msra.mxu0 0.0
  %1116 = vmatprep.subr.mxu0 0.0
  %1117 = vmatpush1.msra.mxu0 0.0
  %1118 = vmatprep.subr.mxu0 0.0
  %1119 = vmatpush1.msra.mxu0 0.0
  %1120 = vmatprep.subr.mxu0 0.0
  %1121 = vmatpush1.msra.mxu0 0.0
  %1122 = vmatprep.subr.mxu0 0.0
  %1123 = vmatpush1.msra.mxu0 0.0
  %1124 = vmatprep.subr.mxu0 0.0
  %1125 = vmatpush1.msra.mxu0 0.0
  %1126 = vmatprep.subr.mxu0 0.0
  %1127 = vmatpush1.msra.mxu0 0.0
  %1128 = vmatprep.subr.mxu0 0.0
  %1129 = vmatpush1.msra.mxu0 0.0
  %1130 = vmatprep.subr.mxu0 0.0
  %1131 = vmatpush1.msra.mxu0 0.0
  %1132 = vmatprep.subr.mxu0 0.0
  %1133 = vmatpush1.msra.mxu0 0.0
  %1134 = vmatprep.subr.mxu0 0.0
  %1135 = vmatpush1.msra.mxu0 0.0
  %1136 = vmatprep.subr.mxu0 0.0
  %1137 = vmatpush1.msra.mxu0 0.0
  %1138 = vmatprep.subr.mxu0 0.0
  %1139 = vmatpush1.msra.mxu0 0.0
  %1140 = vmatprep.subr.mxu0 0.0
  %1141 = vmatpush1.msra.mxu0 0.0
  %1142 = vmatprep.subr.mxu0 0.0
  %1143 = vmatpush1.msra.mxu0 0.0
  %1144 = vmatprep.subr.mxu0 0.0
  %1145 = vmatpush1.msra.mxu0 0.0
  %1146 = vmatprep.subr.mxu0 0.0
  %1147 = vmatpush1.msra.mxu0 0.0
  %1148 = vmatprep.subr.mxu0 0.0
  %1149 = vmatpush1.msra.mxu0 0.0
  %1150 = vmatprep.subr.mxu0 0.0
  %1151 = vmatpush1.msra.mxu0 0.0
  %1152 = vmatprep.subr.mxu0 0.0
  %1153 = vmatpush1.msra.mxu0 0.0
  %1154 = vmatprep.subr.mxu0 0.0
  %1155 = vmatpush1.msra.mxu0 0.0
  %1156 = vmatprep.subr.mxu0 0.0
  %1157 = vmatpush1.msra.mxu0 0.0
  %1158 = vmatprep.subr.mxu0 0.0
  %1159 = vmatpush1.msra.mxu0 0.0
  %1160 = vmatprep.mubr.f32.mxu0 0.0
  %1161 = vmatmul.mubr.f32.gmra.mrb[0].mxu0 %v230
  %v1162 = vpop.f32.mrb[0].mxu0
  %v1163 = vadd.f32 0.0, %v1162
  %v1164 = vpop.f32.mrb[0].mxu0
  %1165 = vdwg.mxu0
  %v1166 = vadd.f32 %v1095, %v1163
  %v1167 = vxor.u32 %v1166, 2147483648
  %v1168 = vmul.f32 %v1167, 1.442695
  %v1169 = vpow.pop %v1168
  %v1170 = vadd.f32 %v1169, 1.0
  %v1171 = vrcp.pop %v1170
  %v1172 = vmul.f32 1.0, %v1171
  %v1173 = vtanh.pop %v1166
  %v1174 = vmul.f32 %v1172, 0.0
  %1176 = vrot.lane.b32.xlu0 %v1173, 64
  %v1177 = vpop.permute.xlu0 %1176
  %v1179 = vmul.f32 %v1172, %v1177
  %1181 = vrot.lane.b32.xlu0 %v1179, 32
  %v1182 = vpop.permute.xlu0 %1181
  %v1184 = vadd.f32 %v1174, %v1182
  %v1185 = vtanh.pop %v1184
  %1187 = vrot.lane.b32.xlu0 %v1185, 64
  %v1188 = vpop.permute.xlu0 %1187
  %v1190 = vmul.f32 %v1172, %v1188
  %v1191 = vsel %vm1088, %v1190, 0.0
  %v1192 = vld [vmem:[#allocation2 + $0x68] sm:$0xff]
  %1194 = vrot.lane.b32.xlu0 %v1190, 32
  %v1195 = vpop.permute.xlu0 %1194
  %v1196 = vsel %vm228, %v1195, 0
  %1198 = vmatprep.subr.mxu0 0.0
  %1199 = vmatpush1.msra.mxu0 %v1091
  %1200 = vmatprep.subr.mxu0 0.0
  %1201 = vmatpush1.msra.mxu0 %v1092
  %1202 = vmatprep.subr.mxu0 0.0
  %1203 = vmatpush1.msra.mxu0 %v1093
  %1204 = vmatprep.subr.mxu0 0.0
  %1205 = vmatpush1.msra.mxu0 %v1094
  %1206 = vmatprep.subr.mxu0 0.0
  %1207 = vmatpush1.msra.mxu0 0.0
  %1208 = vmatprep.subr.mxu0 0.0
  %1209 = vmatpush1.msra.mxu0 0.0
  %1210 = vmatprep.subr.mxu0 0.0
  %1211 = vmatpush1.msra.mxu0 0.0
  %1212 = vmatprep.subr.mxu0 0.0
  %1213 = vmatpush1.msra.mxu0 0.0
  %1214 = vmatprep.subr.mxu0 0.0
  %1215 = vmatpush1.msra.mxu0 0.0
  %1216 = vmatprep.subr.mxu0 0.0
  %1217 = vmatpush1.msra.mxu0 0.0
  %1218 = vmatprep.subr.mxu0 0.0
  %1219 = vmatpush1.msra.mxu0 0.0
  %1220 = vmatprep.subr.mxu0 0.0
  %1221 = vmatpush1.msra.mxu0 0.0
  %1222 = vmatprep.subr.mxu0 0.0
  %1223 = vmatpush1.msra.mxu0 0.0
  %1224 = vmatprep.subr.mxu0 0.0
  %1225 = vmatpush1.msra.mxu0 0.0
  %1226 = vmatprep.subr.mxu0 0.0
  %1227 = vmatpush1.msra.mxu0 0.0
  %1228 = vmatprep.subr.mxu0 0.0
  %1229 = vmatpush1.msra.mxu0 0.0
  %1230 = vmatprep.subr.mxu0 0.0
  %1231 = vmatpush1.msra.mxu0 0.0
  %1232 = vmatprep.subr.mxu0 0.0
  %1233 = vmatpush1.msra.mxu0 0.0
  %1234 = vmatprep.subr.mxu0 0.0
  %1235 = vmatpush1.msra.mxu0 0.0
  %1236 = vmatprep.subr.mxu0 0.0
  %1237 = vmatpush1.msra.mxu0 0.0
  %1238 = vmatprep.subr.mxu0 0.0
  %1239 = vmatpush1.msra.mxu0 0.0
  %1240 = vmatprep.subr.mxu0 0.0
  %1241 = vmatpush1.msra.mxu0 0.0
  %1242 = vmatprep.subr.mxu0 0.0
  %1243 = vmatpush1.msra.mxu0 0.0
  %1244 = vmatprep.subr.mxu0 0.0
  %1245 = vmatpush1.msra.mxu0 0.0
  %1246 = vmatprep.subr.mxu0 0.0
  %1247 = vmatpush1.msra.mxu0 0.0
  %1248 = vmatprep.subr.mxu0 0.0
  %1249 = vmatpush1.msra.mxu0 0.0
  %1250 = vmatprep.subr.mxu0 0.0
  %1251 = vmatpush1.msra.mxu0 0.0
  %1252 = vmatprep.subr.mxu0 0.0
  %1253 = vmatpush1.msra.mxu0 0.0
  %1254 = vmatprep.subr.mxu0 0.0
  %1255 = vmatpush1.msra.mxu0 0.0
  %1256 = vmatprep.subr.mxu0 0.0
  %1257 = vmatpush1.msra.mxu0 0.0
  %1258 = vmatprep.subr.mxu0 0.0
  %1259 = vmatpush1.msra.mxu0 0.0
  %1260 = vmatprep.subr.mxu0 0.0
  %1261 = vmatpush1.msra.mxu0 0.0
  %1262 = vmatprep.mubr.f32.mxu0 0.0
  %1263 = vmatmul.mubr.f32.gmra.mrb[0].mxu0 %v1196
  %v1264 = vpop.f32.mrb[0].mxu0
  %v1265 = vadd.f32 0.0, %v1264
  %v1266 = vpop.f32.mrb[0].mxu0
  %1267 = vdwg.mxu0
  %v1268 = vadd.f32 %v1192, %v1265
  %v1269 = vxor.u32 %v1268, 2147483648
  %v1270 = vmul.f32 %v1269, 1.442695
  %v1271 = vpow.pop %v1270
  %v1272 = vadd.f32 %v1271, 1.0
  %v1273 = vrcp.pop %v1272
  %v1274 = vmul.f32 1.0, %v1273
  %v1275 = vtanh.pop %v1268
  %v1276 = vmul.f32 %v1274, %v1184
  %1278 = vrot.lane.b32.xlu0 %v1275, 64
  %v1279 = vpop.permute.xlu0 %1278
  %v1281 = vmul.f32 %v1274, %v1279
  %1283 = vrot.lane.b32.xlu0 %v1281, 32
  %v1284 = vpop.permute.xlu0 %1283
  %v1286 = vadd.f32 %v1276, %v1284
  %v1287 = vtanh.pop %v1286
  %1289 = vrot.lane.b32.xlu0 %v1287, 64
  %v1290 = vpop.permute.xlu0 %1289
  %v1292 = vmul.f32 %v1274, %v1290
  %v1293 = vsel %vm980, %v1292, %v1191
  %v1294 = vld [vmem:[#allocation2 + $0x58] sm:$0xff]
  %1296 = vrot.lane.b32.xlu0 %v1292, 32
  %v1297 = vpop.permute.xlu0 %1296
  %v1298 = vsel %vm228, %v1297, 0
  %1300 = vmatprep.subr.mxu0 0.0
  %1301 = vmatpush1.msra.mxu0 %v1091
  %1302 = vmatprep.subr.mxu0 0.0
  %1303 = vmatpush1.msra.mxu0 %v1092
  %1304 = vmatprep.subr.mxu0 0.0
  %1305 = vmatpush1.msra.mxu0 %v1093
  %1306 = vmatprep.subr.mxu0 0.0
  %1307 = vmatpush1.msra.mxu0 %v1094
  %1308 = vmatprep.subr.mxu0 0.0
  %1309 = vmatpush1.msra.mxu0 0.0
  %1310 = vmatprep.subr.mxu0 0.0
  %1311 = vmatpush1.msra.mxu0 0.0
  %1312 = vmatprep.subr.mxu0 0.0
  %1313 = vmatpush1.msra.mxu0 0.0
  %1314 = vmatprep.subr.mxu0 0.0
  %1315 = vmatpush1.msra.mxu0 0.0
  %1316 = vmatprep.subr.mxu0 0.0
  %1317 = vmatpush1.msra.mxu0 0.0
  %1318 = vmatprep.subr.mxu0 0.0
  %1319 = vmatpush1.msra.mxu0 0.0
  %1320 = vmatprep.subr.mxu0 0.0
  %1321 = vmatpush1.msra.mxu0 0.0
  %1322 = vmatprep.subr.mxu0 0.0
  %1323 = vmatpush1.msra.mxu0 0.0
  %1324 = vmatprep.subr.mxu0 0.0
  %1325 = vmatpush1.msra.mxu0 0.0
  %1326 = vmatprep.subr.mxu0 0.0
  %1327 = vmatpush1.msra.mxu0 0.0
  %1328 = vmatprep.subr.mxu0 0.0
  %1329 = vmatpush1.msra.mxu0 0.0
  %1330 = vmatprep.subr.mxu0 0.0
  %1331 = vmatpush1.msra.mxu0 0.0
  %1332 = vmatprep.subr.mxu0 0.0
  %1333 = vmatpush1.msra.mxu0 0.0
  %1334 = vmatprep.subr.mxu0 0.0
  %1335 = vmatpush1.msra.mxu0 0.0
  %1336 = vmatprep.subr.mxu0 0.0
  %1337 = vmatpush1.msra.mxu0 0.0
  %1338 = vmatprep.subr.mxu0 0.0
  %1339 = vmatpush1.msra.mxu0 0.0
  %1340 = vmatprep.subr.mxu0 0.0
  %1341 = vmatpush1.msra.mxu0 0.0
  %1342 = vmatprep.subr.mxu0 0.0
  %1343 = vmatpush1.msra.mxu0 0.0
  %1344 = vmatprep.subr.mxu0 0.0
  %1345 = vmatpush1.msra.mxu0 0.0
  %1346 = vmatprep.subr.mxu0 0.0
  %1347 = vmatpush1.msra.mxu0 0.0
  %1348 = vmatprep.subr.mxu0 0.0
  %1349 = vmatpush1.msra.mxu0 0.0
  %1350 = vmatprep.subr.mxu0 0.0
  %1351 = vmatpush1.msra.mxu0 0.0
  %1352 = vmatprep.subr.mxu0 0.0
  %1353 = vmatpush1.msra.mxu0 0.0
  %1354 = vmatprep.subr.mxu0 0.0
  %1355 = vmatpush1.msra.mxu0 0.0
  %1356 = vmatprep.subr.mxu0 0.0
  %1357 = vmatpush1.msra.mxu0 0.0
  %1358 = vmatprep.subr.mxu0 0.0
  %1359 = vmatpush1.msra.mxu0 0.0
  %1360 = vmatprep.subr.mxu0 0.0
  %1361 = vmatpush1.msra.mxu0 0.0
  %1362 = vmatprep.subr.mxu0 0.0
  %1363 = vmatpush1.msra.mxu0 0.0
  %1364 = vmatprep.mubr.f32.mxu0 0.0
  %1365 = vmatmul.mubr.f32.gmra.mrb[0].mxu0 %v1298
  %v1366 = vpop.f32.mrb[0].mxu0
  %v1367 = vadd.f32 0.0, %v1366
  %v1368 = vpop.f32.mrb[0].mxu0
  %1369 = vdwg.mxu0
  %v1370 = vadd.f32 %v1294, %v1367
  %v1371 = vxor.u32 %v1370, 2147483648
  %v1372 = vmul.f32 %v1371, 1.442695
  %v1373 = vpow.pop %v1372
  %v1374 = vadd.f32 %v1373, 1.0
  %v1375 = vrcp.pop %v1374
  %v1376 = vmul.f32 1.0, %v1375
  %v1377 = vtanh.pop %v1370
  %v1378 = vmul.f32 %v1376, %v1286
  %1380 = vrot.lane.b32.xlu0 %v1377, 64
  %v1381 = vpop.permute.xlu0 %1380
  %v1383 = vmul.f32 %v1376, %v1381
  %1385 = vrot.lane.b32.xlu0 %v1383, 32
  %v1386 = vpop.permute.xlu0 %1385
  %v1388 = vadd.f32 %v1378, %v1386
  %v1389 = vtanh.pop %v1388
  %1391 = vrot.lane.b32.xlu0 %v1389, 64
  %v1392 = vpop.permute.xlu0 %1391
  %v1394 = vmul.f32 %v1376, %v1392
  %v1395 = vsel %vm872, %v1394, %v1293
  %v1396 = vld [vmem:[#allocation2 + $0x48] sm:$0xff]
  %1398 = vrot.lane.b32.xlu0 %v1394, 32
  %v1399 = vpop.permute.xlu0 %1398
  %v1400 = vsel %vm228, %v1399, 0
  %1402 = vmatprep.subr.mxu0 0.0
  %1403 = vmatpush1.msra.mxu0 %v1091
  %1404 = vmatprep.subr.mxu0 0.0
  %1405 = vmatpush1.msra.mxu0 %v1092
  %1406 = vmatprep.subr.mxu0 0.0
  %1407 = vmatpush1.msra.mxu0 %v1093
  %1408 = vmatprep.subr.mxu0 0.0
  %1409 = vmatpush1.msra.mxu0 %v1094
  %1410 = vmatprep.subr.mxu0 0.0
  %1411 = vmatpush1.msra.mxu0 0.0
  %1412 = vmatprep.subr.mxu0 0.0
  %1413 = vmatpush1.msra.mxu0 0.0
  %1414 = vmatprep.subr.mxu0 0.0
  %1415 = vmatpush1.msra.mxu0 0.0
  %1416 = vmatprep.subr.mxu0 0.0
  %1417 = vmatpush1.msra.mxu0 0.0
  %1418 = vmatprep.subr.mxu0 0.0
  %1419 = vmatpush1.msra.mxu0 0.0
  %1420 = vmatprep.subr.mxu0 0.0
  %1421 = vmatpush1.msra.mxu0 0.0
  %1422 = vmatprep.subr.mxu0 0.0
  %1423 = vmatpush1.msra.mxu0 0.0
  %1424 = vmatprep.subr.mxu0 0.0
  %1425 = vmatpush1.msra.mxu0 0.0
  %1426 = vmatprep.subr.mxu0 0.0
  %1427 = vmatpush1.msra.mxu0 0.0
  %1428 = vmatprep.subr.mxu0 0.0
  %1429 = vmatpush1.msra.mxu0 0.0
  %1430 = vmatprep.subr.mxu0 0.0
  %1431 = vmatpush1.msra.mxu0 0.0
  %1432 = vmatprep.subr.mxu0 0.0
  %1433 = vmatpush1.msra.mxu0 0.0
  %1434 = vmatprep.subr.mxu0 0.0
  %1435 = vmatpush1.msra.mxu0 0.0
  %1436 = vmatprep.subr.mxu0 0.0
  %1437 = vmatpush1.msra.mxu0 0.0
  %1438 = vmatprep.subr.mxu0 0.0
  %1439 = vmatpush1.msra.mxu0 0.0
  %1440 = vmatprep.subr.mxu0 0.0
  %1441 = vmatpush1.msra.mxu0 0.0
  %1442 = vmatprep.subr.mxu0 0.0
  %1443 = vmatpush1.msra.mxu0 0.0
  %1444 = vmatprep.subr.mxu0 0.0
  %1445 = vmatpush1.msra.mxu0 0.0
  %1446 = vmatprep.subr.mxu0 0.0
  %1447 = vmatpush1.msra.mxu0 0.0
  %1448 = vmatprep.subr.mxu0 0.0
  %1449 = vmatpush1.msra.mxu0 0.0
  %1450 = vmatprep.subr.mxu0 0.0
  %1451 = vmatpush1.msra.mxu0 0.0
  %1452 = vmatprep.subr.mxu0 0.0
  %1453 = vmatpush1.msra.mxu0 0.0
  %1454 = vmatprep.subr.mxu0 0.0
  %1455 = vmatpush1.msra.mxu0 0.0
  %1456 = vmatprep.subr.mxu0 0.0
  %1457 = vmatpush1.msra.mxu0 0.0
  %1458 = vmatprep.subr.mxu0 0.0
  %1459 = vmatpush1.msra.mxu0 0.0
  %1460 = vmatprep.subr.mxu0 0.0
  %1461 = vmatpush1.msra.mxu0 0.0
  %1462 = vmatprep.subr.mxu0 0.0
  %1463 = vmatpush1.msra.mxu0 0.0
  %1464 = vmatprep.subr.mxu0 0.0
  %1465 = vmatpush1.msra.mxu0 0.0
  %1466 = vmatprep.mubr.f32.mxu0 0.0
  %1467 = vmatmul.mubr.f32.gmra.mrb[0].mxu0 %v1400
  %v1468 = vpop.f32.mrb[0].mxu0
  %v1469 = vadd.f32 0.0, %v1468
  %v1470 = vpop.f32.mrb[0].mxu0
  %1471 = vdwg.mxu0
  %v1472 = vadd.f32 %v1396, %v1469
  %v1473 = vxor.u32 %v1472, 2147483648
  %v1474 = vmul.f32 %v1473, 1.442695
  %v1475 = vpow.pop %v1474
  %v1476 = vadd.f32 %v1475, 1.0
  %v1477 = vrcp.pop %v1476
  %v1478 = vmul.f32 1.0, %v1477
  %v1479 = vtanh.pop %v1472
  %v1480 = vmul.f32 %v1478, %v1388
  %1482 = vrot.lane.b32.xlu0 %v1479, 64
  %v1483 = vpop.permute.xlu0 %1482
  %v1485 = vmul.f32 %v1478, %v1483
  %1487 = vrot.lane.b32.xlu0 %v1485, 32
  %v1488 = vpop.permute.xlu0 %1487
  %v1490 = vadd.f32 %v1480, %v1488
  %v1491 = vtanh.pop %v1490
  %1493 = vrot.lane.b32.xlu0 %v1491, 64
  %v1494 = vpop.permute.xlu0 %1493
  %v1496 = vmul.f32 %v1478, %v1494
  %v1497 = vsel %vm764, %v1496, %v1395
  %v1498 = vld [vmem:[#allocation2 + $0x38] sm:$0xff]
  %1500 = vrot.lane.b32.xlu0 %v1496, 32
  %v1501 = vpop.permute.xlu0 %1500
  %v1502 = vsel %vm228, %v1501, 0
  %1504 = vmatprep.subr.mxu0 0.0
  %1505 = vmatpush1.msra.mxu0 %v1091
  %1506 = vmatprep.subr.mxu0 0.0
  %1507 = vmatpush1.msra.mxu0 %v1092
  %1508 = vmatprep.subr.mxu0 0.0
  %1509 = vmatpush1.msra.mxu0 %v1093
  %1510 = vmatprep.subr.mxu0 0.0
  %1511 = vmatpush1.msra.mxu0 %v1094
  %1512 = vmatprep.subr.mxu0 0.0
  %1513 = vmatpush1.msra.mxu0 0.0
  %1514 = vmatprep.subr.mxu0 0.0
  %1515 = vmatpush1.msra.mxu0 0.0
  %1516 = vmatprep.subr.mxu0 0.0
  %1517 = vmatpush1.msra.mxu0 0.0
  %1518 = vmatprep.subr.mxu0 0.0
  %1519 = vmatpush1.msra.mxu0 0.0
  %1520 = vmatprep.subr.mxu0 0.0
  %1521 = vmatpush1.msra.mxu0 0.0
  %1522 = vmatprep.subr.mxu0 0.0
  %1523 = vmatpush1.msra.mxu0 0.0
  %1524 = vmatprep.subr.mxu0 0.0
  %1525 = vmatpush1.msra.mxu0 0.0
  %1526 = vmatprep.subr.mxu0 0.0
  %1527 = vmatpush1.msra.mxu0 0.0
  %1528 = vmatprep.subr.mxu0 0.0
  %1529 = vmatpush1.msra.mxu0 0.0
  %1530 = vmatprep.subr.mxu0 0.0
  %1531 = vmatpush1.msra.mxu0 0.0
  %1532 = vmatprep.subr.mxu0 0.0
  %1533 = vmatpush1.msra.mxu0 0.0
  %1534 = vmatprep.subr.mxu0 0.0
  %1535 = vmatpush1.msra.mxu0 0.0
  %1536 = vmatprep.subr.mxu0 0.0
  %1537 = vmatpush1.msra.mxu0 0.0
  %1538 = vmatprep.subr.mxu0 0.0
  %1539 = vmatpush1.msra.mxu0 0.0
  %1540 = vmatprep.subr.mxu0 0.0
  %1541 = vmatpush1.msra.mxu0 0.0
  %1542 = vmatprep.subr.mxu0 0.0
  %1543 = vmatpush1.msra.mxu0 0.0
  %1544 = vmatprep.subr.mxu0 0.0
  %1545 = vmatpush1.msra.mxu0 0.0
  %1546 = vmatprep.subr.mxu0 0.0
  %1547 = vmatpush1.msra.mxu0 0.0
  %1548 = vmatprep.subr.mxu0 0.0
  %1549 = vmatpush1.msra.mxu0 0.0
  %1550 = vmatprep.subr.mxu0 0.0
  %1551 = vmatpush1.msra.mxu0 0.0
  %1552 = vmatprep.subr.mxu0 0.0
  %1553 = vmatpush1.msra.mxu0 0.0
  %1554 = vmatprep.subr.mxu0 0.0
  %1555 = vmatpush1.msra.mxu0 0.0
  %1556 = vmatprep.subr.mxu0 0.0
  %1557 = vmatpush1.msra.mxu0 0.0
  %1558 = vmatprep.subr.mxu0 0.0
  %1559 = vmatpush1.msra.mxu0 0.0
  %1560 = vmatprep.subr.mxu0 0.0
  %1561 = vmatpush1.msra.mxu0 0.0
  %1562 = vmatprep.subr.mxu0 0.0
  %1563 = vmatpush1.msra.mxu0 0.0
  %1564 = vmatprep.subr.mxu0 0.0
  %1565 = vmatpush1.msra.mxu0 0.0
  %1566 = vmatprep.subr.mxu0 0.0
  %1567 = vmatpush1.msra.mxu0 0.0
  %1568 = vmatprep.mubr.f32.mxu0 0.0
  %1569 = vmatmul.mubr.f32.gmra.mrb[0].mxu0 %v1502
  %v1570 = vpop.f32.mrb[0].mxu0
  %v1571 = vadd.f32 0.0, %v1570
  %v1572 = vpop.f32.mrb[0].mxu0
  %1573 = vdwg.mxu0
  %v1574 = vadd.f32 %v1498, %v1571
  %v1575 = vxor.u32 %v1574, 2147483648
  %v1576 = vmul.f32 %v1575, 1.442695
  %v1577 = vpow.pop %v1576
  %v1578 = vadd.f32 %v1577, 1.0
  %v1579 = vrcp.pop %v1578
  %v1580 = vmul.f32 1.0, %v1579
  %v1581 = vtanh.pop %v1574
  %v1582 = vmul.f32 %v1580, %v1490
  %1584 = vrot.lane.b32.xlu0 %v1581, 64
  %v1585 = vpop.permute.xlu0 %1584
  %v1587 = vmul.f32 %v1580, %v1585
  %1589 = vrot.lane.b32.xlu0 %v1587, 32
  %v1590 = vpop.permute.xlu0 %1589
  %v1592 = vadd.f32 %v1582, %v1590
  %v1593 = vtanh.pop %v1592
  %1595 = vrot.lane.b32.xlu0 %v1593, 64
  %v1596 = vpop.permute.xlu0 %1595
  %v1598 = vmul.f32 %v1580, %v1596
  %v1599 = vsel %vm656, %v1598, %v1497
  %v1600 = vld [vmem:[#allocation2 + $0x28] sm:$0xff]
  %1602 = vrot.lane.b32.xlu0 %v1598, 32
  %v1603 = vpop.permute.xlu0 %1602
  %v1604 = vsel %vm228, %v1603, 0
  %1606 = vmatprep.subr.mxu0 0.0
  %1607 = vmatpush1.msra.mxu0 %v1091
  %1608 = vmatprep.subr.mxu0 0.0
  %1609 = vmatpush1.msra.mxu0 %v1092
  %1610 = vmatprep.subr.mxu0 0.0
  %1611 = vmatpush1.msra.mxu0 %v1093
  %1612 = vmatprep.subr.mxu0 0.0
  %1613 = vmatpush1.msra.mxu0 %v1094
  %1614 = vmatprep.subr.mxu0 0.0
  %1615 = vmatpush1.msra.mxu0 0.0
  %1616 = vmatprep.subr.mxu0 0.0
  %1617 = vmatpush1.msra.mxu0 0.0
  %1618 = vmatprep.subr.mxu0 0.0
  %1619 = vmatpush1.msra.mxu0 0.0
  %1620 = vmatprep.subr.mxu0 0.0
  %1621 = vmatpush1.msra.mxu0 0.0
  %1622 = vmatprep.subr.mxu0 0.0
  %1623 = vmatpush1.msra.mxu0 0.0
  %1624 = vmatprep.subr.mxu0 0.0
  %1625 = vmatpush1.msra.mxu0 0.0
  %1626 = vmatprep.subr.mxu0 0.0
  %1627 = vmatpush1.msra.mxu0 0.0
  %1628 = vmatprep.subr.mxu0 0.0
  %1629 = vmatpush1.msra.mxu0 0.0
  %1630 = vmatprep.subr.mxu0 0.0
  %1631 = vmatpush1.msra.mxu0 0.0
  %1632 = vmatprep.subr.mxu0 0.0
  %1633 = vmatpush1.msra.mxu0 0.0
  %1634 = vmatprep.subr.mxu0 0.0
  %1635 = vmatpush1.msra.mxu0 0.0
  %1636 = vmatprep.subr.mxu0 0.0
  %1637 = vmatpush1.msra.mxu0 0.0
  %1638 = vmatprep.subr.mxu0 0.0
  %1639 = vmatpush1.msra.mxu0 0.0
  %1640 = vmatprep.subr.mxu0 0.0
  %1641 = vmatpush1.msra.mxu0 0.0
  %1642 = vmatprep.subr.mxu0 0.0
  %1643 = vmatpush1.msra.mxu0 0.0
  %1644 = vmatprep.subr.mxu0 0.0
  %1645 = vmatpush1.msra.mxu0 0.0
  %1646 = vmatprep.subr.mxu0 0.0
  %1647 = vmatpush1.msra.mxu0 0.0
  %1648 = vmatprep.subr.mxu0 0.0
  %1649 = vmatpush1.msra.mxu0 0.0
  %1650 = vmatprep.subr.mxu0 0.0
  %1651 = vmatpush1.msra.mxu0 0.0
  %1652 = vmatprep.subr.mxu0 0.0
  %1653 = vmatpush1.msra.mxu0 0.0
  %1654 = vmatprep.subr.mxu0 0.0
  %1655 = vmatpush1.msra.mxu0 0.0
  %1656 = vmatprep.subr.mxu0 0.0
  %1657 = vmatpush1.msra.mxu0 0.0
  %1658 = vmatprep.subr.mxu0 0.0
  %1659 = vmatpush1.msra.mxu0 0.0
  %1660 = vmatprep.subr.mxu0 0.0
  %1661 = vmatpush1.msra.mxu0 0.0
  %1662 = vmatprep.subr.mxu0 0.0
  %1663 = vmatpush1.msra.mxu0 0.0
  %1664 = vmatprep.subr.mxu0 0.0
  %1665 = vmatpush1.msra.mxu0 0.0
  %1666 = vmatprep.subr.mxu0 0.0
  %1667 = vmatpush1.msra.mxu0 0.0
  %1668 = vmatprep.subr.mxu0 0.0
  %1669 = vmatpush1.msra.mxu0 0.0
  %1670 = vmatprep.mubr.f32.mxu0 0.0
  %1671 = vmatmul.mubr.f32.gmra.mrb[0].mxu0 %v1604
  %v1672 = vpop.f32.mrb[0].mxu0
  %v1673 = vadd.f32 0.0, %v1672
  %v1674 = vpop.f32.mrb[0].mxu0
  %1675 = vdwg.mxu0
  %v1676 = vadd.f32 %v1600, %v1673
  %v1677 = vxor.u32 %v1676, 2147483648
  %v1678 = vmul.f32 %v1677, 1.442695
  %v1679 = vpow.pop %v1678
  %v1680 = vadd.f32 %v1679, 1.0
  %v1681 = vrcp.pop %v1680
  %v1682 = vmul.f32 1.0, %v1681
  %v1683 = vtanh.pop %v1676
  %v1684 = vmul.f32 %v1682, %v1592
  %1686 = vrot.lane.b32.xlu0 %v1683, 64
  %v1687 = vpop.permute.xlu0 %1686
  %v1689 = vmul.f32 %v1682, %v1687
  %1691 = vrot.lane.b32.xlu0 %v1689, 32
  %v1692 = vpop.permute.xlu0 %1691
  %v1694 = vadd.f32 %v1684, %v1692
  %v1695 = vtanh.pop %v1694
  %1697 = vrot.lane.b32.xlu0 %v1695, 64
  %v1698 = vpop.permute.xlu0 %1697
  %v1700 = vmul.f32 %v1682, %v1698
  %v1701 = vsel %vm548, %v1700, %v1599
  %v1702 = vld [vmem:[#allocation2 + $0x18] sm:$0xff]
  %1704 = vrot.lane.b32.xlu0 %v1700, 32
  %v1705 = vpop.permute.xlu0 %1704
  %v1706 = vsel %vm228, %v1705, 0
  %1708 = vmatprep.subr.mxu0 0.0
  %1709 = vmatpush1.msra.mxu0 %v1091
  %1710 = vmatprep.subr.mxu0 0.0
  %1711 = vmatpush1.msra.mxu0 %v1092
  %1712 = vmatprep.subr.mxu0 0.0
  %1713 = vmatpush1.msra.mxu0 %v1093
  %1714 = vmatprep.subr.mxu0 0.0
  %1715 = vmatpush1.msra.mxu0 %v1094
  %1716 = vmatprep.subr.mxu0 0.0
  %1717 = vmatpush1.msra.mxu0 0.0
  %1718 = vmatprep.subr.mxu0 0.0
  %1719 = vmatpush1.msra.mxu0 0.0
  %1720 = vmatprep.subr.mxu0 0.0
  %1721 = vmatpush1.msra.mxu0 0.0
  %1722 = vmatprep.subr.mxu0 0.0
  %1723 = vmatpush1.msra.mxu0 0.0
  %1724 = vmatprep.subr.mxu0 0.0
  %1725 = vmatpush1.msra.mxu0 0.0
  %1726 = vmatprep.subr.mxu0 0.0
  %1727 = vmatpush1.msra.mxu0 0.0
  %1728 = vmatprep.subr.mxu0 0.0
  %1729 = vmatpush1.msra.mxu0 0.0
  %1730 = vmatprep.subr.mxu0 0.0
  %1731 = vmatpush1.msra.mxu0 0.0
  %1732 = vmatprep.subr.mxu0 0.0
  %1733 = vmatpush1.msra.mxu0 0.0
  %1734 = vmatprep.subr.mxu0 0.0
  %1735 = vmatpush1.msra.mxu0 0.0
  %1736 = vmatprep.subr.mxu0 0.0
  %1737 = vmatpush1.msra.mxu0 0.0
  %1738 = vmatprep.subr.mxu0 0.0
  %1739 = vmatpush1.msra.mxu0 0.0
  %1740 = vmatprep.subr.mxu0 0.0
  %1741 = vmatpush1.msra.mxu0 0.0
  %1742 = vmatprep.subr.mxu0 0.0
  %1743 = vmatpush1.msra.mxu0 0.0
  %1744 = vmatprep.subr.mxu0 0.0
  %1745 = vmatpush1.msra.mxu0 0.0
  %1746 = vmatprep.subr.mxu0 0.0
  %1747 = vmatpush1.msra.mxu0 0.0
  %1748 = vmatprep.subr.mxu0 0.0
  %1749 = vmatpush1.msra.mxu0 0.0
  %1750 = vmatprep.subr.mxu0 0.0
  %1751 = vmatpush1.msra.mxu0 0.0
  %1752 = vmatprep.subr.mxu0 0.0
  %1753 = vmatpush1.msra.mxu0 0.0
  %1754 = vmatprep.subr.mxu0 0.0
  %1755 = vmatpush1.msra.mxu0 0.0
  %1756 = vmatprep.subr.mxu0 0.0
  %1757 = vmatpush1.msra.mxu0 0.0
  %1758 = vmatprep.subr.mxu0 0.0
  %1759 = vmatpush1.msra.mxu0 0.0
  %1760 = vmatprep.subr.mxu0 0.0
  %1761 = vmatpush1.msra.mxu0 0.0
  %1762 = vmatprep.subr.mxu0 0.0
  %1763 = vmatpush1.msra.mxu0 0.0
  %1764 = vmatprep.subr.mxu0 0.0
  %1765 = vmatpush1.msra.mxu0 0.0
  %1766 = vmatprep.subr.mxu0 0.0
  %1767 = vmatpush1.msra.mxu0 0.0
  %1768 = vmatprep.subr.mxu0 0.0
  %1769 = vmatpush1.msra.mxu0 0.0
  %1770 = vmatprep.subr.mxu0 0.0
  %1771 = vmatpush1.msra.mxu0 0.0
  %1772 = vmatprep.mubr.f32.mxu0 0.0
  %1773 = vmatmul.mubr.f32.gmra.mrb[0].mxu0 %v1706
  %v1774 = vpop.f32.mrb[0].mxu0
  %v1775 = vadd.f32 0.0, %v1774
  %v1776 = vpop.f32.mrb[0].mxu0
  %1777 = vdwg.mxu0
  %v1778 = vadd.f32 %v1702, %v1775
  %v1779 = vxor.u32 %v1778, 2147483648
  %v1780 = vmul.f32 %v1779, 1.442695
  %v1781 = vpow.pop %v1780
  %v1782 = vadd.f32 %v1781, 1.0
  %v1783 = vrcp.pop %v1782
  %v1784 = vmul.f32 1.0, %v1783
  %v1785 = vtanh.pop %v1778
  %v1786 = vmul.f32 %v1784, %v1694
  %1788 = vrot.lane.b32.xlu0 %v1785, 64
  %v1789 = vpop.permute.xlu0 %1788
  %v1791 = vmul.f32 %v1784, %v1789
  %1793 = vrot.lane.b32.xlu0 %v1791, 32
  %v1794 = vpop.permute.xlu0 %1793
  %v1796 = vadd.f32 %v1786, %v1794
  %v1797 = vtanh.pop %v1796
  %1799 = vrot.lane.b32.xlu0 %v1797, 64
  %v1800 = vpop.permute.xlu0 %1799
  %v1802 = vmul.f32 %v1784, %v1800
  %v1803 = vsel %vm440, %v1802, %v1701
  %v1804 = vld [vmem:[#allocation2 + $0x8] sm:$0xff]
  %1806 = vrot.lane.b32.xlu0 %v1802, 32
  %v1807 = vpop.permute.xlu0 %1806
  %v1808 = vsel %vm228, %v1807, 0
  %1810 = vmatprep.subr.mxu0 0.0
  %1811 = vmatpush1.msra.mxu0 %v1091
  %1812 = vmatprep.subr.mxu0 0.0
  %1813 = vmatpush1.msra.mxu0 %v1092
  %1814 = vmatprep.subr.mxu0 0.0
  %1815 = vmatpush1.msra.mxu0 %v1093
  %1816 = vmatprep.subr.mxu0 0.0
  %1817 = vmatpush1.msra.mxu0 %v1094
  %1818 = vmatprep.subr.mxu0 0.0
  %1819 = vmatpush1.msra.mxu0 0.0
  %1820 = vmatprep.subr.mxu0 0.0
  %1821 = vmatpush1.msra.mxu0 0.0
  %1822 = vmatprep.subr.mxu0 0.0
  %1823 = vmatpush1.msra.mxu0 0.0
  %1824 = vmatprep.subr.mxu0 0.0
  %1825 = vmatpush1.msra.mxu0 0.0
  %1826 = vmatprep.subr.mxu0 0.0
  %1827 = vmatpush1.msra.mxu0 0.0
  %1828 = vmatprep.subr.mxu0 0.0
  %1829 = vmatpush1.msra.mxu0 0.0
  %1830 = vmatprep.subr.mxu0 0.0
  %1831 = vmatpush1.msra.mxu0 0.0
  %1832 = vmatprep.subr.mxu0 0.0
  %1833 = vmatpush1.msra.mxu0 0.0
  %1834 = vmatprep.subr.mxu0 0.0
  %1835 = vmatpush1.msra.mxu0 0.0
  %1836 = vmatprep.subr.mxu0 0.0
  %1837 = vmatpush1.msra.mxu0 0.0
  %1838 = vmatprep.subr.mxu0 0.0
  %1839 = vmatpush1.msra.mxu0 0.0
  %1840 = vmatprep.subr.mxu0 0.0
  %1841 = vmatpush1.msra.mxu0 0.0
  %1842 = vmatprep.subr.mxu0 0.0
  %1843 = vmatpush1.msra.mxu0 0.0
  %1844 = vmatprep.subr.mxu0 0.0
  %1845 = vmatpush1.msra.mxu0 0.0
  %1846 = vmatprep.subr.mxu0 0.0
  %1847 = vmatpush1.msra.mxu0 0.0
  %1848 = vmatprep.subr.mxu0 0.0
  %1849 = vmatpush1.msra.mxu0 0.0
  %1850 = vmatprep.subr.mxu0 0.0
  %1851 = vmatpush1.msra.mxu0 0.0
  %1852 = vmatprep.subr.mxu0 0.0
  %1853 = vmatpush1.msra.mxu0 0.0
  %1854 = vmatprep.subr.mxu0 0.0
  %1855 = vmatpush1.msra.mxu0 0.0
  %1856 = vmatprep.subr.mxu0 0.0
  %1857 = vmatpush1.msra.mxu0 0.0
  %1858 = vmatprep.subr.mxu0 0.0
  %1859 = vmatpush1.msra.mxu0 0.0
  %1860 = vmatprep.subr.mxu0 0.0
  %1861 = vmatpush1.msra.mxu0 0.0
  %1862 = vmatprep.subr.mxu0 0.0
  %1863 = vmatpush1.msra.mxu0 0.0
  %1864 = vmatprep.subr.mxu0 0.0
  %1865 = vmatpush1.msra.mxu0 0.0
  %1866 = vmatprep.subr.mxu0 0.0
  %1867 = vmatpush1.msra.mxu0 0.0
  %1868 = vmatprep.subr.mxu0 0.0
  %1869 = vmatpush1.msra.mxu0 0.0
  %1870 = vmatprep.subr.mxu0 0.0
  %1871 = vmatpush1.msra.mxu0 0.0
  %1872 = vmatprep.subr.mxu0 0.0
  %1873 = vmatpush1.msra.mxu0 0.0
  %1874 = vmatprep.mubr.f32.mxu0 0.0
  %1875 = vmatmul.mubr.f32.gmra.mrb[0].mxu0 %v1808
  %v1876 = vpop.f32.mrb[0].mxu0
  %v1877 = vadd.f32 0.0, %v1876
  %v1878 = vpop.f32.mrb[0].mxu0
  %1879 = vdwg.mxu0
  %v1880 = vadd.f32 %v1804, %v1877
  %v1881 = vxor.u32 %v1880, 2147483648
  %v1882 = vmul.f32 %v1881, 1.442695
  %v1883 = vpow.pop %v1882
  %v1884 = vadd.f32 %v1883, 1.0
  %v1885 = vrcp.pop %v1884
  %v1886 = vmul.f32 1.0, %v1885
  %v1887 = vtanh.pop %v1880
  %v1888 = vmul.f32 %v1886, %v1796
  %1890 = vrot.lane.b32.xlu0 %v1887, 64
  %v1891 = vpop.permute.xlu0 %1890
  %v1893 = vmul.f32 %v1886, %v1891
  %1895 = vrot.lane.b32.xlu0 %v1893, 32
  %v1896 = vpop.permute.xlu0 %1895
  %v1898 = vadd.f32 %v1888, %v1896
  %v1899 = vtanh.pop %v1898
  %1901 = vrot.lane.b32.xlu0 %v1899, 64
  %v1902 = vpop.permute.xlu0 %1901
  %v1904 = vmul.f32 %v1886, %v1902
  %v1905 = vsel %vm332, %v1904, %v1803
  %1907 = vrot.lane.b32.xlu0 %v1089, 32
  %v1908 = vpop.permute.xlu0 %1907
  %1911 = vrot.lane.b32.xlu0 %v1905, 64
  %v1912 = vpop.permute.xlu0 %1911
  %v1914 = vsel %vm228, %v1908, %v1912
  %v1915 = vld [vmem:[%s5] sm:$0xff]
  %v1916 = vld [vmem:[%s5 + $0x8] sm:$0xff]
  %v1917 = vld [vmem:[%s5 + $0x10] sm:$0xff]
  %v1918 = vld [vmem:[%s5 + $0x18] sm:$0xff]
  %v1919 = vld [vmem:[%s5 + $0x20] sm:$0xff]
  %v1920 = vld [vmem:[%s5 + $0x28] sm:$0xff]
  %v1921 = vld [vmem:[%s5 + $0x30] sm:$0xff]
  %v1922 = vld [vmem:[%s5 + $0x38] sm:$0xff]
  %v1923 = vld [vmem:[%s6] sm:$0x1]
  %v1925 = vlaneseq
  %v1926 = vshrl.u32 %v1925, 7
  %v1927 = vsub.s32 0, %v1926
  %v1928 = vrot.slane %v1923, %v1927
  %v1931 = vsel %vm68, %v1914, 0
  %1933 = vmatprep.subr.mxu0 0.0
  %1934 = vmatpush1.msra.mxu0 %v1915
  %1935 = vmatprep.subr.mxu0 0.0
  %1936 = vmatpush1.msra.mxu0 %v1916
  %1937 = vmatprep.subr.mxu0 0.0
  %1938 = vmatpush1.msra.mxu0 %v1917
  %1939 = vmatprep.subr.mxu0 0.0
  %1940 = vmatpush1.msra.mxu0 %v1918
  %1941 = vmatprep.subr.mxu0 0.0
  %1942 = vmatpush1.msra.mxu0 %v1919
  %1943 = vmatprep.subr.mxu0 0.0
  %1944 = vmatpush1.msra.mxu0 %v1920
  %1945 = vmatprep.subr.mxu0 0.0
  %1946 = vmatpush1.msra.mxu0 %v1921
  %1947 = vmatprep.subr.mxu0 0.0
  %1948 = vmatpush1.msra.mxu0 %v1922
  %1949 = vmatprep.subr.mxu0 0.0
  %1950 = vmatpush1.msra.mxu0 0.0
  %1951 = vmatprep.subr.mxu0 0.0
  %1952 = vmatpush1.msra.mxu0 0.0
  %1953 = vmatprep.subr.mxu0 0.0
  %1954 = vmatpush1.msra.mxu0 0.0
  %1955 = vmatprep.subr.mxu0 0.0
  %1956 = vmatpush1.msra.mxu0 0.0
  %1957 = vmatprep.subr.mxu0 0.0
  %1958 = vmatpush1.msra.mxu0 0.0
  %1959 = vmatprep.subr.mxu0 0.0
  %1960 = vmatpush1.msra.mxu0 0.0
  %1961 = vmatprep.subr.mxu0 0.0
  %1962 = vmatpush1.msra.mxu0 0.0
  %1963 = vmatprep.subr.mxu0 0.0
  %1964 = vmatpush1.msra.mxu0 0.0
  %1965 = vmatprep.subr.mxu0 0.0
  %1966 = vmatpush1.msra.mxu0 0.0
  %1967 = vmatprep.subr.mxu0 0.0
  %1968 = vmatpush1.msra.mxu0 0.0
  %1969 = vmatprep.subr.mxu0 0.0
  %1970 = vmatpush1.msra.mxu0 0.0
  %1971 = vmatprep.subr.mxu0 0.0
  %1972 = vmatpush1.msra.mxu0 0.0
  %1973 = vmatprep.subr.mxu0 0.0
  %1974 = vmatpush1.msra.mxu0 0.0
  %1975 = vmatprep.subr.mxu0 0.0
  %1976 = vmatpush1.msra.mxu0 0.0
  %1977 = vmatprep.subr.mxu0 0.0
  %1978 = vmatpush1.msra.mxu0 0.0
  %1979 = vmatprep.subr.mxu0 0.0
  %1980 = vmatpush1.msra.mxu0 0.0
  %1981 = vmatprep.subr.mxu0 0.0
  %1982 = vmatpush1.msra.mxu0 0.0
  %1983 = vmatprep.subr.mxu0 0.0
  %1984 = vmatpush1.msra.mxu0 0.0
  %1985 = vmatprep.subr.mxu0 0.0
  %1986 = vmatpush1.msra.mxu0 0.0
  %1987 = vmatprep.subr.mxu0 0.0
  %1988 = vmatpush1.msra.mxu0 0.0
  %1989 = vmatprep.subr.mxu0 0.0
  %1990 = vmatpush1.msra.mxu0 0.0
  %1991 = vmatprep.subr.mxu0 0.0
  %1992 = vmatpush1.msra.mxu0 0.0
  %1993 = vmatprep.subr.mxu0 0.0
  %1994 = vmatpush1.msra.mxu0 0.0
  %1995 = vmatprep.subr.mxu0 0.0
  %1996 = vmatpush1.msra.mxu0 0.0
  %1997 = vmatprep.mubr.f32.mxu0 0.0
  %1998 = vmatmul.mubr.f32.gmra.mrb[0].mxu0 %v1931
  %v1999 = vpop.f32.mrb[0].mxu0
  %v2000 = vadd.f32 %v1928, %v1999
  %v2001 = vpop.f32.mrb[0].mxu0
  %2002 = vdwg.mxu0
  %v2003 = vmax.f32 %v2000, 0.0
  %v2004 = vld [vmem:[%s7] sm:$0xff]
  %v2005 = vld [vmem:[%s7 + $0x8] sm:$0xff]
  %v2006 = vld [vmem:[%s7 + $0x10] sm:$0xff]
  %v2007 = vld [vmem:[%s7 + $0x18] sm:$0xff]
  %v2008 = vld [vmem:[%s8] sm:$0x1]
  %v2010 = vlaneseq
  %v2011 = vshrl.u32 %v2010, 7
  %v2012 = vsub.s32 0, %v2011
  %v2013 = vrot.slane %v2008, %v2012
  %v2016 = vsel %vm228, %v2003, 0
  %2018 = vmatprep.subr.mxu0 0.0
  %2019 = vmatpush1.msra.mxu0 %v2004
  %2020 = vmatprep.subr.mxu0 0.0
  %2021 = vmatpush1.msra.mxu0 %v2005
  %2022 = vmatprep.subr.mxu0 0.0
  %2023 = vmatpush1.msra.mxu0 %v2006
  %2024 = vmatprep.subr.mxu0 0.0
  %2025 = vmatpush1.msra.mxu0 %v2007
  %2026 = vmatprep.subr.mxu0 0.0
  %2027 = vmatpush1.msra.mxu0 0.0
  %2028 = vmatprep.subr.mxu0 0.0
  %2029 = vmatpush1.msra.mxu0 0.0
  %2030 = vmatprep.subr.mxu0 0.0
  %2031 = vmatpush1.msra.mxu0 0.0
  %2032 = vmatprep.subr.mxu0 0.0
  %2033 = vmatpush1.msra.mxu0 0.0
  %2034 = vmatprep.subr.mxu0 0.0
  %2035 = vmatpush1.msra.mxu0 0.0
  %2036 = vmatprep.subr.mxu0 0.0
  %2037 = vmatpush1.msra.mxu0 0.0
  %2038 = vmatprep.subr.mxu0 0.0
  %2039 = vmatpush1.msra.mxu0 0.0
  %2040 = vmatprep.subr.mxu0 0.0
  %2041 = vmatpush1.msra.mxu0 0.0
  %2042 = vmatprep.subr.mxu0 0.0
  %2043 = vmatpush1.msra.mxu0 0.0
  %2044 = vmatprep.subr.mxu0 0.0
  %2045 = vmatpush1.msra.mxu0 0.0
  %2046 = vmatprep.subr.mxu0 0.0
  %2047 = vmatpush1.msra.mxu0 0.0
  %2048 = vmatprep.subr.mxu0 0.0
  %2049 = vmatpush1.msra.mxu0 0.0
  %2050 = vmatprep.subr.mxu0 0.0
  %2051 = vmatpush1.msra.mxu0 0.0
  %2052 = vmatprep.subr.mxu0 0.0
  %2053 = vmatpush1.msra.mxu0 0.0
  %2054 = vmatprep.subr.mxu0 0.0
  %2055 = vmatpush1.msra.mxu0 0.0
  %2056 = vmatprep.subr.mxu0 0.0
  %2057 = vmatpush1.msra.mxu0 0.0
  %2058 = vmatprep.subr.mxu0 0.0
  %2059 = vmatpush1.msra.mxu0 0.0
  %2060 = vmatprep.subr.mxu0 0.0
  %2061 = vmatpush1.msra.mxu0 0.0
  %2062 = vmatprep.subr.mxu0 0.0
  %2063 = vmatpush1.msra.mxu0 0.0
  %2064 = vmatprep.subr.mxu0 0.0
  %2065 = vmatpush1.msra.mxu0 0.0
  %2066 = vmatprep.subr.mxu0 0.0
  %2067 = vmatpush1.msra.mxu0 0.0
  %2068 = vmatprep.subr.mxu0 0.0
  %2069 = vmatpush1.msra.mxu0 0.0
  %2070 = vmatprep.subr.mxu0 0.0
  %2071 = vmatpush1.msra.mxu0 0.0
  %2072 = vmatprep.subr.mxu0 0.0
  %2073 = vmatpush1.msra.mxu0 0.0
  %2074 = vmatprep.subr.mxu0 0.0
  %2075 = vmatpush1.msra.mxu0 0.0
  %2076 = vmatprep.subr.mxu0 0.0
  %2077 = vmatpush1.msra.mxu0 0.0
  %2078 = vmatprep.subr.mxu0 0.0
  %2079 = vmatpush1.msra.mxu0 0.0
  %2080 = vmatprep.subr.mxu0 0.0
  %2081 = vmatpush1.msra.mxu0 0.0
  %2082 = vmatprep.mubr.f32.mxu0 0.0
  %2083 = vmatmul.mubr.f32.gmra.mrb[0].mxu0 %v2016
  %v2084 = vpop.f32.mrb[0].mxu0
  %v2085 = vadd.f32 %v2013, %v2084
  %v2086 = vpop.f32.mrb[0].mxu0
  %2087 = vdwg.mxu0
  %2088 = vst.msk [vmem:[%s9] sm:$0xff] %vm228, %v2085
  // Predicated region
  $region38: #{lstm_simclr_forward.5} parent=0 // pred_check
    _
  $region39: #{lstm_simclr_forward.5} parent=0 // pred_check_branch
    %2090 = sbr.rel (0) target = $region41
  $region40: #{lstm_simclr_forward.5} parent=0 // pred_region
    _
  $region41: #{lstm_simclr_forward.5} parent=0 // pred_fallthru
    _
  // Predicated region
  $region42: #{lstm_simclr_forward.5} parent=0 // pred_check
    _
  $region43: #{lstm_simclr_forward.5} parent=0 // pred_check_branch
    %2092 = sbr.rel (0) target = $region45
  $region44: #{lstm_simclr_forward.5} parent=0 // pred_region
    _
  $region45: #{lstm_simclr_forward.5} parent=0 // pred_fallthru
    _

</llo_original>
